<compile_context>
chip_gen: v6e
topology: v6e:2x2x1
jax: 0.10.0
libtpu: 0.0.40
codegen_flags: <defaults>
</compile_context>

<pallas_src>
import functools
import math

import jax
import jax.numpy as jnp
from jax import lax
from jax.experimental import pallas as pl
from jax.experimental.pallas import tpu as pltpu

D_MODEL = 512
NUM_HEADS = 8
HEAD_DIM = D_MODEL // NUM_HEADS


def _mhsa_kernel(x_ref, wqkv_ref, bqkv_ref, wout_ref, bout_ref, o_ref, *,
                 num_heads, head_dim):
    """One batch row per grid step.

    x_ref    : VMEM (T, D)      f32   input block (batch dim squeezed)
    wqkv_ref : VMEM (D, 3D)     f32   fused QKV projection weight
    bqkv_ref : VMEM (1, 3D)     f32   fused QKV projection bias
    wout_ref : VMEM (D, D)      f32   output projection weight
    bout_ref : VMEM (1, D)      f32   output projection bias
    o_ref    : VMEM (T, D)      f32   output block
    """
    T, D = x_ref.shape
    x = x_ref[...]                                                       # (T, D)

    # Fused QKV projection on the MXU: (T, D) @ (D, 3D) + bias.
    qkv = jnp.dot(x, wqkv_ref[...], preferred_element_type=jnp.float32)
    qkv = qkv + bqkv_ref[...]                                            # (T, 3D)
    q = qkv[:, :D]
    k = qkv[:, D:2 * D]
    v = qkv[:, 2 * D:]

    scale = 1.0 / math.sqrt(head_dim)

    # Causal mask (lower-triangular), built once with vector iota.
    row = lax.broadcasted_iota(jnp.int32, (T, T), 0)
    col = lax.broadcasted_iota(jnp.int32, (T, T), 1)
    causal = row >= col

    # Output projection folded into the head loop:
    #   concat_h(A_h) @ W_out + b_out == b_out + sum_h A_h @ W_out[h*hd:(h+1)*hd, :]
    acc = jnp.broadcast_to(bout_ref[...], (T, D)).astype(jnp.float32)
    for h in range(num_heads):
        sl = slice(h * head_dim, (h + 1) * head_dim)
        qh = q[:, sl]                                                    # (T, hd)
        kh = k[:, sl]                                                    # (T, hd)
        vh = v[:, sl]                                                    # (T, hd)

        s = jnp.dot(qh, kh.T, preferred_element_type=jnp.float32) * scale  # (T, T)
        s = jnp.where(causal, s, -1e30)                                  # == masked_fill(-inf)

        # numerically-stable softmax along the key axis
        m = jnp.max(s, axis=-1, keepdims=True)
        p = jnp.exp(s - m)
        p = p / jnp.sum(p, axis=-1, keepdims=True)

        ah = jnp.dot(p, vh, preferred_element_type=jnp.float32)          # (T, hd)
        acc = acc + jnp.dot(ah, wout_ref[sl, :],
                            preferred_element_type=jnp.float32)          # (T, D)

    o_ref[...] = acc.astype(o_ref.dtype)                                 # one dense store


def mhsa_forward(x, w_qkv, b_qkv, w_out, b_out, *, num_heads=NUM_HEADS):
    """x: (B, T, D) f32; w_qkv: (D, 3D); b_qkv: (3D,); w_out: (D, D); b_out: (D,)."""
    B, T, D = x.shape
    assert D % num_heads == 0
    head_dim = D // num_heads

    # Present biases as 2-D (1, N) so they are clean full-array VMEM blocks.
    b_qkv2 = b_qkv.reshape(1, 3 * D)
    b_out2 = b_out.reshape(1, D)

    kernel = functools.partial(_mhsa_kernel, num_heads=num_heads, head_dim=head_dim)

    return pl.pallas_call(
        kernel,
        out_shape=jax.ShapeDtypeStruct((B, T, D), x.dtype),
        grid_spec=pltpu.PrefetchScalarGridSpec(
            num_scalar_prefetch=0,
            grid=(B,),
            in_specs=[
                pl.BlockSpec((None, T, D), lambda b: (b, 0, 0)),      # x row, squeezed
                pl.BlockSpec((D, 3 * D), lambda b: (0, 0)),           # Wqkv (resident)
                pl.BlockSpec((1, 3 * D), lambda b: (0, 0)),           # bqkv
                pl.BlockSpec((D, D), lambda b: (0, 0)),               # Wout (resident)
                pl.BlockSpec((1, D), lambda b: (0, 0)),               # bout
            ],
            out_specs=pl.BlockSpec((None, T, D), lambda b: (b, 0, 0)),
        ),
        compiler_params=pltpu.CompilerParams(
            dimension_semantics=("parallel",),   # lets v7x split batch across its 2 TCs
        ),
    )(x, w_qkv, b_qkv2, w_out, b_out2)


def mhsa_reference(x, w_qkv, b_qkv, w_out, b_out, num_heads):
    """Pure-JAX mirror of the PyTorch module forward."""
    B, T, D = x.shape
    hd = D // num_heads
    qkv = x @ w_qkv + b_qkv                                    # (B, T, 3D)
    qkv = qkv.reshape(B, T, 3, num_heads, hd).transpose(2, 0, 3, 1, 4)
    q, k, v = qkv[0], qkv[1], qkv[2]                           # (B, H, T, hd)
    s = jnp.einsum('bhtd,bhsd->bhts', q, k) / math.sqrt(hd)
    mask = jnp.tril(jnp.ones((T, T), dtype=bool))
    s = jnp.where(mask[None, None], s, -jnp.inf)
    w = jax.nn.softmax(s, axis=-1)
    o = jnp.einsum('bhts,bhsd->bhtd', w, v)
    o = o.transpose(0, 2, 1, 3).reshape(B, T, D)
    return o @ w_out + b_out


if __name__ == "__main__":
    key = jax.random.PRNGKey(0)
    kx, kw1, kb1, kw2, kb2 = jax.random.split(key, 5)

    B, T, D, H = 2, 8, D_MODEL, NUM_HEADS
    x = jax.random.normal(kx, (B, T, D), dtype=jnp.float32)

    # deterministic params (uniform, roughly matching nn.Linear's default scale)
    w_scale = 1.0 / math.sqrt(D)
    w_qkv = jax.random.uniform(kw1, (D, 3 * D), jnp.float32, -w_scale, w_scale)
    b_qkv = jax.random.uniform(kb1, (3 * D,), jnp.float32, -w_scale, w_scale)
    w_out = jax.random.uniform(kw2, (D, D), jnp.float32, -w_scale, w_scale)
    b_out = jax.random.uniform(kb2, (D,), jnp.float32, -w_scale, w_scale)

    out = mhsa_forward(x, w_qkv, b_qkv, w_out, b_out, num_heads=H)
    out = jax.block_until_ready(out)

    ref = mhsa_reference(x, w_qkv, b_qkv, w_out, b_out, H)
    assert out.shape == (B, T, D)
    assert out.dtype == jnp.float32
    max_err = float(jnp.max(jnp.abs(out - ref)))
    assert jnp.allclose(out, ref, atol=2e-3, rtol=2e-3), f"mismatch vs reference, max_err={max_err}"

    print("KERNEL_OK")
</pallas_src>

<mosaic_0001>
module attributes {stable_mosaic.version = 11 : i64} {
  func.func @_mhsa_kernel(%arg0: i32, %arg1: memref<1x8x512xf32, #tpu.memory_space<vmem>>, %arg2: memref<512x1536xf32, #tpu.memory_space<vmem>>, %arg3: memref<1x1536xf32, #tpu.memory_space<vmem>>, %arg4: memref<512x512xf32, #tpu.memory_space<vmem>>, %arg5: memref<1x512xf32, #tpu.memory_space<vmem>>, %arg6: memref<1x8x512xf32, #tpu.memory_space<vmem>>) attributes {dimension_semantics = [#tpu.dimension_semantics<parallel>], iteration_bounds = array<i64: 2>, scalar_prefetch = 0 : i64, scratch_operands = 0 : i64, tpu.core_type = #tpu.core_type<tc>, window_params = [{transform_indices = @transform_0, window_bounds = array<i64: 1, 8, 512>}, {pipeline_mode = #tpu.pipeline_mode<synchronous>, transform_indices = @transform_1, window_bounds = array<i64: 512, 1536>}, {pipeline_mode = #tpu.pipeline_mode<synchronous>, transform_indices = @transform_2, window_bounds = array<i64: 1, 1536>}, {pipeline_mode = #tpu.pipeline_mode<synchronous>, transform_indices = @transform_3, window_bounds = array<i64: 512, 512>}, {pipeline_mode = #tpu.pipeline_mode<synchronous>, transform_indices = @transform_4, window_bounds = array<i64: 1, 512>}, {transform_indices = @transform_5, window_bounds = array<i64: 1, 8, 512>}]} {
    %c0 = arith.constant 0 : index
    %c0_0 = arith.constant 0 : index
    %c0_1 = arith.constant 0 : index
    %0 = vector.load %arg1[%c0, %c0_0, %c0_1] : memref<1x8x512xf32, #tpu.memory_space<vmem>>, vector<1x8x512xf32>
    %1 = vector.shape_cast %0 : vector<1x8x512xf32> to vector<8x512xf32>
    %c0_2 = arith.constant 0 : index
    %c0_3 = arith.constant 0 : index
    %2 = vector.load %arg2[%c0_2, %c0_3] : memref<512x1536xf32, #tpu.memory_space<vmem>>, vector<512x1536xf32>
    %cst = arith.constant dense<0.000000e+00> : vector<8x1536xf32>
    %3 = tpu.matmul %1, %2, %cst {dimension_numbers = #tpu.dot_dimension_numbers<[1], [0], [0], [1], [0, 0, 1, 1], [], []>} : vector<8x512xf32>, vector<512x1536xf32>, vector<8x1536xf32> -> vector<8x1536xf32>
    %c0_4 = arith.constant 0 : index
    %c0_5 = arith.constant 0 : index
    %4 = vector.load %arg3[%c0_4, %c0_5] : memref<1x1536xf32, #tpu.memory_space<vmem>>, vector<1x1536xf32>
    %5 = vector.broadcast %4 : vector<1x1536xf32> to vector<8x1536xf32>
    %6 = arith.addf %3, %5 : vector<8x1536xf32>
    %7 = vector.extract_strided_slice %6 {offsets = [0, 0], sizes = [8, 512], strides = [1, 1]} : vector<8x1536xf32> to vector<8x512xf32>
    %8 = vector.extract_strided_slice %6 {offsets = [0, 512], sizes = [8, 512], strides = [1, 1]} : vector<8x1536xf32> to vector<8x512xf32>
    %9 = vector.extract_strided_slice %6 {offsets = [0, 1024], sizes = [8, 512], strides = [1, 1]} : vector<8x1536xf32> to vector<8x512xf32>
    %10 = tpu.iota {dimensions = array<i32: 0>} : vector<8x8xi32>
    %11 = tpu.iota {dimensions = array<i32: 1>} : vector<8x8xi32>
    %12 = arith.cmpi sge, %10, %11 : vector<8x8xi32>
    %c0_6 = arith.constant 0 : index
    %c0_7 = arith.constant 0 : index
    %13 = vector.load %arg5[%c0_6, %c0_7] : memref<1x512xf32, #tpu.memory_space<vmem>>, vector<1x512xf32>
    %14 = vector.shape_cast %13 : vector<1x512xf32> to vector<1x512xf32>
    %15 = vector.broadcast %14 : vector<1x512xf32> to vector<8x512xf32>
    %16 = vector.extract_strided_slice %7 {offsets = [0, 0], sizes = [8, 64], strides = [1, 1]} : vector<8x512xf32> to vector<8x64xf32>
    %17 = vector.extract_strided_slice %8 {offsets = [0, 0], sizes = [8, 64], strides = [1, 1]} : vector<8x512xf32> to vector<8x64xf32>
    %18 = vector.extract_strided_slice %9 {offsets = [0, 0], sizes = [8, 64], strides = [1, 1]} : vector<8x512xf32> to vector<8x64xf32>
    %19 = tpu.transpose %17, [1, 0] : vector<8x64xf32> -> vector<64x8xf32>
    %cst_8 = arith.constant dense<0.000000e+00> : vector<8x8xf32>
    %20 = tpu.matmul %16, %19, %cst_8 {dimension_numbers = #tpu.dot_dimension_numbers<[1], [0], [0], [1], [0, 0, 1, 1], [], []>} : vector<8x64xf32>, vector<64x8xf32>, vector<8x8xf32> -> vector<8x8xf32>
    %cst_9 = arith.constant 1.250000e-01 : f32
    %21 = vector.broadcast %cst_9 : f32 to vector<8x8xf32>
    %22 = arith.mulf %20, %21 : vector<8x8xf32>
    %cst_10 = arith.constant -1.000000e+30 : f32
    %23 = vector.broadcast %cst_10 : f32 to vector<8x8xf32>
    %24 = arith.select %12, %22, %23 : vector<8x8xi1>, vector<8x8xf32>
    %cst_11 = arith.constant dense<0xFF800000> : vector<8xf32>
    %25 = vector.multi_reduction <maximumf>, %24, %cst_11 [1] : vector<8x8xf32> to vector<8xf32>
    %26 = vector.shape_cast %25 : vector<8xf32> to vector<8x1xf32>
    %27 = vector.broadcast %26 : vector<8x1xf32> to vector<8x8xf32>
    %28 = arith.subf %24, %27 : vector<8x8xf32>
    %29 = math.exp %28 : vector<8x8xf32>
    %cst_12 = arith.constant dense<0.000000e+00> : vector<8xf32>
    %30 = vector.multi_reduction <add>, %29, %cst_12 [1] : vector<8x8xf32> to vector<8xf32>
    %31 = vector.shape_cast %30 : vector<8xf32> to vector<8x1xf32>
    %32 = vector.broadcast %31 : vector<8x1xf32> to vector<8x8xf32>
    %33 = arith.divf %29, %32 : vector<8x8xf32>
    %cst_13 = arith.constant dense<0.000000e+00> : vector<8x64xf32>
    %34 = tpu.matmul %33, %18, %cst_13 {dimension_numbers = #tpu.dot_dimension_numbers<[1], [0], [0], [1], [0, 0, 1, 1], [], []>} : vector<8x8xf32>, vector<8x64xf32>, vector<8x64xf32> -> vector<8x64xf32>
    %c0_14 = arith.constant 0 : index
    %c0_15 = arith.constant 0 : index
    %35 = vector.load %arg4[%c0_14, %c0_15] : memref<512x512xf32, #tpu.memory_space<vmem>>, vector<64x512xf32>
    %cst_16 = arith.constant dense<0.000000e+00> : vector<8x512xf32>
    %36 = tpu.matmul %34, %35, %cst_16 {dimension_numbers = #tpu.dot_dimension_numbers<[1], [0], [0], [1], [0, 0, 1, 1], [], []>} : vector<8x64xf32>, vector<64x512xf32>, vector<8x512xf32> -> vector<8x512xf32>
    %37 = arith.addf %15, %36 : vector<8x512xf32>
    %38 = vector.extract_strided_slice %7 {offsets = [0, 64], sizes = [8, 64], strides = [1, 1]} : vector<8x512xf32> to vector<8x64xf32>
    %39 = vector.extract_strided_slice %8 {offsets = [0, 64], sizes = [8, 64], strides = [1, 1]} : vector<8x512xf32> to vector<8x64xf32>
    %40 = vector.extract_strided_slice %9 {offsets = [0, 64], sizes = [8, 64], strides = [1, 1]} : vector<8x512xf32> to vector<8x64xf32>
    %41 = tpu.transpose %39, [1, 0] : vector<8x64xf32> -> vector<64x8xf32>
    %cst_17 = arith.constant dense<0.000000e+00> : vector<8x8xf32>
    %42 = tpu.matmul %38, %41, %cst_17 {dimension_numbers = #tpu.dot_dimension_numbers<[1], [0], [0], [1], [0, 0, 1, 1], [], []>} : vector<8x64xf32>, vector<64x8xf32>, vector<8x8xf32> -> vector<8x8xf32>
    %cst_18 = arith.constant 1.250000e-01 : f32
    %43 = vector.broadcast %cst_18 : f32 to vector<8x8xf32>
    %44 = arith.mulf %42, %43 : vector<8x8xf32>
    %cst_19 = arith.constant -1.000000e+30 : f32
    %45 = vector.broadcast %cst_19 : f32 to vector<8x8xf32>
    %46 = arith.select %12, %44, %45 : vector<8x8xi1>, vector<8x8xf32>
    %cst_20 = arith.constant dense<0xFF800000> : vector<8xf32>
    %47 = vector.multi_reduction <maximumf>, %46, %cst_20 [1] : vector<8x8xf32> to vector<8xf32>
    %48 = vector.shape_cast %47 : vector<8xf32> to vector<8x1xf32>
    %49 = vector.broadcast %48 : vector<8x1xf32> to vector<8x8xf32>
    %50 = arith.subf %46, %49 : vector<8x8xf32>
    %51 = math.exp %50 : vector<8x8xf32>
    %cst_21 = arith.constant dense<0.000000e+00> : vector<8xf32>
    %52 = vector.multi_reduction <add>, %51, %cst_21 [1] : vector<8x8xf32> to vector<8xf32>
    %53 = vector.shape_cast %52 : vector<8xf32> to vector<8x1xf32>
    %54 = vector.broadcast %53 : vector<8x1xf32> to vector<8x8xf32>
    %55 = arith.divf %51, %54 : vector<8x8xf32>
    %cst_22 = arith.constant dense<0.000000e+00> : vector<8x64xf32>
    %56 = tpu.matmul %55, %40, %cst_22 {dimension_numbers = #tpu.dot_dimension_numbers<[1], [0], [0], [1], [0, 0, 1, 1], [], []>} : vector<8x8xf32>, vector<8x64xf32>, vector<8x64xf32> -> vector<8x64xf32>
    %c64 = arith.constant 64 : index
    %c0_23 = arith.constant 0 : index
    %57 = vector.load %arg4[%c64, %c0_23] : memref<512x512xf32, #tpu.memory_space<vmem>>, vector<64x512xf32>
    %cst_24 = arith.constant dense<0.000000e+00> : vector<8x512xf32>
    %58 = tpu.matmul %56, %57, %cst_24 {dimension_numbers = #tpu.dot_dimension_numbers<[1], [0], [0], [1], [0, 0, 1, 1], [], []>} : vector<8x64xf32>, vector<64x512xf32>, vector<8x512xf32> -> vector<8x512xf32>
    %59 = arith.addf %37, %58 : vector<8x512xf32>
    %60 = vector.extract_strided_slice %7 {offsets = [0, 128], sizes = [8, 64], strides = [1, 1]} : vector<8x512xf32> to vector<8x64xf32>
    %61 = vector.extract_strided_slice %8 {offsets = [0, 128], sizes = [8, 64], strides = [1, 1]} : vector<8x512xf32> to vector<8x64xf32>
    %62 = vector.extract_strided_slice %9 {offsets = [0, 128], sizes = [8, 64], strides = [1, 1]} : vector<8x512xf32> to vector<8x64xf32>
    %63 = tpu.transpose %61, [1, 0] : vector<8x64xf32> -> vector<64x8xf32>
    %cst_25 = arith.constant dense<0.000000e+00> : vector<8x8xf32>
    %64 = tpu.matmul %60, %63, %cst_25 {dimension_numbers = #tpu.dot_dimension_numbers<[1], [0], [0], [1], [0, 0, 1, 1], [], []>} : vector<8x64xf32>, vector<64x8xf32>, vector<8x8xf32> -> vector<8x8xf32>
    %cst_26 = arith.constant 1.250000e-01 : f32
    %65 = vector.broadcast %cst_26 : f32 to vector<8x8xf32>
    %66 = arith.mulf %64, %65 : vector<8x8xf32>
    %cst_27 = arith.constant -1.000000e+30 : f32
    %67 = vector.broadcast %cst_27 : f32 to vector<8x8xf32>
    %68 = arith.select %12, %66, %67 : vector<8x8xi1>, vector<8x8xf32>
    %cst_28 = arith.constant dense<0xFF800000> : vector<8xf32>
    %69 = vector.multi_reduction <maximumf>, %68, %cst_28 [1] : vector<8x8xf32> to vector<8xf32>
    %70 = vector.shape_cast %69 : vector<8xf32> to vector<8x1xf32>
    %71 = vector.broadcast %70 : vector<8x1xf32> to vector<8x8xf32>
    %72 = arith.subf %68, %71 : vector<8x8xf32>
    %73 = math.exp %72 : vector<8x8xf32>
    %cst_29 = arith.constant dense<0.000000e+00> : vector<8xf32>
    %74 = vector.multi_reduction <add>, %73, %cst_29 [1] : vector<8x8xf32> to vector<8xf32>
    %75 = vector.shape_cast %74 : vector<8xf32> to vector<8x1xf32>
    %76 = vector.broadcast %75 : vector<8x1xf32> to vector<8x8xf32>
    %77 = arith.divf %73, %76 : vector<8x8xf32>
    %cst_30 = arith.constant dense<0.000000e+00> : vector<8x64xf32>
    %78 = tpu.matmul %77, %62, %cst_30 {dimension_numbers = #tpu.dot_dimension_numbers<[1], [0], [0], [1], [0, 0, 1, 1], [], []>} : vector<8x8xf32>, vector<8x64xf32>, vector<8x64xf32> -> vector<8x64xf32>
    %c128 = arith.constant 128 : index
    %c0_31 = arith.constant 0 : index
    %79 = vector.load %arg4[%c128, %c0_31] : memref<512x512xf32, #tpu.memory_space<vmem>>, vector<64x512xf32>
    %cst_32 = arith.constant dense<0.000000e+00> : vector<8x512xf32>
    %80 = tpu.matmul %78, %79, %cst_32 {dimension_numbers = #tpu.dot_dimension_numbers<[1], [0], [0], [1], [0, 0, 1, 1], [], []>} : vector<8x64xf32>, vector<64x512xf32>, vector<8x512xf32> -> vector<8x512xf32>
    %81 = arith.addf %59, %80 : vector<8x512xf32>
    %82 = vector.extract_strided_slice %7 {offsets = [0, 192], sizes = [8, 64], strides = [1, 1]} : vector<8x512xf32> to vector<8x64xf32>
    %83 = vector.extract_strided_slice %8 {offsets = [0, 192], sizes = [8, 64], strides = [1, 1]} : vector<8x512xf32> to vector<8x64xf32>
    %84 = vector.extract_strided_slice %9 {offsets = [0, 192], sizes = [8, 64], strides = [1, 1]} : vector<8x512xf32> to vector<8x64xf32>
    %85 = tpu.transpose %83, [1, 0] : vector<8x64xf32> -> vector<64x8xf32>
    %cst_33 = arith.constant dense<0.000000e+00> : vector<8x8xf32>
    %86 = tpu.matmul %82, %85, %cst_33 {dimension_numbers = #tpu.dot_dimension_numbers<[1], [0], [0], [1], [0, 0, 1, 1], [], []>} : vector<8x64xf32>, vector<64x8xf32>, vector<8x8xf32> -> vector<8x8xf32>
    %cst_34 = arith.constant 1.250000e-01 : f32
    %87 = vector.broadcast %cst_34 : f32 to vector<8x8xf32>
    %88 = arith.mulf %86, %87 : vector<8x8xf32>
    %cst_35 = arith.constant -1.000000e+30 : f32
    %89 = vector.broadcast %cst_35 : f32 to vector<8x8xf32>
    %90 = arith.select %12, %88, %89 : vector<8x8xi1>, vector<8x8xf32>
    %cst_36 = arith.constant dense<0xFF800000> : vector<8xf32>
    %91 = vector.multi_reduction <maximumf>, %90, %cst_36 [1] : vector<8x8xf32> to vector<8xf32>
    %92 = vector.shape_cast %91 : vector<8xf32> to vector<8x1xf32>
    %93 = vector.broadcast %92 : vector<8x1xf32> to vector<8x8xf32>
    %94 = arith.subf %90, %93 : vector<8x8xf32>
    %95 = math.exp %94 : vector<8x8xf32>
    %cst_37 = arith.constant dense<0.000000e+00> : vector<8xf32>
    %96 = vector.multi_reduction <add>, %95, %cst_37 [1] : vector<8x8xf32> to vector<8xf32>
    %97 = vector.shape_cast %96 : vector<8xf32> to vector<8x1xf32>
    %98 = vector.broadcast %97 : vector<8x1xf32> to vector<8x8xf32>
    %99 = arith.divf %95, %98 : vector<8x8xf32>
    %cst_38 = arith.constant dense<0.000000e+00> : vector<8x64xf32>
    %100 = tpu.matmul %99, %84, %cst_38 {dimension_numbers = #tpu.dot_dimension_numbers<[1], [0], [0], [1], [0, 0, 1, 1], [], []>} : vector<8x8xf32>, vector<8x64xf32>, vector<8x64xf32> -> vector<8x64xf32>
    %c192 = arith.constant 192 : index
    %c0_39 = arith.constant 0 : index
    %101 = vector.load %arg4[%c192, %c0_39] : memref<512x512xf32, #tpu.memory_space<vmem>>, vector<64x512xf32>
    %cst_40 = arith.constant dense<0.000000e+00> : vector<8x512xf32>
    %102 = tpu.matmul %100, %101, %cst_40 {dimension_numbers = #tpu.dot_dimension_numbers<[1], [0], [0], [1], [0, 0, 1, 1], [], []>} : vector<8x64xf32>, vector<64x512xf32>, vector<8x512xf32> -> vector<8x512xf32>
    %103 = arith.addf %81, %102 : vector<8x512xf32>
    %104 = vector.extract_strided_slice %7 {offsets = [0, 256], sizes = [8, 64], strides = [1, 1]} : vector<8x512xf32> to vector<8x64xf32>
    %105 = vector.extract_strided_slice %8 {offsets = [0, 256], sizes = [8, 64], strides = [1, 1]} : vector<8x512xf32> to vector<8x64xf32>
    %106 = vector.extract_strided_slice %9 {offsets = [0, 256], sizes = [8, 64], strides = [1, 1]} : vector<8x512xf32> to vector<8x64xf32>
    %107 = tpu.transpose %105, [1, 0] : vector<8x64xf32> -> vector<64x8xf32>
    %cst_41 = arith.constant dense<0.000000e+00> : vector<8x8xf32>
    %108 = tpu.matmul %104, %107, %cst_41 {dimension_numbers = #tpu.dot_dimension_numbers<[1], [0], [0], [1], [0, 0, 1, 1], [], []>} : vector<8x64xf32>, vector<64x8xf32>, vector<8x8xf32> -> vector<8x8xf32>
    %cst_42 = arith.constant 1.250000e-01 : f32
    %109 = vector.broadcast %cst_42 : f32 to vector<8x8xf32>
    %110 = arith.mulf %108, %109 : vector<8x8xf32>
    %cst_43 = arith.constant -1.000000e+30 : f32
    %111 = vector.broadcast %cst_43 : f32 to vector<8x8xf32>
    %112 = arith.select %12, %110, %111 : vector<8x8xi1>, vector<8x8xf32>
    %cst_44 = arith.constant dense<0xFF800000> : vector<8xf32>
    %113 = vector.multi_reduction <maximumf>, %112, %cst_44 [1] : vector<8x8xf32> to vector<8xf32>
    %114 = vector.shape_cast %113 : vector<8xf32> to vector<8x1xf32>
    %115 = vector.broadcast %114 : vector<8x1xf32> to vector<8x8xf32>
    %116 = arith.subf %112, %115 : vector<8x8xf32>
    %117 = math.exp %116 : vector<8x8xf32>
    %cst_45 = arith.constant dense<0.000000e+00> : vector<8xf32>
    %118 = vector.multi_reduction <add>, %117, %cst_45 [1] : vector<8x8xf32> to vector<8xf32>
    %119 = vector.shape_cast %118 : vector<8xf32> to vector<8x1xf32>
    %120 = vector.broadcast %119 : vector<8x1xf32> to vector<8x8xf32>
    %121 = arith.divf %117, %120 : vector<8x8xf32>
    %cst_46 = arith.constant dense<0.000000e+00> : vector<8x64xf32>
    %122 = tpu.matmul %121, %106, %cst_46 {dimension_numbers = #tpu.dot_dimension_numbers<[1], [0], [0], [1], [0, 0, 1, 1], [], []>} : vector<8x8xf32>, vector<8x64xf32>, vector<8x64xf32> -> vector<8x64xf32>
    %c256 = arith.constant 256 : index
    %c0_47 = arith.constant 0 : index
    %123 = vector.load %arg4[%c256, %c0_47] : memref<512x512xf32, #tpu.memory_space<vmem>>, vector<64x512xf32>
    %cst_48 = arith.constant dense<0.000000e+00> : vector<8x512xf32>
    %124 = tpu.matmul %122, %123, %cst_48 {dimension_numbers = #tpu.dot_dimension_numbers<[1], [0], [0], [1], [0, 0, 1, 1], [], []>} : vector<8x64xf32>, vector<64x512xf32>, vector<8x512xf32> -> vector<8x512xf32>
    %125 = arith.addf %103, %124 : vector<8x512xf32>
    %126 = vector.extract_strided_slice %7 {offsets = [0, 320], sizes = [8, 64], strides = [1, 1]} : vector<8x512xf32> to vector<8x64xf32>
    %127 = vector.extract_strided_slice %8 {offsets = [0, 320], sizes = [8, 64], strides = [1, 1]} : vector<8x512xf32> to vector<8x64xf32>
    %128 = vector.extract_strided_slice %9 {offsets = [0, 320], sizes = [8, 64], strides = [1, 1]} : vector<8x512xf32> to vector<8x64xf32>
    %129 = tpu.transpose %127, [1, 0] : vector<8x64xf32> -> vector<64x8xf32>
    %cst_49 = arith.constant dense<0.000000e+00> : vector<8x8xf32>
    %130 = tpu.matmul %126, %129, %cst_49 {dimension_numbers = #tpu.dot_dimension_numbers<[1], [0], [0], [1], [0, 0, 1, 1], [], []>} : vector<8x64xf32>, vector<64x8xf32>, vector<8x8xf32> -> vector<8x8xf32>
    %cst_50 = arith.constant 1.250000e-01 : f32
    %131 = vector.broadcast %cst_50 : f32 to vector<8x8xf32>
    %132 = arith.mulf %130, %131 : vector<8x8xf32>
    %cst_51 = arith.constant -1.000000e+30 : f32
    %133 = vector.broadcast %cst_51 : f32 to vector<8x8xf32>
    %134 = arith.select %12, %132, %133 : vector<8x8xi1>, vector<8x8xf32>
    %cst_52 = arith.constant dense<0xFF800000> : vector<8xf32>
    %135 = vector.multi_reduction <maximumf>, %134, %cst_52 [1] : vector<8x8xf32> to vector<8xf32>
    %136 = vector.shape_cast %135 : vector<8xf32> to vector<8x1xf32>
    %137 = vector.broadcast %136 : vector<8x1xf32> to vector<8x8xf32>
    %138 = arith.subf %134, %137 : vector<8x8xf32>
    %139 = math.exp %138 : vector<8x8xf32>
    %cst_53 = arith.constant dense<0.000000e+00> : vector<8xf32>
    %140 = vector.multi_reduction <add>, %139, %cst_53 [1] : vector<8x8xf32> to vector<8xf32>
    %141 = vector.shape_cast %140 : vector<8xf32> to vector<8x1xf32>
    %142 = vector.broadcast %141 : vector<8x1xf32> to vector<8x8xf32>
    %143 = arith.divf %139, %142 : vector<8x8xf32>
    %cst_54 = arith.constant dense<0.000000e+00> : vector<8x64xf32>
    %144 = tpu.matmul %143, %128, %cst_54 {dimension_numbers = #tpu.dot_dimension_numbers<[1], [0], [0], [1], [0, 0, 1, 1], [], []>} : vector<8x8xf32>, vector<8x64xf32>, vector<8x64xf32> -> vector<8x64xf32>
    %c320 = arith.constant 320 : index
    %c0_55 = arith.constant 0 : index
    %145 = vector.load %arg4[%c320, %c0_55] : memref<512x512xf32, #tpu.memory_space<vmem>>, vector<64x512xf32>
    %cst_56 = arith.constant dense<0.000000e+00> : vector<8x512xf32>
    %146 = tpu.matmul %144, %145, %cst_56 {dimension_numbers = #tpu.dot_dimension_numbers<[1], [0], [0], [1], [0, 0, 1, 1], [], []>} : vector<8x64xf32>, vector<64x512xf32>, vector<8x512xf32> -> vector<8x512xf32>
    %147 = arith.addf %125, %146 : vector<8x512xf32>
    %148 = vector.extract_strided_slice %7 {offsets = [0, 384], sizes = [8, 64], strides = [1, 1]} : vector<8x512xf32> to vector<8x64xf32>
    %149 = vector.extract_strided_slice %8 {offsets = [0, 384], sizes = [8, 64], strides = [1, 1]} : vector<8x512xf32> to vector<8x64xf32>
    %150 = vector.extract_strided_slice %9 {offsets = [0, 384], sizes = [8, 64], strides = [1, 1]} : vector<8x512xf32> to vector<8x64xf32>
    %151 = tpu.transpose %149, [1, 0] : vector<8x64xf32> -> vector<64x8xf32>
    %cst_57 = arith.constant dense<0.000000e+00> : vector<8x8xf32>
    %152 = tpu.matmul %148, %151, %cst_57 {dimension_numbers = #tpu.dot_dimension_numbers<[1], [0], [0], [1], [0, 0, 1, 1], [], []>} : vector<8x64xf32>, vector<64x8xf32>, vector<8x8xf32> -> vector<8x8xf32>
    %cst_58 = arith.constant 1.250000e-01 : f32
    %153 = vector.broadcast %cst_58 : f32 to vector<8x8xf32>
    %154 = arith.mulf %152, %153 : vector<8x8xf32>
    %cst_59 = arith.constant -1.000000e+30 : f32
    %155 = vector.broadcast %cst_59 : f32 to vector<8x8xf32>
    %156 = arith.select %12, %154, %155 : vector<8x8xi1>, vector<8x8xf32>
    %cst_60 = arith.constant dense<0xFF800000> : vector<8xf32>
    %157 = vector.multi_reduction <maximumf>, %156, %cst_60 [1] : vector<8x8xf32> to vector<8xf32>
    %158 = vector.shape_cast %157 : vector<8xf32> to vector<8x1xf32>
    %159 = vector.broadcast %158 : vector<8x1xf32> to vector<8x8xf32>
    %160 = arith.subf %156, %159 : vector<8x8xf32>
    %161 = math.exp %160 : vector<8x8xf32>
    %cst_61 = arith.constant dense<0.000000e+00> : vector<8xf32>
    %162 = vector.multi_reduction <add>, %161, %cst_61 [1] : vector<8x8xf32> to vector<8xf32>
    %163 = vector.shape_cast %162 : vector<8xf32> to vector<8x1xf32>
    %164 = vector.broadcast %163 : vector<8x1xf32> to vector<8x8xf32>
    %165 = arith.divf %161, %164 : vector<8x8xf32>
    %cst_62 = arith.constant dense<0.000000e+00> : vector<8x64xf32>
    %166 = tpu.matmul %165, %150, %cst_62 {dimension_numbers = #tpu.dot_dimension_numbers<[1], [0], [0], [1], [0, 0, 1, 1], [], []>} : vector<8x8xf32>, vector<8x64xf32>, vector<8x64xf32> -> vector<8x64xf32>
    %c384 = arith.constant 384 : index
    %c0_63 = arith.constant 0 : index
    %167 = vector.load %arg4[%c384, %c0_63] : memref<512x512xf32, #tpu.memory_space<vmem>>, vector<64x512xf32>
    %cst_64 = arith.constant dense<0.000000e+00> : vector<8x512xf32>
    %168 = tpu.matmul %166, %167, %cst_64 {dimension_numbers = #tpu.dot_dimension_numbers<[1], [0], [0], [1], [0, 0, 1, 1], [], []>} : vector<8x64xf32>, vector<64x512xf32>, vector<8x512xf32> -> vector<8x512xf32>
    %169 = arith.addf %147, %168 : vector<8x512xf32>
    %170 = vector.extract_strided_slice %7 {offsets = [0, 448], sizes = [8, 64], strides = [1, 1]} : vector<8x512xf32> to vector<8x64xf32>
    %171 = vector.extract_strided_slice %8 {offsets = [0, 448], sizes = [8, 64], strides = [1, 1]} : vector<8x512xf32> to vector<8x64xf32>
    %172 = vector.extract_strided_slice %9 {offsets = [0, 448], sizes = [8, 64], strides = [1, 1]} : vector<8x512xf32> to vector<8x64xf32>
    %173 = tpu.transpose %171, [1, 0] : vector<8x64xf32> -> vector<64x8xf32>
    %cst_65 = arith.constant dense<0.000000e+00> : vector<8x8xf32>
    %174 = tpu.matmul %170, %173, %cst_65 {dimension_numbers = #tpu.dot_dimension_numbers<[1], [0], [0], [1], [0, 0, 1, 1], [], []>} : vector<8x64xf32>, vector<64x8xf32>, vector<8x8xf32> -> vector<8x8xf32>
    %cst_66 = arith.constant 1.250000e-01 : f32
    %175 = vector.broadcast %cst_66 : f32 to vector<8x8xf32>
    %176 = arith.mulf %174, %175 : vector<8x8xf32>
    %cst_67 = arith.constant -1.000000e+30 : f32
    %177 = vector.broadcast %cst_67 : f32 to vector<8x8xf32>
    %178 = arith.select %12, %176, %177 : vector<8x8xi1>, vector<8x8xf32>
    %cst_68 = arith.constant dense<0xFF800000> : vector<8xf32>
    %179 = vector.multi_reduction <maximumf>, %178, %cst_68 [1] : vector<8x8xf32> to vector<8xf32>
    %180 = vector.shape_cast %179 : vector<8xf32> to vector<8x1xf32>
    %181 = vector.broadcast %180 : vector<8x1xf32> to vector<8x8xf32>
    %182 = arith.subf %178, %181 : vector<8x8xf32>
    %183 = math.exp %182 : vector<8x8xf32>
    %cst_69 = arith.constant dense<0.000000e+00> : vector<8xf32>
    %184 = vector.multi_reduction <add>, %183, %cst_69 [1] : vector<8x8xf32> to vector<8xf32>
    %185 = vector.shape_cast %184 : vector<8xf32> to vector<8x1xf32>
    %186 = vector.broadcast %185 : vector<8x1xf32> to vector<8x8xf32>
    %187 = arith.divf %183, %186 : vector<8x8xf32>
    %cst_70 = arith.constant dense<0.000000e+00> : vector<8x64xf32>
    %188 = tpu.matmul %187, %172, %cst_70 {dimension_numbers = #tpu.dot_dimension_numbers<[1], [0], [0], [1], [0, 0, 1, 1], [], []>} : vector<8x8xf32>, vector<8x64xf32>, vector<8x64xf32> -> vector<8x64xf32>
    %c448 = arith.constant 448 : index
    %c0_71 = arith.constant 0 : index
    %189 = vector.load %arg4[%c448, %c0_71] : memref<512x512xf32, #tpu.memory_space<vmem>>, vector<64x512xf32>
    %cst_72 = arith.constant dense<0.000000e+00> : vector<8x512xf32>
    %190 = tpu.matmul %188, %189, %cst_72 {dimension_numbers = #tpu.dot_dimension_numbers<[1], [0], [0], [1], [0, 0, 1, 1], [], []>} : vector<8x64xf32>, vector<64x512xf32>, vector<8x512xf32> -> vector<8x512xf32>
    %191 = arith.addf %169, %190 : vector<8x512xf32>
    %c0_73 = arith.constant 0 : index
    %c0_74 = arith.constant 0 : index
    %c0_75 = arith.constant 0 : index
    %192 = vector.load %arg6[%c0_73, %c0_74, %c0_75] : memref<1x8x512xf32, #tpu.memory_space<vmem>>, vector<1x8x512xf32>
    %193 = vector.shape_cast %192 : vector<1x8x512xf32> to vector<8x512xf32>
    %194 = vector.shape_cast %191 : vector<8x512xf32> to vector<1x8x512xf32>
    tpu.vector_store %arg6[%c0_73, %c0_74, %c0_75], %194 {strides = array<i32>} : memref<1x8x512xf32, #tpu.memory_space<vmem>>, vector<1x8x512xf32>,
    return
  }
  func.func @transform_0(%arg0: i32) -> (i32, i32, i32) {
    %c0_i32 = arith.constant 0 : i32
    %c0_i32_0 = arith.constant 0 : i32
    %c0_i32_1 = arith.constant 0 : i32
    return %arg0, %c0_i32, %c0_i32_0 : i32, i32, i32
  }
  func.func @transform_1(%arg0: i32) -> (i32, i32) {
    %c0_i32 = arith.constant 0 : i32
    %c0_i32_0 = arith.constant 0 : i32
    %c0_i32_1 = arith.constant 0 : i32
    return %c0_i32, %c0_i32_0 : i32, i32
  }
  func.func @transform_2(%arg0: i32) -> (i32, i32) {
    %c0_i32 = arith.constant 0 : i32
    %c0_i32_0 = arith.constant 0 : i32
    %c0_i32_1 = arith.constant 0 : i32
    return %c0_i32, %c0_i32_0 : i32, i32
  }
  func.func @transform_3(%arg0: i32) -> (i32, i32) {
    %c0_i32 = arith.constant 0 : i32
    %c0_i32_0 = arith.constant 0 : i32
    %c0_i32_1 = arith.constant 0 : i32
    return %c0_i32, %c0_i32_0 : i32, i32
  }
  func.func @transform_4(%arg0: i32) -> (i32, i32) {
    %c0_i32 = arith.constant 0 : i32
    %c0_i32_0 = arith.constant 0 : i32
    %c0_i32_1 = arith.constant 0 : i32
    return %c0_i32, %c0_i32_0 : i32, i32
  }
  func.func @transform_5(%arg0: i32) -> (i32, i32, i32) {
    %c0_i32 = arith.constant 0 : i32
    %c0_i32_0 = arith.constant 0 : i32
    %c0_i32_1 = arith.constant 0 : i32
    return %arg0, %c0_i32, %c0_i32_0 : i32, i32, i32
  }
}

</mosaic_0001>

<llo_original>
// kernel: tpu_custom_call.1
$region0: #{tpu_custom_call.1}
  #allocation0 [shape = 'u32[]', space=smem, size = 0x4, offset = 0x4, fixed_abs, tag = 'smem constant byte address 0x4 - core index']
  #allocation1 [shape = 'u32[144,128]{1,0:T(1,128)}', space=vmem, size = 0x12000, scoped, tag = 'internal scratch']
  %s0 = inlined_call_operand.hbm [shape: f32[2,8,512], index: 0, kind: input, shape index: {}]
  %s1 = inlined_call_operand.hbm [shape: f32[512,1536], index: 1, kind: input, shape index: {}]
  %s2 = inlined_call_operand.hbm [shape: f32[1,1536], index: 2, kind: input, shape index: {}]
  %s3 = inlined_call_operand.hbm [shape: f32[512,512], index: 3, kind: input, shape index: {}]
  %s4 = inlined_call_operand.hbm [shape: f32[1,512], index: 4, kind: input, shape index: {}]
  %s5 = inlined_call_operand.hbm [shape: f32[2,8,512], index: 5, kind: output, shape index: {}]
  %s6 = sld [smem:[#allocation0]]
  $region73: #{tpu_custom_call.1} parent=0
    _
  %s8 = ssub.s32 1, %s6
  %s9 = scalar_select 0, %s8, %s6
  $region1: #{tpu_custom_call.1} parent=0
    #allocation2 [shape = 'u8[32768]{0}', space=vmem, size = 0x8000, scoped, tag = 'input window, operand 0']
    #allocation3 [shape = 's32[2]{0}', space=sflag, size = 0x8, scoped, tag = 'scoped memory for tpu_custom_call.1']
    #allocation4 [shape = 's32[2]{0}', space=sflag, size = 0x8, scoped, tag = 'scoped memory for tpu_custom_call.1']
    #allocation5 [shape = 'u8[3145728]{0}', space=vmem, size = 0x300000, scoped, tag = 'input window, operand 1, single buffered']
    #allocation6 [shape = 's32[1]{0}', space=sflag, size = 0x4, scoped, tag = 'scoped memory for tpu_custom_call.1']
    #allocation7 [shape = 'u8[6144]{0}', space=vmem, size = 0x1800, scoped, tag = 'input window, operand 2, single buffered']
    #allocation8 [shape = 'u8[1048576]{0}', space=vmem, size = 0x100000, scoped, tag = 'input window, operand 3, single buffered']
    #allocation9 [shape = 's32[1]{0}', space=sflag, size = 0x4, scoped, tag = 'scoped memory for tpu_custom_call.1']
    #allocation10 [shape = 'u8[2048]{0}', space=vmem, size = 0x800, scoped, tag = 'input window, operand 4, single buffered']
    #allocation11 [shape = 'u8[32768]{0}', space=vmem, size = 0x8000, scoped, tag = 'output window, operand 0']
    %10 = vsyncpa [#allocation3], 0
    %s11 = scalar_lea.sflag [#allocation3], 1
    %12 = vsyncpa %s11, 0
    %13 = vsyncpa [#allocation6], 0
    %14 = vsyncpa [#allocation9], 0
    %15 = vsyncpa [#allocation4], 0
    %s16 = scalar_lea.sflag [#allocation4], 1
    %17 = vsyncpa %s16, 0
    loop: start=0, step=1, limit=4
    $region2: #{tpu_custom_call.1} parent=1 // loop_pre_header
      _
    $region3: #{tpu_custom_call.1} parent=1 // loop_header
      %s19 = sphi 0, %s23
      %p20 = scmp.ge.s32.totalorder %s19, 4
      %s29 = sphi 0, %s31
      %s32 = sphi 0, %s29
      %s33 = sphi 0, %s32
      %s49 = sphi 0, %s33
      %s53 = sphi 0, %s53
      %s55 = sphi 0, %s53
      %s56 = sphi 0, %s55
      %s70 = sphi 0, %s56
      %s74 = sphi 0, %s74
      %s76 = sphi 0, %s74
      %s77 = sphi 0, %s76
      %s91 = sphi 0, %s77
      %s95 = sphi 0, %s95
      %s97 = sphi 0, %s95
      %s98 = sphi 0, %s97
      %s112 = sphi 0, %s98
      %s116 = sphi 0, %s116
      %s118 = sphi 0, %s116
      %s119 = sphi 0, %s118
      %s133 = sphi 0, %s119
      %s139 = sphi 0, %s141
      %s142 = sphi 0, %s139
      %s143 = sphi 0, %s142
      %s159 = sphi 0, %s143
    $region4: #{tpu_custom_call.1} parent=1 // loop_header_branch
      %22 = sbr.rel (%p20) target = $region8
    $region5: #{tpu_custom_call.1} parent=1 // loop_body
      %s24 = ssub.s32 %s19, 1
      %s25 = ssub.s32 %s19, 2
      %s26 = sadd.s32 %s19, 1
      %s27 = ssub.s32 %s19, %s26
      %p28 = scmp.eq.s32.totalorder %s27, 0
      %s30 = sadd.s32 %s29, 1
      %s31 = scalar_select %p28, %s29, %s30
      %p34 = pneg %p28
      %p35 = scmp.eq.s32.totalorder %s19, 1
      %p36 = por %p34, %p35
      %p37 = scmp.ne.s32.totalorder %s29, %s32
      %p38 = scmp.eq.s32.totalorder %s19, 0
      %p39 = por %p37, %p38
      %p40 = scmp.ne.s32.totalorder %s29, %s32
      %p41 = scmp.eq.s32.totalorder %s24, 1
      %p42 = por %p40, %p41
      %p43 = scmp.ne.s32.totalorder %s32, %s33
      %p44 = scmp.eq.s32.totalorder %s24, 0
      %p45 = por %p43, %p44
      %p46 = scmp.ne.s32.totalorder %s32, %s33
      %p47 = scmp.eq.s32.totalorder %s25, 1
      %p48 = por %p46, %p47
      %p50 = scmp.ne.s32.totalorder %s33, %s49
      %p51 = scmp.eq.s32.totalorder %s25, 0
      %p52 = por %p50, %p51
      %s54 = sadd.s32 %s53, 1
      %p57 = scmp.eq.s32.totalorder %s19, 1
      %p58 = scmp.ne.s32.totalorder %s53, %s55
      %p59 = scmp.eq.s32.totalorder %s19, 0
      %p60 = por %p58, %p59
      %p61 = scmp.ne.s32.totalorder %s53, %s55
      %p62 = scmp.eq.s32.totalorder %s24, 1
      %p63 = por %p61, %p62
      %p64 = scmp.ne.s32.totalorder %s55, %s56
      %p65 = scmp.eq.s32.totalorder %s24, 0
      %p66 = por %p64, %p65
      %p67 = scmp.ne.s32.totalorder %s55, %s56
      %p68 = scmp.eq.s32.totalorder %s25, 1
      %p69 = por %p67, %p68
      %p71 = scmp.ne.s32.totalorder %s56, %s70
      %p72 = scmp.eq.s32.totalorder %s25, 0
      %p73 = por %p71, %p72
      %s75 = sadd.s32 %s74, 1
      %p78 = scmp.eq.s32.totalorder %s19, 1
      %p79 = scmp.ne.s32.totalorder %s74, %s76
      %p80 = scmp.eq.s32.totalorder %s19, 0
      %p81 = por %p79, %p80
      %p82 = scmp.ne.s32.totalorder %s74, %s76
      %p83 = scmp.eq.s32.totalorder %s24, 1
      %p84 = por %p82, %p83
      %p85 = scmp.ne.s32.totalorder %s76, %s77
      %p86 = scmp.eq.s32.totalorder %s24, 0
      %p87 = por %p85, %p86
      %p88 = scmp.ne.s32.totalorder %s76, %s77
      %p89 = scmp.eq.s32.totalorder %s25, 1
      %p90 = por %p88, %p89
      %p92 = scmp.ne.s32.totalorder %s77, %s91
      %p93 = scmp.eq.s32.totalorder %s25, 0
      %p94 = por %p92, %p93
      %s96 = sadd.s32 %s95, 1
      %p99 = scmp.eq.s32.totalorder %s19, 1
      %p100 = scmp.ne.s32.totalorder %s95, %s97
      %p101 = scmp.eq.s32.totalorder %s19, 0
      %p102 = por %p100, %p101
      %p103 = scmp.ne.s32.totalorder %s95, %s97
      %p104 = scmp.eq.s32.totalorder %s24, 1
      %p105 = por %p103, %p104
      %p106 = scmp.ne.s32.totalorder %s97, %s98
      %p107 = scmp.eq.s32.totalorder %s24, 0
      %p108 = por %p106, %p107
      %p109 = scmp.ne.s32.totalorder %s97, %s98
      %p110 = scmp.eq.s32.totalorder %s25, 1
      %p111 = por %p109, %p110
      %p113 = scmp.ne.s32.totalorder %s98, %s112
      %p114 = scmp.eq.s32.totalorder %s25, 0
      %p115 = por %p113, %p114
      %s117 = sadd.s32 %s116, 1
      %p120 = scmp.eq.s32.totalorder %s19, 1
      %p121 = scmp.ne.s32.totalorder %s116, %s118
      %p122 = scmp.eq.s32.totalorder %s19, 0
      %p123 = por %p121, %p122
      %p124 = scmp.ne.s32.totalorder %s116, %s118
      %p125 = scmp.eq.s32.totalorder %s24, 1
      %p126 = por %p124, %p125
      %p127 = scmp.ne.s32.totalorder %s118, %s119
      %p128 = scmp.eq.s32.totalorder %s24, 0
      %p129 = por %p127, %p128
      %p130 = scmp.ne.s32.totalorder %s118, %s119
      %p131 = scmp.eq.s32.totalorder %s25, 1
      %p132 = por %p130, %p131
      %p134 = scmp.ne.s32.totalorder %s119, %s133
      %p135 = scmp.eq.s32.totalorder %s25, 0
      %p136 = por %p134, %p135
      %s137 = ssub.s32 %s19, %s26
      %p138 = scmp.eq.s32.totalorder %s137, 0
      %s140 = sadd.s32 %s139, 1
      %s141 = scalar_select %p138, %s139, %s140
      %p144 = pneg %p138
      %p145 = scmp.eq.s32.totalorder %s19, 1
      %p146 = por %p144, %p145
      %p147 = scmp.ne.s32.totalorder %s139, %s142
      %p148 = scmp.eq.s32.totalorder %s19, 0
      %p149 = por %p147, %p148
      %p150 = scmp.ne.s32.totalorder %s139, %s142
      %p151 = scmp.eq.s32.totalorder %s24, 1
      %p152 = por %p150, %p151
      %p153 = scmp.ne.s32.totalorder %s142, %s143
      %p154 = scmp.eq.s32.totalorder %s24, 0
      %p155 = por %p153, %p154
      %p156 = scmp.ne.s32.totalorder %s142, %s143
      %p157 = scmp.eq.s32.totalorder %s25, 1
      %p158 = por %p156, %p157
      %p160 = scmp.ne.s32.totalorder %s143, %s159
      %p161 = scmp.eq.s32.totalorder %s25, 0
      %p162 = por %p160, %p161
      %p163 = scmp.le.s32.totalorder 1, %s19
      %p164 = scmp.lt.s32.totalorder %s19, 3
      %p165 = pnand %p163, %p164
      %p166 = pneg %p165
      // Predicated region
      $region9: #{tpu_custom_call.1} parent=5 // pred_check
        _
      $region10: #{tpu_custom_call.1} parent=5 // pred_check_branch
        %168 = sbr.rel (%p165) target = $region12
      $region11: #{tpu_custom_call.1} parent=5 // pred_region
        %s169 = ssub.s32 %s19, 1
        // Predicated region
        $region13: #{tpu_custom_call.1} parent=11 // pred_check
          %p170 = pneg %p66
        $region14: #{tpu_custom_call.1} parent=11 // pred_check_branch
          %172 = sbr.rel (%p170) target = $region16
        $region15: #{tpu_custom_call.1} parent=11 // pred_region
          %s174 = ssub.s32 98304, 98304
          %175 = vsyncadd [#allocation6], %s174
          %s176 = sshll.u32 [#allocation5], 4
          %s177 = int_to_ptr.vmem [resolvable:$true] %s176
          %182 = dma.hbm_to_vmem [thread:$0]  %s1, 98304, %s177, [#allocation6], 1536, 1536, 96
        $region16: #{tpu_custom_call.1} parent=11 // pred_fallthru
          _
        // Predicated region
        $region17: #{tpu_custom_call.1} parent=11 // pred_check
          %p183 = pneg %p87
        $region18: #{tpu_custom_call.1} parent=11 // pred_check_branch
          %185 = sbr.rel (%p183) target = $region20
        $region19: #{tpu_custom_call.1} parent=11 // pred_region
          %s187 = ssub.s32 192, 192
          %188 = vsyncadd [#allocation6], %s187
          %s190 = sshll.u32 [#allocation7], 4
          %s191 = int_to_ptr.vmem [resolvable:$true] %s190
          %193 = dma.hbm_to_vmem [thread:$0]  %s2, 192, %s191, [#allocation6]
        $region20: #{tpu_custom_call.1} parent=11 // pred_fallthru
          _
        // Predicated region
        $region21: #{tpu_custom_call.1} parent=11 // pred_check
          %p194 = pneg %p108
        $region22: #{tpu_custom_call.1} parent=11 // pred_check_branch
          %196 = sbr.rel (%p194) target = $region24
        $region23: #{tpu_custom_call.1} parent=11 // pred_region
          %s198 = ssub.s32 32768, 32768
          %199 = vsyncadd [#allocation9], %s198
          %s200 = sshll.u32 [#allocation8], 4
          %s201 = int_to_ptr.vmem [resolvable:$true] %s200
          %206 = dma.hbm_to_vmem [thread:$0]  %s3, 32768, %s201, [#allocation9], 512, 512, 32
        $region24: #{tpu_custom_call.1} parent=11 // pred_fallthru
          _
        // Predicated region
        $region25: #{tpu_custom_call.1} parent=11 // pred_check
          %p207 = pneg %p129
        $region26: #{tpu_custom_call.1} parent=11 // pred_check_branch
          %209 = sbr.rel (%p207) target = $region28
        $region27: #{tpu_custom_call.1} parent=11 // pred_region
          %s211 = ssub.s32 64, 64
          %212 = vsyncadd [#allocation9], %s211
          %s214 = sshll.u32 [#allocation10], 4
          %s215 = int_to_ptr.vmem [resolvable:$true] %s214
          %217 = dma.hbm_to_vmem [thread:$0]  %s4, 64, %s215, [#allocation9]
        $region28: #{tpu_custom_call.1} parent=11 // pred_fallthru
          _
      $region12: #{tpu_custom_call.1} parent=5 // pred_fallthru
        _
      %p218 = scmp.lt.s32.totalorder %s19, 2
      // Predicated region
      $region29: #{tpu_custom_call.1} parent=5 // pred_check
        %p219 = pneg %p218
      $region30: #{tpu_custom_call.1} parent=5 // pred_check_branch
        %221 = sbr.rel (%p219) target = $region32
      $region31: #{tpu_custom_call.1} parent=5 // pred_region
        // Predicated region
        $region33: #{tpu_custom_call.1} parent=31 // pred_check
          %p222 = pneg %p39
        $region34: #{tpu_custom_call.1} parent=31 // pred_check_branch
          %224 = sbr.rel (%p222) target = $region36
        $region35: #{tpu_custom_call.1} parent=31 // pred_region
          %s225 = sand.u32 %s29, 1
          %s226 = scalar_lea.sflag [#allocation3], %s225
          %s227 = sand.u32 %s29, 1
          %s228 = smul.addr %s227, 32
          %s229 = scalar_lea.vmem [#allocation2], %s228
          %s231 = ssub.s32 512, 512
          %232 = vsyncadd %s226, %s231
          %s233 = smul.addr %s19, 4
          %s234 = smul.addr %s233, 128
          %s235 = scalar_lea.hbm %s0, %s234
          %s237 = sshll.u32 %s229, 4
          %s238 = int_to_ptr.vmem [resolvable:$true] %s237
          %240 = dma.hbm_to_vmem [thread:$0]  %s235, 512, %s238, %s226
        $region36: #{tpu_custom_call.1} parent=31 // pred_fallthru
          _
      $region32: #{tpu_custom_call.1} parent=5 // pred_fallthru
        _
      %p241 = scmp.le.s32.totalorder 1, %s19
      %p242 = scmp.lt.s32.totalorder %s19, 3
      %p243 = pnand %p241, %p242
      %p244 = pneg %p243
      // Predicated region
      $region37: #{tpu_custom_call.1} parent=5 // pred_check
        _
      $region38: #{tpu_custom_call.1} parent=5 // pred_check_branch
        %246 = sbr.rel (%p243) target = $region40
      $region39: #{tpu_custom_call.1} parent=5 // pred_region
        %s247 = ssub.s32 %s19, 1
        %s248 = sand.u32 %s32, 1
        %s249 = scalar_lea.sflag [#allocation3], %s248
        %s250 = sand.u32 %s32, 1
        %s251 = smul.addr %s250, 32
        %s252 = scalar_lea.vmem [#allocation2], %s251
        // Predicated region
        $region41: #{tpu_custom_call.1} parent=39 // pred_check
          %p253 = pneg %p45
        $region42: #{tpu_custom_call.1} parent=39 // pred_check_branch
          %255 = sbr.rel (%p253) target = $region44
        $region43: #{tpu_custom_call.1} parent=39 // pred_region
          %256 = dma.done %s249, 512
        $region44: #{tpu_custom_call.1} parent=39 // pred_fallthru
          _
        // Predicated region
        $region45: #{tpu_custom_call.1} parent=39 // pred_check
          %p257 = pneg %p66
        $region46: #{tpu_custom_call.1} parent=39 // pred_check_branch
          %259 = sbr.rel (%p257) target = $region48
        $region47: #{tpu_custom_call.1} parent=39 // pred_region
          %260 = dma.done [#allocation6], 98304
        $region48: #{tpu_custom_call.1} parent=39 // pred_fallthru
          _
        // Predicated region
        $region49: #{tpu_custom_call.1} parent=39 // pred_check
          %p261 = pneg %p87
        $region50: #{tpu_custom_call.1} parent=39 // pred_check_branch
          %263 = sbr.rel (%p261) target = $region52
        $region51: #{tpu_custom_call.1} parent=39 // pred_region
          %264 = dma.done [#allocation6], 192
        $region52: #{tpu_custom_call.1} parent=39 // pred_fallthru
          _
        // Predicated region
        $region53: #{tpu_custom_call.1} parent=39 // pred_check
          %p265 = pneg %p108
        $region54: #{tpu_custom_call.1} parent=39 // pred_check_branch
          %267 = sbr.rel (%p265) target = $region56
        $region55: #{tpu_custom_call.1} parent=39 // pred_region
          %268 = dma.done [#allocation9], 32768
        $region56: #{tpu_custom_call.1} parent=39 // pred_fallthru
          _
        // Predicated region
        $region57: #{tpu_custom_call.1} parent=39 // pred_check
          %p269 = pneg %p129
        $region58: #{tpu_custom_call.1} parent=39 // pred_check_branch
          %271 = sbr.rel (%p269) target = $region60
        $region59: #{tpu_custom_call.1} parent=39 // pred_region
          %272 = dma.done [#allocation9], 64
        $region60: #{tpu_custom_call.1} parent=39 // pred_fallthru
          _
        %s273 = sand.u32 %s32, 1
        %s274 = scalar_lea.sflag [#allocation3], %s273
        %s275 = sand.u32 %s32, 1
        %s276 = smul.addr %s275, 32
        %s277 = scalar_lea.vmem [#allocation2], %s276
        %p278 = pneg %p45
        %p279 = pneg %p42
        %p280 = pneg %p66
        %p281 = pneg %p63
        %p282 = pneg %p87
        %p283 = pneg %p84
        %p284 = pneg %p108
        %p285 = pneg %p105
        %p286 = pneg %p129
        %p287 = pneg %p126
        %p288 = pneg %p155
        %p289 = pneg %p152
        %s290 = sand.u32 %s142, 1
        %s291 = scalar_lea.sflag [#allocation4], %s290
        %s292 = sand.u32 %s142, 1
        %s293 = smul.addr %s292, 32
        %s294 = scalar_lea.vmem [#allocation11], %s293
        %v295 = vld [vmem:[%s252] sm:$0xff]
        %v296 = vld [vmem:[%s252 + $0x8] sm:$0xff]
        %v297 = vld [vmem:[%s252 + $0x10] sm:$0xff]
        %v298 = vld [vmem:[%s252 + $0x18] sm:$0xff]
        %v299 = vld [vmem:[#allocation5] sm:$0xff]
        %v300 = vld [vmem:[#allocation5 + $0x8] sm:$0xff]
        %v301 = vld [vmem:[#allocation5 + $0x10] sm:$0xff]
        %v302 = vld [vmem:[#allocation5 + $0x18] sm:$0xff]
        %v303 = vld [vmem:[#allocation5 + $0x20] sm:$0xff]
        %v304 = vld [vmem:[#allocation5 + $0x28] sm:$0xff]
        %v305 = vld [vmem:[#allocation5 + $0x30] sm:$0xff]
        %v306 = vld [vmem:[#allocation5 + $0x38] sm:$0xff]
        %v307 = vld [vmem:[#allocation5 + $0x40] sm:$0xff]
        %v308 = vld [vmem:[#allocation5 + $0x48] sm:$0xff]
        %v309 = vld [vmem:[#allocation5 + $0x50] sm:$0xff]
        %v310 = vld [vmem:[#allocation5 + $0x58] sm:$0xff]
        %v311 = vld [vmem:[#allocation5 + $0x60] sm:$0xff]
        %v312 = vld [vmem:[#allocation5 + $0x68] sm:$0xff]
        %v313 = vld [vmem:[#allocation5 + $0x70] sm:$0xff]
        %v314 = vld [vmem:[#allocation5 + $0x78] sm:$0xff]
        %v315 = vld [vmem:[#allocation5 + $0x80] sm:$0xff]
        %v316 = vld [vmem:[#allocation5 + $0x88] sm:$0xff]
        %v317 = vld [vmem:[#allocation5 + $0x90] sm:$0xff]
        %v318 = vld [vmem:[#allocation5 + $0x98] sm:$0xff]
        %v319 = vld [vmem:[#allocation5 + $0xa0] sm:$0xff]
        %v320 = vld [vmem:[#allocation5 + $0xa8] sm:$0xff]
        %v321 = vld [vmem:[#allocation5 + $0xb0] sm:$0xff]
        %v322 = vld [vmem:[#allocation5 + $0xb8] sm:$0xff]
        %v323 = vld [vmem:[#allocation5 + $0xc0] sm:$0xff]
        %v324 = vld [vmem:[#allocation5 + $0xc8] sm:$0xff]
        %v325 = vld [vmem:[#allocation5 + $0xd0] sm:$0xff]
        %v326 = vld [vmem:[#allocation5 + $0xd8] sm:$0xff]
        %v327 = vld [vmem:[#allocation5 + $0xe0] sm:$0xff]
        %v328 = vld [vmem:[#allocation5 + $0xe8] sm:$0xff]
        %v329 = vld [vmem:[#allocation5 + $0xf0] sm:$0xff]
        %v330 = vld [vmem:[#allocation5 + $0xf8] sm:$0xff]
        %v331 = vld [vmem:[#allocation5 + $0x100] sm:$0xff]
        %v332 = vld [vmem:[#allocation5 + $0x108] sm:$0xff]
        %v333 = vld [vmem:[#allocation5 + $0x110] sm:$0xff]
        %v334 = vld [vmem:[#allocation5 + $0x118] sm:$0xff]
        %v335 = vld [vmem:[#allocation5 + $0x120] sm:$0xff]
        %v336 = vld [vmem:[#allocation5 + $0x128] sm:$0xff]
        %v337 = vld [vmem:[#allocation5 + $0x130] sm:$0xff]
        %v338 = vld [vmem:[#allocation5 + $0x138] sm:$0xff]
        %v339 = vld [vmem:[#allocation5 + $0x140] sm:$0xff]
        %v340 = vld [vmem:[#allocation5 + $0x148] sm:$0xff]
        %v341 = vld [vmem:[#allocation5 + $0x150] sm:$0xff]
        %v342 = vld [vmem:[#allocation5 + $0x158] sm:$0xff]
        %v343 = vld [vmem:[#allocation5 + $0x160] sm:$0xff]
        %v344 = vld [vmem:[#allocation5 + $0x168] sm:$0xff]
        %v345 = vld [vmem:[#allocation5 + $0x170] sm:$0xff]
        %v346 = vld [vmem:[#allocation5 + $0x178] sm:$0xff]
        %v347 = vld [vmem:[#allocation5 + $0x180] sm:$0xff]
        %v348 = vld [vmem:[#allocation5 + $0x188] sm:$0xff]
        %v349 = vld [vmem:[#allocation5 + $0x190] sm:$0xff]
        %v350 = vld [vmem:[#allocation5 + $0x198] sm:$0xff]
        %v351 = vld [vmem:[#allocation5 + $0x1a0] sm:$0xff]
        %v352 = vld [vmem:[#allocation5 + $0x1a8] sm:$0xff]
        %v353 = vld [vmem:[#allocation5 + $0x1b0] sm:$0xff]
        %v354 = vld [vmem:[#allocation5 + $0x1b8] sm:$0xff]
        %v355 = vld [vmem:[#allocation5 + $0x1c0] sm:$0xff]
        %v356 = vld [vmem:[#allocation5 + $0x1c8] sm:$0xff]
        %v357 = vld [vmem:[#allocation5 + $0x1d0] sm:$0xff]
        %v358 = vld [vmem:[#allocation5 + $0x1d8] sm:$0xff]
        %v359 = vld [vmem:[#allocation5 + $0x1e0] sm:$0xff]
        %v360 = vld [vmem:[#allocation5 + $0x1e8] sm:$0xff]
        %v361 = vld [vmem:[#allocation5 + $0x1f0] sm:$0xff]
        %v362 = vld [vmem:[#allocation5 + $0x1f8] sm:$0xff]
        %v363 = vld [vmem:[#allocation5 + $0x200] sm:$0xff]
        %v364 = vld [vmem:[#allocation5 + $0x208] sm:$0xff]
        %v365 = vld [vmem:[#allocation5 + $0x210] sm:$0xff]
        %v366 = vld [vmem:[#allocation5 + $0x218] sm:$0xff]
        %v367 = vld [vmem:[#allocation5 + $0x220] sm:$0xff]
        %v368 = vld [vmem:[#allocation5 + $0x228] sm:$0xff]
        %v369 = vld [vmem:[#allocation5 + $0x230] sm:$0xff]
        %v370 = vld [vmem:[#allocation5 + $0x238] sm:$0xff]
        %v371 = vld [vmem:[#allocation5 + $0x240] sm:$0xff]
        %v372 = vld [vmem:[#allocation5 + $0x248] sm:$0xff]
        %v373 = vld [vmem:[#allocation5 + $0x250] sm:$0xff]
        %v374 = vld [vmem:[#allocation5 + $0x258] sm:$0xff]
        %v375 = vld [vmem:[#allocation5 + $0x260] sm:$0xff]
        %v376 = vld [vmem:[#allocation5 + $0x268] sm:$0xff]
        %v377 = vld [vmem:[#allocation5 + $0x270] sm:$0xff]
        %v378 = vld [vmem:[#allocation5 + $0x278] sm:$0xff]
        %v379 = vld [vmem:[#allocation5 + $0x280] sm:$0xff]
        %v380 = vld [vmem:[#allocation5 + $0x288] sm:$0xff]
        %v381 = vld [vmem:[#allocation5 + $0x290] sm:$0xff]
        %v382 = vld [vmem:[#allocation5 + $0x298] sm:$0xff]
        %v383 = vld [vmem:[#allocation5 + $0x2a0] sm:$0xff]
        %v384 = vld [vmem:[#allocation5 + $0x2a8] sm:$0xff]
        %v385 = vld [vmem:[#allocation5 + $0x2b0] sm:$0xff]
        %v386 = vld [vmem:[#allocation5 + $0x2b8] sm:$0xff]
        %v387 = vld [vmem:[#allocation5 + $0x2c0] sm:$0xff]
        %v388 = vld [vmem:[#allocation5 + $0x2c8] sm:$0xff]
        %v389 = vld [vmem:[#allocation5 + $0x2d0] sm:$0xff]
        %v390 = vld [vmem:[#allocation5 + $0x2d8] sm:$0xff]
        %v391 = vld [vmem:[#allocation5 + $0x2e0] sm:$0xff]
        %v392 = vld [vmem:[#allocation5 + $0x2e8] sm:$0xff]
        %v393 = vld [vmem:[#allocation5 + $0x2f0] sm:$0xff]
        %v394 = vld [vmem:[#allocation5 + $0x2f8] sm:$0xff]
        %v395 = vld [vmem:[#allocation5 + $0x300] sm:$0xff]
        %v396 = vld [vmem:[#allocation5 + $0x308] sm:$0xff]
        %v397 = vld [vmem:[#allocation5 + $0x310] sm:$0xff]
        %v398 = vld [vmem:[#allocation5 + $0x318] sm:$0xff]
        %v399 = vld [vmem:[#allocation5 + $0x320] sm:$0xff]
        %v400 = vld [vmem:[#allocation5 + $0x328] sm:$0xff]
        %v401 = vld [vmem:[#allocation5 + $0x330] sm:$0xff]
        %v402 = vld [vmem:[#allocation5 + $0x338] sm:$0xff]
        %v403 = vld [vmem:[#allocation5 + $0x340] sm:$0xff]
        %v404 = vld [vmem:[#allocation5 + $0x348] sm:$0xff]
        %v405 = vld [vmem:[#allocation5 + $0x350] sm:$0xff]
        %v406 = vld [vmem:[#allocation5 + $0x358] sm:$0xff]
        %v407 = vld [vmem:[#allocation5 + $0x360] sm:$0xff]
        %v408 = vld [vmem:[#allocation5 + $0x368] sm:$0xff]
        %v409 = vld [vmem:[#allocation5 + $0x370] sm:$0xff]
        %v410 = vld [vmem:[#allocation5 + $0x378] sm:$0xff]
        %v411 = vld [vmem:[#allocation5 + $0x380] sm:$0xff]
        %v412 = vld [vmem:[#allocation5 + $0x388] sm:$0xff]
        %v413 = vld [vmem:[#allocation5 + $0x390] sm:$0xff]
        %v414 = vld [vmem:[#allocation5 + $0x398] sm:$0xff]
        %v415 = vld [vmem:[#allocation5 + $0x3a0] sm:$0xff]
        %v416 = vld [vmem:[#allocation5 + $0x3a8] sm:$0xff]
        %v417 = vld [vmem:[#allocation5 + $0x3b0] sm:$0xff]
        %v418 = vld [vmem:[#allocation5 + $0x3b8] sm:$0xff]
        %v419 = vld [vmem:[#allocation5 + $0x3c0] sm:$0xff]
        %v420 = vld [vmem:[#allocation5 + $0x3c8] sm:$0xff]
        %v421 = vld [vmem:[#allocation5 + $0x3d0] sm:$0xff]
        %v422 = vld [vmem:[#allocation5 + $0x3d8] sm:$0xff]
        %v423 = vld [vmem:[#allocation5 + $0x3e0] sm:$0xff]
        %v424 = vld [vmem:[#allocation5 + $0x3e8] sm:$0xff]
        %v425 = vld [vmem:[#allocation5 + $0x3f0] sm:$0xff]
        %v426 = vld [vmem:[#allocation5 + $0x3f8] sm:$0xff]
        %v427 = vld [vmem:[#allocation5 + $0x400] sm:$0xff]
        %v428 = vld [vmem:[#allocation5 + $0x408] sm:$0xff]
        %v429 = vld [vmem:[#allocation5 + $0x410] sm:$0xff]
        %v430 = vld [vmem:[#allocation5 + $0x418] sm:$0xff]
        %v431 = vld [vmem:[#allocation5 + $0x420] sm:$0xff]
        %v432 = vld [vmem:[#allocation5 + $0x428] sm:$0xff]
        %v433 = vld [vmem:[#allocation5 + $0x430] sm:$0xff]
        %v434 = vld [vmem:[#allocation5 + $0x438] sm:$0xff]
        %v435 = vld [vmem:[#allocation5 + $0x440] sm:$0xff]
        %v436 = vld [vmem:[#allocation5 + $0x448] sm:$0xff]
        %v437 = vld [vmem:[#allocation5 + $0x450] sm:$0xff]
        %v438 = vld [vmem:[#allocation5 + $0x458] sm:$0xff]
        %v439 = vld [vmem:[#allocation5 + $0x460] sm:$0xff]
        %v440 = vld [vmem:[#allocation5 + $0x468] sm:$0xff]
        %v441 = vld [vmem:[#allocation5 + $0x470] sm:$0xff]
        %v442 = vld [vmem:[#allocation5 + $0x478] sm:$0xff]
        %v443 = vld [vmem:[#allocation5 + $0x480] sm:$0xff]
        %v444 = vld [vmem:[#allocation5 + $0x488] sm:$0xff]
        %v445 = vld [vmem:[#allocation5 + $0x490] sm:$0xff]
        %v446 = vld [vmem:[#allocation5 + $0x498] sm:$0xff]
        %v447 = vld [vmem:[#allocation5 + $0x4a0] sm:$0xff]
        %v448 = vld [vmem:[#allocation5 + $0x4a8] sm:$0xff]
        %v449 = vld [vmem:[#allocation5 + $0x4b0] sm:$0xff]
        %v450 = vld [vmem:[#allocation5 + $0x4b8] sm:$0xff]
        %v451 = vld [vmem:[#allocation5 + $0x4c0] sm:$0xff]
        %v452 = vld [vmem:[#allocation5 + $0x4c8] sm:$0xff]
        %v453 = vld [vmem:[#allocation5 + $0x4d0] sm:$0xff]
        %v454 = vld [vmem:[#allocation5 + $0x4d8] sm:$0xff]
        %v455 = vld [vmem:[#allocation5 + $0x4e0] sm:$0xff]
        %v456 = vld [vmem:[#allocation5 + $0x4e8] sm:$0xff]
        %v457 = vld [vmem:[#allocation5 + $0x4f0] sm:$0xff]
        %v458 = vld [vmem:[#allocation5 + $0x4f8] sm:$0xff]
        %v459 = vld [vmem:[#allocation5 + $0x500] sm:$0xff]
        %v460 = vld [vmem:[#allocation5 + $0x508] sm:$0xff]
        %v461 = vld [vmem:[#allocation5 + $0x510] sm:$0xff]
        %v462 = vld [vmem:[#allocation5 + $0x518] sm:$0xff]
        %v463 = vld [vmem:[#allocation5 + $0x520] sm:$0xff]
        %v464 = vld [vmem:[#allocation5 + $0x528] sm:$0xff]
        %v465 = vld [vmem:[#allocation5 + $0x530] sm:$0xff]
        %v466 = vld [vmem:[#allocation5 + $0x538] sm:$0xff]
        %v467 = vld [vmem:[#allocation5 + $0x540] sm:$0xff]
        %v468 = vld [vmem:[#allocation5 + $0x548] sm:$0xff]
        %v469 = vld [vmem:[#allocation5 + $0x550] sm:$0xff]
        %v470 = vld [vmem:[#allocation5 + $0x558] sm:$0xff]
        %v471 = vld [vmem:[#allocation5 + $0x560] sm:$0xff]
        %v472 = vld [vmem:[#allocation5 + $0x568] sm:$0xff]
        %v473 = vld [vmem:[#allocation5 + $0x570] sm:$0xff]
        %v474 = vld [vmem:[#allocation5 + $0x578] sm:$0xff]
        %v475 = vld [vmem:[#allocation5 + $0x580] sm:$0xff]
        %v476 = vld [vmem:[#allocation5 + $0x588] sm:$0xff]
        %v477 = vld [vmem:[#allocation5 + $0x590] sm:$0xff]
        %v478 = vld [vmem:[#allocation5 + $0x598] sm:$0xff]
        %v479 = vld [vmem:[#allocation5 + $0x5a0] sm:$0xff]
        %v480 = vld [vmem:[#allocation5 + $0x5a8] sm:$0xff]
        %v481 = vld [vmem:[#allocation5 + $0x5b0] sm:$0xff]
        %v482 = vld [vmem:[#allocation5 + $0x5b8] sm:$0xff]
        %v483 = vld [vmem:[#allocation5 + $0x5c0] sm:$0xff]
        %v484 = vld [vmem:[#allocation5 + $0x5c8] sm:$0xff]
        %v485 = vld [vmem:[#allocation5 + $0x5d0] sm:$0xff]
        %v486 = vld [vmem:[#allocation5 + $0x5d8] sm:$0xff]
        %v487 = vld [vmem:[#allocation5 + $0x5e0] sm:$0xff]
        %v488 = vld [vmem:[#allocation5 + $0x5e8] sm:$0xff]
        %v489 = vld [vmem:[#allocation5 + $0x5f0] sm:$0xff]
        %v490 = vld [vmem:[#allocation5 + $0x5f8] sm:$0xff]
        %v491 = vld [vmem:[#allocation5 + $0x600] sm:$0xff]
        %v492 = vld [vmem:[#allocation5 + $0x608] sm:$0xff]
        %v493 = vld [vmem:[#allocation5 + $0x610] sm:$0xff]
        %v494 = vld [vmem:[#allocation5 + $0x618] sm:$0xff]
        %v495 = vld [vmem:[#allocation5 + $0x620] sm:$0xff]
        %v496 = vld [vmem:[#allocation5 + $0x628] sm:$0xff]
        %v497 = vld [vmem:[#allocation5 + $0x630] sm:$0xff]
        %v498 = vld [vmem:[#allocation5 + $0x638] sm:$0xff]
        %v499 = vld [vmem:[#allocation5 + $0x640] sm:$0xff]
        %v500 = vld [vmem:[#allocation5 + $0x648] sm:$0xff]
        %v501 = vld [vmem:[#allocation5 + $0x650] sm:$0xff]
        %v502 = vld [vmem:[#allocation5 + $0x658] sm:$0xff]
        %v503 = vld [vmem:[#allocation5 + $0x660] sm:$0xff]
        %v504 = vld [vmem:[#allocation5 + $0x668] sm:$0xff]
        %v505 = vld [vmem:[#allocation5 + $0x670] sm:$0xff]
        %v506 = vld [vmem:[#allocation5 + $0x678] sm:$0xff]
        %v507 = vld [vmem:[#allocation5 + $0x680] sm:$0xff]
        %v508 = vld [vmem:[#allocation5 + $0x688] sm:$0xff]
        %v509 = vld [vmem:[#allocation5 + $0x690] sm:$0xff]
        %v510 = vld [vmem:[#allocation5 + $0x698] sm:$0xff]
        %v511 = vld [vmem:[#allocation5 + $0x6a0] sm:$0xff]
        %v512 = vld [vmem:[#allocation5 + $0x6a8] sm:$0xff]
        %v513 = vld [vmem:[#allocation5 + $0x6b0] sm:$0xff]
        %v514 = vld [vmem:[#allocation5 + $0x6b8] sm:$0xff]
        %v515 = vld [vmem:[#allocation5 + $0x6c0] sm:$0xff]
        %v516 = vld [vmem:[#allocation5 + $0x6c8] sm:$0xff]
        %v517 = vld [vmem:[#allocation5 + $0x6d0] sm:$0xff]
        %v518 = vld [vmem:[#allocation5 + $0x6d8] sm:$0xff]
        %v519 = vld [vmem:[#allocation5 + $0x6e0] sm:$0xff]
        %v520 = vld [vmem:[#allocation5 + $0x6e8] sm:$0xff]
        %v521 = vld [vmem:[#allocation5 + $0x6f0] sm:$0xff]
        %v522 = vld [vmem:[#allocation5 + $0x6f8] sm:$0xff]
        %v523 = vld [vmem:[#allocation5 + $0x700] sm:$0xff]
        %v524 = vld [vmem:[#allocation5 + $0x708] sm:$0xff]
        %v525 = vld [vmem:[#allocation5 + $0x710] sm:$0xff]
        %v526 = vld [vmem:[#allocation5 + $0x718] sm:$0xff]
        %v527 = vld [vmem:[#allocation5 + $0x720] sm:$0xff]
        %v528 = vld [vmem:[#allocation5 + $0x728] sm:$0xff]
        %v529 = vld [vmem:[#allocation5 + $0x730] sm:$0xff]
        %v530 = vld [vmem:[#allocation5 + $0x738] sm:$0xff]
        %v531 = vld [vmem:[#allocation5 + $0x740] sm:$0xff]
        %v532 = vld [vmem:[#allocation5 + $0x748] sm:$0xff]
        %v533 = vld [vmem:[#allocation5 + $0x750] sm:$0xff]
        %v534 = vld [vmem:[#allocation5 + $0x758] sm:$0xff]
        %v535 = vld [vmem:[#allocation5 + $0x760] sm:$0xff]
        %v536 = vld [vmem:[#allocation5 + $0x768] sm:$0xff]
        %v537 = vld [vmem:[#allocation5 + $0x770] sm:$0xff]
        %v538 = vld [vmem:[#allocation5 + $0x778] sm:$0xff]
        %v539 = vld [vmem:[#allocation5 + $0x780] sm:$0xff]
        %v540 = vld [vmem:[#allocation5 + $0x788] sm:$0xff]
        %v541 = vld [vmem:[#allocation5 + $0x790] sm:$0xff]
        %v542 = vld [vmem:[#allocation5 + $0x798] sm:$0xff]
        %v543 = vld [vmem:[#allocation5 + $0x7a0] sm:$0xff]
        %v544 = vld [vmem:[#allocation5 + $0x7a8] sm:$0xff]
        %v545 = vld [vmem:[#allocation5 + $0x7b0] sm:$0xff]
        %v546 = vld [vmem:[#allocation5 + $0x7b8] sm:$0xff]
        %v547 = vld [vmem:[#allocation5 + $0x7c0] sm:$0xff]
        %v548 = vld [vmem:[#allocation5 + $0x7c8] sm:$0xff]
        %v549 = vld [vmem:[#allocation5 + $0x7d0] sm:$0xff]
        %v550 = vld [vmem:[#allocation5 + $0x7d8] sm:$0xff]
        %v551 = vld [vmem:[#allocation5 + $0x7e0] sm:$0xff]
        %v552 = vld [vmem:[#allocation5 + $0x7e8] sm:$0xff]
        %v553 = vld [vmem:[#allocation5 + $0x7f0] sm:$0xff]
        %v554 = vld [vmem:[#allocation5 + $0x7f8] sm:$0xff]
        %v555 = vld [vmem:[#allocation5 + $0x800] sm:$0xff]
        %v556 = vld [vmem:[#allocation5 + $0x808] sm:$0xff]
        %v557 = vld [vmem:[#allocation5 + $0x810] sm:$0xff]
        %v558 = vld [vmem:[#allocation5 + $0x818] sm:$0xff]
        %v559 = vld [vmem:[#allocation5 + $0x820] sm:$0xff]
        %v560 = vld [vmem:[#allocation5 + $0x828] sm:$0xff]
        %v561 = vld [vmem:[#allocation5 + $0x830] sm:$0xff]
        %v562 = vld [vmem:[#allocation5 + $0x838] sm:$0xff]
        %v563 = vld [vmem:[#allocation5 + $0x840] sm:$0xff]
        %v564 = vld [vmem:[#allocation5 + $0x848] sm:$0xff]
        %v565 = vld [vmem:[#allocation5 + $0x850] sm:$0xff]
        %v566 = vld [vmem:[#allocation5 + $0x858] sm:$0xff]
        %v567 = vld [vmem:[#allocation5 + $0x860] sm:$0xff]
        %v568 = vld [vmem:[#allocation5 + $0x868] sm:$0xff]
        %v569 = vld [vmem:[#allocation5 + $0x870] sm:$0xff]
        %v570 = vld [vmem:[#allocation5 + $0x878] sm:$0xff]
        %v571 = vld [vmem:[#allocation5 + $0x880] sm:$0xff]
        %v572 = vld [vmem:[#allocation5 + $0x888] sm:$0xff]
        %v573 = vld [vmem:[#allocation5 + $0x890] sm:$0xff]
        %v574 = vld [vmem:[#allocation5 + $0x898] sm:$0xff]
        %v575 = vld [vmem:[#allocation5 + $0x8a0] sm:$0xff]
        %v576 = vld [vmem:[#allocation5 + $0x8a8] sm:$0xff]
        %v577 = vld [vmem:[#allocation5 + $0x8b0] sm:$0xff]
        %v578 = vld [vmem:[#allocation5 + $0x8b8] sm:$0xff]
        %v579 = vld [vmem:[#allocation5 + $0x8c0] sm:$0xff]
        %v580 = vld [vmem:[#allocation5 + $0x8c8] sm:$0xff]
        %v581 = vld [vmem:[#allocation5 + $0x8d0] sm:$0xff]
        %v582 = vld [vmem:[#allocation5 + $0x8d8] sm:$0xff]
        %v583 = vld [vmem:[#allocation5 + $0x8e0] sm:$0xff]
        %v584 = vld [vmem:[#allocation5 + $0x8e8] sm:$0xff]
        %v585 = vld [vmem:[#allocation5 + $0x8f0] sm:$0xff]
        %v586 = vld [vmem:[#allocation5 + $0x8f8] sm:$0xff]
        %v587 = vld [vmem:[#allocation5 + $0x900] sm:$0xff]
        %v588 = vld [vmem:[#allocation5 + $0x908] sm:$0xff]
        %v589 = vld [vmem:[#allocation5 + $0x910] sm:$0xff]
        %v590 = vld [vmem:[#allocation5 + $0x918] sm:$0xff]
        %v591 = vld [vmem:[#allocation5 + $0x920] sm:$0xff]
        %v592 = vld [vmem:[#allocation5 + $0x928] sm:$0xff]
        %v593 = vld [vmem:[#allocation5 + $0x930] sm:$0xff]
        %v594 = vld [vmem:[#allocation5 + $0x938] sm:$0xff]
        %v595 = vld [vmem:[#allocation5 + $0x940] sm:$0xff]
        %v596 = vld [vmem:[#allocation5 + $0x948] sm:$0xff]
        %v597 = vld [vmem:[#allocation5 + $0x950] sm:$0xff]
        %v598 = vld [vmem:[#allocation5 + $0x958] sm:$0xff]
        %v599 = vld [vmem:[#allocation5 + $0x960] sm:$0xff]
        %v600 = vld [vmem:[#allocation5 + $0x968] sm:$0xff]
        %v601 = vld [vmem:[#allocation5 + $0x970] sm:$0xff]
        %v602 = vld [vmem:[#allocation5 + $0x978] sm:$0xff]
        %v603 = vld [vmem:[#allocation5 + $0x980] sm:$0xff]
        %v604 = vld [vmem:[#allocation5 + $0x988] sm:$0xff]
        %v605 = vld [vmem:[#allocation5 + $0x990] sm:$0xff]
        %v606 = vld [vmem:[#allocation5 + $0x998] sm:$0xff]
        %v607 = vld [vmem:[#allocation5 + $0x9a0] sm:$0xff]
        %v608 = vld [vmem:[#allocation5 + $0x9a8] sm:$0xff]
        %v609 = vld [vmem:[#allocation5 + $0x9b0] sm:$0xff]
        %v610 = vld [vmem:[#allocation5 + $0x9b8] sm:$0xff]
        %v611 = vld [vmem:[#allocation5 + $0x9c0] sm:$0xff]
        %v612 = vld [vmem:[#allocation5 + $0x9c8] sm:$0xff]
        %v613 = vld [vmem:[#allocation5 + $0x9d0] sm:$0xff]
        %v614 = vld [vmem:[#allocation5 + $0x9d8] sm:$0xff]
        %v615 = vld [vmem:[#allocation5 + $0x9e0] sm:$0xff]
        %v616 = vld [vmem:[#allocation5 + $0x9e8] sm:$0xff]
        %v617 = vld [vmem:[#allocation5 + $0x9f0] sm:$0xff]
        %v618 = vld [vmem:[#allocation5 + $0x9f8] sm:$0xff]
        %v619 = vld [vmem:[#allocation5 + $0xa00] sm:$0xff]
        %v620 = vld [vmem:[#allocation5 + $0xa08] sm:$0xff]
        %v621 = vld [vmem:[#allocation5 + $0xa10] sm:$0xff]
        %v622 = vld [vmem:[#allocation5 + $0xa18] sm:$0xff]
        %v623 = vld [vmem:[#allocation5 + $0xa20] sm:$0xff]
        %v624 = vld [vmem:[#allocation5 + $0xa28] sm:$0xff]
        %v625 = vld [vmem:[#allocation5 + $0xa30] sm:$0xff]
        %v626 = vld [vmem:[#allocation5 + $0xa38] sm:$0xff]
        %v627 = vld [vmem:[#allocation5 + $0xa40] sm:$0xff]
        %v628 = vld [vmem:[#allocation5 + $0xa48] sm:$0xff]
        %v629 = vld [vmem:[#allocation5 + $0xa50] sm:$0xff]
        %v630 = vld [vmem:[#allocation5 + $0xa58] sm:$0xff]
        %v631 = vld [vmem:[#allocation5 + $0xa60] sm:$0xff]
        %v632 = vld [vmem:[#allocation5 + $0xa68] sm:$0xff]
        %v633 = vld [vmem:[#allocation5 + $0xa70] sm:$0xff]
        %v634 = vld [vmem:[#allocation5 + $0xa78] sm:$0xff]
        %v635 = vld [vmem:[#allocation5 + $0xa80] sm:$0xff]
        %v636 = vld [vmem:[#allocation5 + $0xa88] sm:$0xff]
        %v637 = vld [vmem:[#allocation5 + $0xa90] sm:$0xff]
        %v638 = vld [vmem:[#allocation5 + $0xa98] sm:$0xff]
        %v639 = vld [vmem:[#allocation5 + $0xaa0] sm:$0xff]
        %v640 = vld [vmem:[#allocation5 + $0xaa8] sm:$0xff]
        %v641 = vld [vmem:[#allocation5 + $0xab0] sm:$0xff]
        %v642 = vld [vmem:[#allocation5 + $0xab8] sm:$0xff]
        %v643 = vld [vmem:[#allocation5 + $0xac0] sm:$0xff]
        %v644 = vld [vmem:[#allocation5 + $0xac8] sm:$0xff]
        %v645 = vld [vmem:[#allocation5 + $0xad0] sm:$0xff]
        %v646 = vld [vmem:[#allocation5 + $0xad8] sm:$0xff]
        %v647 = vld [vmem:[#allocation5 + $0xae0] sm:$0xff]
        %v648 = vld [vmem:[#allocation5 + $0xae8] sm:$0xff]
        %v649 = vld [vmem:[#allocation5 + $0xaf0] sm:$0xff]
        %v650 = vld [vmem:[#allocation5 + $0xaf8] sm:$0xff]
        %v651 = vld [vmem:[#allocation5 + $0xb00] sm:$0xff]
        %v652 = vld [vmem:[#allocation5 + $0xb08] sm:$0xff]
        %v653 = vld [vmem:[#allocation5 + $0xb10] sm:$0xff]
        %v654 = vld [vmem:[#allocation5 + $0xb18] sm:$0xff]
        %v655 = vld [vmem:[#allocation5 + $0xb20] sm:$0xff]
        %v656 = vld [vmem:[#allocation5 + $0xb28] sm:$0xff]
        %v657 = vld [vmem:[#allocation5 + $0xb30] sm:$0xff]
        %v658 = vld [vmem:[#allocation5 + $0xb38] sm:$0xff]
        %v659 = vld [vmem:[#allocation5 + $0xb40] sm:$0xff]
        %v660 = vld [vmem:[#allocation5 + $0xb48] sm:$0xff]
        %v661 = vld [vmem:[#allocation5 + $0xb50] sm:$0xff]
        %v662 = vld [vmem:[#allocation5 + $0xb58] sm:$0xff]
        %v663 = vld [vmem:[#allocation5 + $0xb60] sm:$0xff]
        %v664 = vld [vmem:[#allocation5 + $0xb68] sm:$0xff]
        %v665 = vld [vmem:[#allocation5 + $0xb70] sm:$0xff]
        %v666 = vld [vmem:[#allocation5 + $0xb78] sm:$0xff]
        %v667 = vld [vmem:[#allocation5 + $0xb80] sm:$0xff]
        %v668 = vld [vmem:[#allocation5 + $0xb88] sm:$0xff]
        %v669 = vld [vmem:[#allocation5 + $0xb90] sm:$0xff]
        %v670 = vld [vmem:[#allocation5 + $0xb98] sm:$0xff]
        %v671 = vld [vmem:[#allocation5 + $0xba0] sm:$0xff]
        %v672 = vld [vmem:[#allocation5 + $0xba8] sm:$0xff]
        %v673 = vld [vmem:[#allocation5 + $0xbb0] sm:$0xff]
        %v674 = vld [vmem:[#allocation5 + $0xbb8] sm:$0xff]
        %v675 = vld [vmem:[#allocation5 + $0xbc0] sm:$0xff]
        %v676 = vld [vmem:[#allocation5 + $0xbc8] sm:$0xff]
        %v677 = vld [vmem:[#allocation5 + $0xbd0] sm:$0xff]
        %v678 = vld [vmem:[#allocation5 + $0xbd8] sm:$0xff]
        %v679 = vld [vmem:[#allocation5 + $0xbe0] sm:$0xff]
        %v680 = vld [vmem:[#allocation5 + $0xbe8] sm:$0xff]
        %v681 = vld [vmem:[#allocation5 + $0xbf0] sm:$0xff]
        %v682 = vld [vmem:[#allocation5 + $0xbf8] sm:$0xff]
        %v683 = vld [vmem:[#allocation5 + $0xc00] sm:$0xff]
        %v684 = vld [vmem:[#allocation5 + $0xc08] sm:$0xff]
        %v685 = vld [vmem:[#allocation5 + $0xc10] sm:$0xff]
        %v686 = vld [vmem:[#allocation5 + $0xc18] sm:$0xff]
        %v687 = vld [vmem:[#allocation5 + $0xc20] sm:$0xff]
        %v688 = vld [vmem:[#allocation5 + $0xc28] sm:$0xff]
        %v689 = vld [vmem:[#allocation5 + $0xc30] sm:$0xff]
        %v690 = vld [vmem:[#allocation5 + $0xc38] sm:$0xff]
        %v691 = vld [vmem:[#allocation5 + $0xc40] sm:$0xff]
        %v692 = vld [vmem:[#allocation5 + $0xc48] sm:$0xff]
        %v693 = vld [vmem:[#allocation5 + $0xc50] sm:$0xff]
        %v694 = vld [vmem:[#allocation5 + $0xc58] sm:$0xff]
        %v695 = vld [vmem:[#allocation5 + $0xc60] sm:$0xff]
        %v696 = vld [vmem:[#allocation5 + $0xc68] sm:$0xff]
        %v697 = vld [vmem:[#allocation5 + $0xc70] sm:$0xff]
        %v698 = vld [vmem:[#allocation5 + $0xc78] sm:$0xff]
        %v699 = vld [vmem:[#allocation5 + $0xc80] sm:$0xff]
        %v700 = vld [vmem:[#allocation5 + $0xc88] sm:$0xff]
        %v701 = vld [vmem:[#allocation5 + $0xc90] sm:$0xff]
        %v702 = vld [vmem:[#allocation5 + $0xc98] sm:$0xff]
        %v703 = vld [vmem:[#allocation5 + $0xca0] sm:$0xff]
        %v704 = vld [vmem:[#allocation5 + $0xca8] sm:$0xff]
        %v705 = vld [vmem:[#allocation5 + $0xcb0] sm:$0xff]
        %v706 = vld [vmem:[#allocation5 + $0xcb8] sm:$0xff]
        %v707 = vld [vmem:[#allocation5 + $0xcc0] sm:$0xff]
        %v708 = vld [vmem:[#allocation5 + $0xcc8] sm:$0xff]
        %v709 = vld [vmem:[#allocation5 + $0xcd0] sm:$0xff]
        %v710 = vld [vmem:[#allocation5 + $0xcd8] sm:$0xff]
        %v711 = vld [vmem:[#allocation5 + $0xce0] sm:$0xff]
        %v712 = vld [vmem:[#allocation5 + $0xce8] sm:$0xff]
        %v713 = vld [vmem:[#allocation5 + $0xcf0] sm:$0xff]
        %v714 = vld [vmem:[#allocation5 + $0xcf8] sm:$0xff]
        %v715 = vld [vmem:[#allocation5 + $0xd00] sm:$0xff]
        %v716 = vld [vmem:[#allocation5 + $0xd08] sm:$0xff]
        %v717 = vld [vmem:[#allocation5 + $0xd10] sm:$0xff]
        %v718 = vld [vmem:[#allocation5 + $0xd18] sm:$0xff]
        %v719 = vld [vmem:[#allocation5 + $0xd20] sm:$0xff]
        %v720 = vld [vmem:[#allocation5 + $0xd28] sm:$0xff]
        %v721 = vld [vmem:[#allocation5 + $0xd30] sm:$0xff]
        %v722 = vld [vmem:[#allocation5 + $0xd38] sm:$0xff]
        %v723 = vld [vmem:[#allocation5 + $0xd40] sm:$0xff]
        %v724 = vld [vmem:[#allocation5 + $0xd48] sm:$0xff]
        %v725 = vld [vmem:[#allocation5 + $0xd50] sm:$0xff]
        %v726 = vld [vmem:[#allocation5 + $0xd58] sm:$0xff]
        %v727 = vld [vmem:[#allocation5 + $0xd60] sm:$0xff]
        %v728 = vld [vmem:[#allocation5 + $0xd68] sm:$0xff]
        %v729 = vld [vmem:[#allocation5 + $0xd70] sm:$0xff]
        %v730 = vld [vmem:[#allocation5 + $0xd78] sm:$0xff]
        %v731 = vld [vmem:[#allocation5 + $0xd80] sm:$0xff]
        %v732 = vld [vmem:[#allocation5 + $0xd88] sm:$0xff]
        %v733 = vld [vmem:[#allocation5 + $0xd90] sm:$0xff]
        %v734 = vld [vmem:[#allocation5 + $0xd98] sm:$0xff]
        %v735 = vld [vmem:[#allocation5 + $0xda0] sm:$0xff]
        %v736 = vld [vmem:[#allocation5 + $0xda8] sm:$0xff]
        %v737 = vld [vmem:[#allocation5 + $0xdb0] sm:$0xff]
        %v738 = vld [vmem:[#allocation5 + $0xdb8] sm:$0xff]
        %v739 = vld [vmem:[#allocation5 + $0xdc0] sm:$0xff]
        %v740 = vld [vmem:[#allocation5 + $0xdc8] sm:$0xff]
        %v741 = vld [vmem:[#allocation5 + $0xdd0] sm:$0xff]
        %v742 = vld [vmem:[#allocation5 + $0xdd8] sm:$0xff]
        %v743 = vld [vmem:[#allocation5 + $0xde0] sm:$0xff]
        %v744 = vld [vmem:[#allocation5 + $0xde8] sm:$0xff]
        %v745 = vld [vmem:[#allocation5 + $0xdf0] sm:$0xff]
        %v746 = vld [vmem:[#allocation5 + $0xdf8] sm:$0xff]
        %v747 = vld [vmem:[#allocation5 + $0xe00] sm:$0xff]
        %v748 = vld [vmem:[#allocation5 + $0xe08] sm:$0xff]
        %v749 = vld [vmem:[#allocation5 + $0xe10] sm:$0xff]
        %v750 = vld [vmem:[#allocation5 + $0xe18] sm:$0xff]
        %v751 = vld [vmem:[#allocation5 + $0xe20] sm:$0xff]
        %v752 = vld [vmem:[#allocation5 + $0xe28] sm:$0xff]
        %v753 = vld [vmem:[#allocation5 + $0xe30] sm:$0xff]
        %v754 = vld [vmem:[#allocation5 + $0xe38] sm:$0xff]
        %v755 = vld [vmem:[#allocation5 + $0xe40] sm:$0xff]
        %v756 = vld [vmem:[#allocation5 + $0xe48] sm:$0xff]
        %v757 = vld [vmem:[#allocation5 + $0xe50] sm:$0xff]
        %v758 = vld [vmem:[#allocation5 + $0xe58] sm:$0xff]
        %v759 = vld [vmem:[#allocation5 + $0xe60] sm:$0xff]
        %v760 = vld [vmem:[#allocation5 + $0xe68] sm:$0xff]
        %v761 = vld [vmem:[#allocation5 + $0xe70] sm:$0xff]
        %v762 = vld [vmem:[#allocation5 + $0xe78] sm:$0xff]
        %v763 = vld [vmem:[#allocation5 + $0xe80] sm:$0xff]
        %v764 = vld [vmem:[#allocation5 + $0xe88] sm:$0xff]
        %v765 = vld [vmem:[#allocation5 + $0xe90] sm:$0xff]
        %v766 = vld [vmem:[#allocation5 + $0xe98] sm:$0xff]
        %v767 = vld [vmem:[#allocation5 + $0xea0] sm:$0xff]
        %v768 = vld [vmem:[#allocation5 + $0xea8] sm:$0xff]
        %v769 = vld [vmem:[#allocation5 + $0xeb0] sm:$0xff]
        %v770 = vld [vmem:[#allocation5 + $0xeb8] sm:$0xff]
        %v771 = vld [vmem:[#allocation5 + $0xec0] sm:$0xff]
        %v772 = vld [vmem:[#allocation5 + $0xec8] sm:$0xff]
        %v773 = vld [vmem:[#allocation5 + $0xed0] sm:$0xff]
        %v774 = vld [vmem:[#allocation5 + $0xed8] sm:$0xff]
        %v775 = vld [vmem:[#allocation5 + $0xee0] sm:$0xff]
        %v776 = vld [vmem:[#allocation5 + $0xee8] sm:$0xff]
        %v777 = vld [vmem:[#allocation5 + $0xef0] sm:$0xff]
        %v778 = vld [vmem:[#allocation5 + $0xef8] sm:$0xff]
        %v779 = vld [vmem:[#allocation5 + $0xf00] sm:$0xff]
        %v780 = vld [vmem:[#allocation5 + $0xf08] sm:$0xff]
        %v781 = vld [vmem:[#allocation5 + $0xf10] sm:$0xff]
        %v782 = vld [vmem:[#allocation5 + $0xf18] sm:$0xff]
        %v783 = vld [vmem:[#allocation5 + $0xf20] sm:$0xff]
        %v784 = vld [vmem:[#allocation5 + $0xf28] sm:$0xff]
        %v785 = vld [vmem:[#allocation5 + $0xf30] sm:$0xff]
        %v786 = vld [vmem:[#allocation5 + $0xf38] sm:$0xff]
        %v787 = vld [vmem:[#allocation5 + $0xf40] sm:$0xff]
        %v788 = vld [vmem:[#allocation5 + $0xf48] sm:$0xff]
        %v789 = vld [vmem:[#allocation5 + $0xf50] sm:$0xff]
        %v790 = vld [vmem:[#allocation5 + $0xf58] sm:$0xff]
        %v791 = vld [vmem:[#allocation5 + $0xf60] sm:$0xff]
        %v792 = vld [vmem:[#allocation5 + $0xf68] sm:$0xff]
        %v793 = vld [vmem:[#allocation5 + $0xf70] sm:$0xff]
        %v794 = vld [vmem:[#allocation5 + $0xf78] sm:$0xff]
        %v795 = vld [vmem:[#allocation5 + $0xf80] sm:$0xff]
        %v796 = vld [vmem:[#allocation5 + $0xf88] sm:$0xff]
        %v797 = vld [vmem:[#allocation5 + $0xf90] sm:$0xff]
        %v798 = vld [vmem:[#allocation5 + $0xf98] sm:$0xff]
        %v799 = vld [vmem:[#allocation5 + $0xfa0] sm:$0xff]
        %v800 = vld [vmem:[#allocation5 + $0xfa8] sm:$0xff]
        %v801 = vld [vmem:[#allocation5 + $0xfb0] sm:$0xff]
        %v802 = vld [vmem:[#allocation5 + $0xfb8] sm:$0xff]
        %v803 = vld [vmem:[#allocation5 + $0xfc0] sm:$0xff]
        %v804 = vld [vmem:[#allocation5 + $0xfc8] sm:$0xff]
        %v805 = vld [vmem:[#allocation5 + $0xfd0] sm:$0xff]
        %v806 = vld [vmem:[#allocation5 + $0xfd8] sm:$0xff]
        %v807 = vld [vmem:[#allocation5 + $0xfe0] sm:$0xff]
        %v808 = vld [vmem:[#allocation5 + $0xfe8] sm:$0xff]
        %v809 = vld [vmem:[#allocation5 + $0xff0] sm:$0xff]
        %v810 = vld [vmem:[#allocation5 + $0xff8] sm:$0xff]
        %v811 = vld [vmem:[#allocation5 + $0x1000] sm:$0xff]
        %v812 = vld [vmem:[#allocation5 + $0x1008] sm:$0xff]
        %v813 = vld [vmem:[#allocation5 + $0x1010] sm:$0xff]
        %v814 = vld [vmem:[#allocation5 + $0x1018] sm:$0xff]
        %v815 = vld [vmem:[#allocation5 + $0x1020] sm:$0xff]
        %v816 = vld [vmem:[#allocation5 + $0x1028] sm:$0xff]
        %v817 = vld [vmem:[#allocation5 + $0x1030] sm:$0xff]
        %v818 = vld [vmem:[#allocation5 + $0x1038] sm:$0xff]
        %v819 = vld [vmem:[#allocation5 + $0x1040] sm:$0xff]
        %v820 = vld [vmem:[#allocation5 + $0x1048] sm:$0xff]
        %v821 = vld [vmem:[#allocation5 + $0x1050] sm:$0xff]
        %v822 = vld [vmem:[#allocation5 + $0x1058] sm:$0xff]
        %v823 = vld [vmem:[#allocation5 + $0x1060] sm:$0xff]
        %v824 = vld [vmem:[#allocation5 + $0x1068] sm:$0xff]
        %v825 = vld [vmem:[#allocation5 + $0x1070] sm:$0xff]
        %v826 = vld [vmem:[#allocation5 + $0x1078] sm:$0xff]
        %v827 = vld [vmem:[#allocation5 + $0x1080] sm:$0xff]
        %v828 = vld [vmem:[#allocation5 + $0x1088] sm:$0xff]
        %v829 = vld [vmem:[#allocation5 + $0x1090] sm:$0xff]
        %v830 = vld [vmem:[#allocation5 + $0x1098] sm:$0xff]
        %v831 = vld [vmem:[#allocation5 + $0x10a0] sm:$0xff]
        %v832 = vld [vmem:[#allocation5 + $0x10a8] sm:$0xff]
        %v833 = vld [vmem:[#allocation5 + $0x10b0] sm:$0xff]
        %v834 = vld [vmem:[#allocation5 + $0x10b8] sm:$0xff]
        %v835 = vld [vmem:[#allocation5 + $0x10c0] sm:$0xff]
        %v836 = vld [vmem:[#allocation5 + $0x10c8] sm:$0xff]
        %v837 = vld [vmem:[#allocation5 + $0x10d0] sm:$0xff]
        %v838 = vld [vmem:[#allocation5 + $0x10d8] sm:$0xff]
        %v839 = vld [vmem:[#allocation5 + $0x10e0] sm:$0xff]
        %v840 = vld [vmem:[#allocation5 + $0x10e8] sm:$0xff]
        %v841 = vld [vmem:[#allocation5 + $0x10f0] sm:$0xff]
        %v842 = vld [vmem:[#allocation5 + $0x10f8] sm:$0xff]
        %v843 = vld [vmem:[#allocation5 + $0x1100] sm:$0xff]
        %v844 = vld [vmem:[#allocation5 + $0x1108] sm:$0xff]
        %v845 = vld [vmem:[#allocation5 + $0x1110] sm:$0xff]
        %v846 = vld [vmem:[#allocation5 + $0x1118] sm:$0xff]
        %v847 = vld [vmem:[#allocation5 + $0x1120] sm:$0xff]
        %v848 = vld [vmem:[#allocation5 + $0x1128] sm:$0xff]
        %v849 = vld [vmem:[#allocation5 + $0x1130] sm:$0xff]
        %v850 = vld [vmem:[#allocation5 + $0x1138] sm:$0xff]
        %v851 = vld [vmem:[#allocation5 + $0x1140] sm:$0xff]
        %v852 = vld [vmem:[#allocation5 + $0x1148] sm:$0xff]
        %v853 = vld [vmem:[#allocation5 + $0x1150] sm:$0xff]
        %v854 = vld [vmem:[#allocation5 + $0x1158] sm:$0xff]
        %v855 = vld [vmem:[#allocation5 + $0x1160] sm:$0xff]
        %v856 = vld [vmem:[#allocation5 + $0x1168] sm:$0xff]
        %v857 = vld [vmem:[#allocation5 + $0x1170] sm:$0xff]
        %v858 = vld [vmem:[#allocation5 + $0x1178] sm:$0xff]
        %v859 = vld [vmem:[#allocation5 + $0x1180] sm:$0xff]
        %v860 = vld [vmem:[#allocation5 + $0x1188] sm:$0xff]
        %v861 = vld [vmem:[#allocation5 + $0x1190] sm:$0xff]
        %v862 = vld [vmem:[#allocation5 + $0x1198] sm:$0xff]
        %v863 = vld [vmem:[#allocation5 + $0x11a0] sm:$0xff]
        %v864 = vld [vmem:[#allocation5 + $0x11a8] sm:$0xff]
        %v865 = vld [vmem:[#allocation5 + $0x11b0] sm:$0xff]
        %v866 = vld [vmem:[#allocation5 + $0x11b8] sm:$0xff]
        %v867 = vld [vmem:[#allocation5 + $0x11c0] sm:$0xff]
        %v868 = vld [vmem:[#allocation5 + $0x11c8] sm:$0xff]
        %v869 = vld [vmem:[#allocation5 + $0x11d0] sm:$0xff]
        %v870 = vld [vmem:[#allocation5 + $0x11d8] sm:$0xff]
        %v871 = vld [vmem:[#allocation5 + $0x11e0] sm:$0xff]
        %v872 = vld [vmem:[#allocation5 + $0x11e8] sm:$0xff]
        %v873 = vld [vmem:[#allocation5 + $0x11f0] sm:$0xff]
        %v874 = vld [vmem:[#allocation5 + $0x11f8] sm:$0xff]
        %v875 = vld [vmem:[#allocation5 + $0x1200] sm:$0xff]
        %v876 = vld [vmem:[#allocation5 + $0x1208] sm:$0xff]
        %v877 = vld [vmem:[#allocation5 + $0x1210] sm:$0xff]
        %v878 = vld [vmem:[#allocation5 + $0x1218] sm:$0xff]
        %v879 = vld [vmem:[#allocation5 + $0x1220] sm:$0xff]
        %v880 = vld [vmem:[#allocation5 + $0x1228] sm:$0xff]
        %v881 = vld [vmem:[#allocation5 + $0x1230] sm:$0xff]
        %v882 = vld [vmem:[#allocation5 + $0x1238] sm:$0xff]
        %v883 = vld [vmem:[#allocation5 + $0x1240] sm:$0xff]
        %v884 = vld [vmem:[#allocation5 + $0x1248] sm:$0xff]
        %v885 = vld [vmem:[#allocation5 + $0x1250] sm:$0xff]
        %v886 = vld [vmem:[#allocation5 + $0x1258] sm:$0xff]
        %v887 = vld [vmem:[#allocation5 + $0x1260] sm:$0xff]
        %v888 = vld [vmem:[#allocation5 + $0x1268] sm:$0xff]
        %v889 = vld [vmem:[#allocation5 + $0x1270] sm:$0xff]
        %v890 = vld [vmem:[#allocation5 + $0x1278] sm:$0xff]
        %v891 = vld [vmem:[#allocation5 + $0x1280] sm:$0xff]
        %v892 = vld [vmem:[#allocation5 + $0x1288] sm:$0xff]
        %v893 = vld [vmem:[#allocation5 + $0x1290] sm:$0xff]
        %v894 = vld [vmem:[#allocation5 + $0x1298] sm:$0xff]
        %v895 = vld [vmem:[#allocation5 + $0x12a0] sm:$0xff]
        %v896 = vld [vmem:[#allocation5 + $0x12a8] sm:$0xff]
        %v897 = vld [vmem:[#allocation5 + $0x12b0] sm:$0xff]
        %v898 = vld [vmem:[#allocation5 + $0x12b8] sm:$0xff]
        %v899 = vld [vmem:[#allocation5 + $0x12c0] sm:$0xff]
        %v900 = vld [vmem:[#allocation5 + $0x12c8] sm:$0xff]
        %v901 = vld [vmem:[#allocation5 + $0x12d0] sm:$0xff]
        %v902 = vld [vmem:[#allocation5 + $0x12d8] sm:$0xff]
        %v903 = vld [vmem:[#allocation5 + $0x12e0] sm:$0xff]
        %v904 = vld [vmem:[#allocation5 + $0x12e8] sm:$0xff]
        %v905 = vld [vmem:[#allocation5 + $0x12f0] sm:$0xff]
        %v906 = vld [vmem:[#allocation5 + $0x12f8] sm:$0xff]
        %v907 = vld [vmem:[#allocation5 + $0x1300] sm:$0xff]
        %v908 = vld [vmem:[#allocation5 + $0x1308] sm:$0xff]
        %v909 = vld [vmem:[#allocation5 + $0x1310] sm:$0xff]
        %v910 = vld [vmem:[#allocation5 + $0x1318] sm:$0xff]
        %v911 = vld [vmem:[#allocation5 + $0x1320] sm:$0xff]
        %v912 = vld [vmem:[#allocation5 + $0x1328] sm:$0xff]
        %v913 = vld [vmem:[#allocation5 + $0x1330] sm:$0xff]
        %v914 = vld [vmem:[#allocation5 + $0x1338] sm:$0xff]
        %v915 = vld [vmem:[#allocation5 + $0x1340] sm:$0xff]
        %v916 = vld [vmem:[#allocation5 + $0x1348] sm:$0xff]
        %v917 = vld [vmem:[#allocation5 + $0x1350] sm:$0xff]
        %v918 = vld [vmem:[#allocation5 + $0x1358] sm:$0xff]
        %v919 = vld [vmem:[#allocation5 + $0x1360] sm:$0xff]
        %v920 = vld [vmem:[#allocation5 + $0x1368] sm:$0xff]
        %v921 = vld [vmem:[#allocation5 + $0x1370] sm:$0xff]
        %v922 = vld [vmem:[#allocation5 + $0x1378] sm:$0xff]
        %v923 = vld [vmem:[#allocation5 + $0x1380] sm:$0xff]
        %v924 = vld [vmem:[#allocation5 + $0x1388] sm:$0xff]
        %v925 = vld [vmem:[#allocation5 + $0x1390] sm:$0xff]
        %v926 = vld [vmem:[#allocation5 + $0x1398] sm:$0xff]
        %v927 = vld [vmem:[#allocation5 + $0x13a0] sm:$0xff]
        %v928 = vld [vmem:[#allocation5 + $0x13a8] sm:$0xff]
        %v929 = vld [vmem:[#allocation5 + $0x13b0] sm:$0xff]
        %v930 = vld [vmem:[#allocation5 + $0x13b8] sm:$0xff]
        %v931 = vld [vmem:[#allocation5 + $0x13c0] sm:$0xff]
        %v932 = vld [vmem:[#allocation5 + $0x13c8] sm:$0xff]
        %v933 = vld [vmem:[#allocation5 + $0x13d0] sm:$0xff]
        %v934 = vld [vmem:[#allocation5 + $0x13d8] sm:$0xff]
        %v935 = vld [vmem:[#allocation5 + $0x13e0] sm:$0xff]
        %v936 = vld [vmem:[#allocation5 + $0x13e8] sm:$0xff]
        %v937 = vld [vmem:[#allocation5 + $0x13f0] sm:$0xff]
        %v938 = vld [vmem:[#allocation5 + $0x13f8] sm:$0xff]
        %v939 = vld [vmem:[#allocation5 + $0x1400] sm:$0xff]
        %v940 = vld [vmem:[#allocation5 + $0x1408] sm:$0xff]
        %v941 = vld [vmem:[#allocation5 + $0x1410] sm:$0xff]
        %v942 = vld [vmem:[#allocation5 + $0x1418] sm:$0xff]
        %v943 = vld [vmem:[#allocation5 + $0x1420] sm:$0xff]
        %v944 = vld [vmem:[#allocation5 + $0x1428] sm:$0xff]
        %v945 = vld [vmem:[#allocation5 + $0x1430] sm:$0xff]
        %v946 = vld [vmem:[#allocation5 + $0x1438] sm:$0xff]
        %v947 = vld [vmem:[#allocation5 + $0x1440] sm:$0xff]
        %v948 = vld [vmem:[#allocation5 + $0x1448] sm:$0xff]
        %v949 = vld [vmem:[#allocation5 + $0x1450] sm:$0xff]
        %v950 = vld [vmem:[#allocation5 + $0x1458] sm:$0xff]
        %v951 = vld [vmem:[#allocation5 + $0x1460] sm:$0xff]
        %v952 = vld [vmem:[#allocation5 + $0x1468] sm:$0xff]
        %v953 = vld [vmem:[#allocation5 + $0x1470] sm:$0xff]
        %v954 = vld [vmem:[#allocation5 + $0x1478] sm:$0xff]
        %v955 = vld [vmem:[#allocation5 + $0x1480] sm:$0xff]
        %v956 = vld [vmem:[#allocation5 + $0x1488] sm:$0xff]
        %v957 = vld [vmem:[#allocation5 + $0x1490] sm:$0xff]
        %v958 = vld [vmem:[#allocation5 + $0x1498] sm:$0xff]
        %v959 = vld [vmem:[#allocation5 + $0x14a0] sm:$0xff]
        %v960 = vld [vmem:[#allocation5 + $0x14a8] sm:$0xff]
        %v961 = vld [vmem:[#allocation5 + $0x14b0] sm:$0xff]
        %v962 = vld [vmem:[#allocation5 + $0x14b8] sm:$0xff]
        %v963 = vld [vmem:[#allocation5 + $0x14c0] sm:$0xff]
        %v964 = vld [vmem:[#allocation5 + $0x14c8] sm:$0xff]
        %v965 = vld [vmem:[#allocation5 + $0x14d0] sm:$0xff]
        %v966 = vld [vmem:[#allocation5 + $0x14d8] sm:$0xff]
        %v967 = vld [vmem:[#allocation5 + $0x14e0] sm:$0xff]
        %v968 = vld [vmem:[#allocation5 + $0x14e8] sm:$0xff]
        %v969 = vld [vmem:[#allocation5 + $0x14f0] sm:$0xff]
        %v970 = vld [vmem:[#allocation5 + $0x14f8] sm:$0xff]
        %v971 = vld [vmem:[#allocation5 + $0x1500] sm:$0xff]
        %v972 = vld [vmem:[#allocation5 + $0x1508] sm:$0xff]
        %v973 = vld [vmem:[#allocation5 + $0x1510] sm:$0xff]
        %v974 = vld [vmem:[#allocation5 + $0x1518] sm:$0xff]
        %v975 = vld [vmem:[#allocation5 + $0x1520] sm:$0xff]
        %v976 = vld [vmem:[#allocation5 + $0x1528] sm:$0xff]
        %v977 = vld [vmem:[#allocation5 + $0x1530] sm:$0xff]
        %v978 = vld [vmem:[#allocation5 + $0x1538] sm:$0xff]
        %v979 = vld [vmem:[#allocation5 + $0x1540] sm:$0xff]
        %v980 = vld [vmem:[#allocation5 + $0x1548] sm:$0xff]
        %v981 = vld [vmem:[#allocation5 + $0x1550] sm:$0xff]
        %v982 = vld [vmem:[#allocation5 + $0x1558] sm:$0xff]
        %v983 = vld [vmem:[#allocation5 + $0x1560] sm:$0xff]
        %v984 = vld [vmem:[#allocation5 + $0x1568] sm:$0xff]
        %v985 = vld [vmem:[#allocation5 + $0x1570] sm:$0xff]
        %v986 = vld [vmem:[#allocation5 + $0x1578] sm:$0xff]
        %v987 = vld [vmem:[#allocation5 + $0x1580] sm:$0xff]
        %v988 = vld [vmem:[#allocation5 + $0x1588] sm:$0xff]
        %v989 = vld [vmem:[#allocation5 + $0x1590] sm:$0xff]
        %v990 = vld [vmem:[#allocation5 + $0x1598] sm:$0xff]
        %v991 = vld [vmem:[#allocation5 + $0x15a0] sm:$0xff]
        %v992 = vld [vmem:[#allocation5 + $0x15a8] sm:$0xff]
        %v993 = vld [vmem:[#allocation5 + $0x15b0] sm:$0xff]
        %v994 = vld [vmem:[#allocation5 + $0x15b8] sm:$0xff]
        %v995 = vld [vmem:[#allocation5 + $0x15c0] sm:$0xff]
        %v996 = vld [vmem:[#allocation5 + $0x15c8] sm:$0xff]
        %v997 = vld [vmem:[#allocation5 + $0x15d0] sm:$0xff]
        %v998 = vld [vmem:[#allocation5 + $0x15d8] sm:$0xff]
        %v999 = vld [vmem:[#allocation5 + $0x15e0] sm:$0xff]
        %v1000 = vld [vmem:[#allocation5 + $0x15e8] sm:$0xff]
        %v1001 = vld [vmem:[#allocation5 + $0x15f0] sm:$0xff]
        %v1002 = vld [vmem:[#allocation5 + $0x15f8] sm:$0xff]
        %v1003 = vld [vmem:[#allocation5 + $0x1600] sm:$0xff]
        %v1004 = vld [vmem:[#allocation5 + $0x1608] sm:$0xff]
        %v1005 = vld [vmem:[#allocation5 + $0x1610] sm:$0xff]
        %v1006 = vld [vmem:[#allocation5 + $0x1618] sm:$0xff]
        %v1007 = vld [vmem:[#allocation5 + $0x1620] sm:$0xff]
        %v1008 = vld [vmem:[#allocation5 + $0x1628] sm:$0xff]
        %v1009 = vld [vmem:[#allocation5 + $0x1630] sm:$0xff]
        %v1010 = vld [vmem:[#allocation5 + $0x1638] sm:$0xff]
        %v1011 = vld [vmem:[#allocation5 + $0x1640] sm:$0xff]
        %v1012 = vld [vmem:[#allocation5 + $0x1648] sm:$0xff]
        %v1013 = vld [vmem:[#allocation5 + $0x1650] sm:$0xff]
        %v1014 = vld [vmem:[#allocation5 + $0x1658] sm:$0xff]
        %v1015 = vld [vmem:[#allocation5 + $0x1660] sm:$0xff]
        %v1016 = vld [vmem:[#allocation5 + $0x1668] sm:$0xff]
        %v1017 = vld [vmem:[#allocation5 + $0x1670] sm:$0xff]
        %v1018 = vld [vmem:[#allocation5 + $0x1678] sm:$0xff]
        %v1019 = vld [vmem:[#allocation5 + $0x1680] sm:$0xff]
        %v1020 = vld [vmem:[#allocation5 + $0x1688] sm:$0xff]
        %v1021 = vld [vmem:[#allocation5 + $0x1690] sm:$0xff]
        %v1022 = vld [vmem:[#allocation5 + $0x1698] sm:$0xff]
        %v1023 = vld [vmem:[#allocation5 + $0x16a0] sm:$0xff]
        %v1024 = vld [vmem:[#allocation5 + $0x16a8] sm:$0xff]
        %v1025 = vld [vmem:[#allocation5 + $0x16b0] sm:$0xff]
        %v1026 = vld [vmem:[#allocation5 + $0x16b8] sm:$0xff]
        %v1027 = vld [vmem:[#allocation5 + $0x16c0] sm:$0xff]
        %v1028 = vld [vmem:[#allocation5 + $0x16c8] sm:$0xff]
        %v1029 = vld [vmem:[#allocation5 + $0x16d0] sm:$0xff]
        %v1030 = vld [vmem:[#allocation5 + $0x16d8] sm:$0xff]
        %v1031 = vld [vmem:[#allocation5 + $0x16e0] sm:$0xff]
        %v1032 = vld [vmem:[#allocation5 + $0x16e8] sm:$0xff]
        %v1033 = vld [vmem:[#allocation5 + $0x16f0] sm:$0xff]
        %v1034 = vld [vmem:[#allocation5 + $0x16f8] sm:$0xff]
        %v1035 = vld [vmem:[#allocation5 + $0x1700] sm:$0xff]
        %v1036 = vld [vmem:[#allocation5 + $0x1708] sm:$0xff]
        %v1037 = vld [vmem:[#allocation5 + $0x1710] sm:$0xff]
        %v1038 = vld [vmem:[#allocation5 + $0x1718] sm:$0xff]
        %v1039 = vld [vmem:[#allocation5 + $0x1720] sm:$0xff]
        %v1040 = vld [vmem:[#allocation5 + $0x1728] sm:$0xff]
        %v1041 = vld [vmem:[#allocation5 + $0x1730] sm:$0xff]
        %v1042 = vld [vmem:[#allocation5 + $0x1738] sm:$0xff]
        %v1043 = vld [vmem:[#allocation5 + $0x1740] sm:$0xff]
        %v1044 = vld [vmem:[#allocation5 + $0x1748] sm:$0xff]
        %v1045 = vld [vmem:[#allocation5 + $0x1750] sm:$0xff]
        %v1046 = vld [vmem:[#allocation5 + $0x1758] sm:$0xff]
        %v1047 = vld [vmem:[#allocation5 + $0x1760] sm:$0xff]
        %v1048 = vld [vmem:[#allocation5 + $0x1768] sm:$0xff]
        %v1049 = vld [vmem:[#allocation5 + $0x1770] sm:$0xff]
        %v1050 = vld [vmem:[#allocation5 + $0x1778] sm:$0xff]
        %v1051 = vld [vmem:[#allocation5 + $0x1780] sm:$0xff]
        %v1052 = vld [vmem:[#allocation5 + $0x1788] sm:$0xff]
        %v1053 = vld [vmem:[#allocation5 + $0x1790] sm:$0xff]
        %v1054 = vld [vmem:[#allocation5 + $0x1798] sm:$0xff]
        %v1055 = vld [vmem:[#allocation5 + $0x17a0] sm:$0xff]
        %v1056 = vld [vmem:[#allocation5 + $0x17a8] sm:$0xff]
        %v1057 = vld [vmem:[#allocation5 + $0x17b0] sm:$0xff]
        %v1058 = vld [vmem:[#allocation5 + $0x17b8] sm:$0xff]
        %v1059 = vld [vmem:[#allocation5 + $0x17c0] sm:$0xff]
        %v1060 = vld [vmem:[#allocation5 + $0x17c8] sm:$0xff]
        %v1061 = vld [vmem:[#allocation5 + $0x17d0] sm:$0xff]
        %v1062 = vld [vmem:[#allocation5 + $0x17d8] sm:$0xff]
        %v1063 = vld [vmem:[#allocation5 + $0x17e0] sm:$0xff]
        %v1064 = vld [vmem:[#allocation5 + $0x17e8] sm:$0xff]
        %v1065 = vld [vmem:[#allocation5 + $0x17f0] sm:$0xff]
        %v1066 = vld [vmem:[#allocation5 + $0x17f8] sm:$0xff]
        %v1067 = vld [vmem:[#allocation7] sm:$0xff]
        %v1068 = vld [vmem:[#allocation7 + $0x8] sm:$0xf]
        %v1071 = vlaneseq
        %v1072 = vshrl.u32 %v1071, 7
        %v1073 = vsub.s32 0, %v1072
        %v1074 = vrot.slane %v1067, %v1073
        %v1075 = vlaneseq
        %v1076 = vshrl.u32 %v1075, 7
        %v1077 = vsub.s32 1, %v1076
        %v1078 = vrot.slane %v1067, %v1077
        %v1079 = vlaneseq
        %v1080 = vshrl.u32 %v1079, 7
        %v1081 = vsub.s32 2, %v1080
        %v1082 = vrot.slane %v1067, %v1081
        %v1083 = vlaneseq
        %v1084 = vshrl.u32 %v1083, 7
        %v1085 = vsub.s32 3, %v1084
        %v1086 = vrot.slane %v1067, %v1085
        %v1087 = vlaneseq
        %v1088 = vshrl.u32 %v1087, 7
        %v1089 = vsub.s32 4, %v1088
        %v1090 = vrot.slane %v1067, %v1089
        %v1091 = vlaneseq
        %v1092 = vshrl.u32 %v1091, 7
        %v1093 = vsub.s32 5, %v1092
        %v1094 = vrot.slane %v1067, %v1093
        %v1095 = vlaneseq
        %v1096 = vshrl.u32 %v1095, 7
        %v1097 = vsub.s32 6, %v1096
        %v1098 = vrot.slane %v1067, %v1097
        %v1099 = vlaneseq
        %v1100 = vshrl.u32 %v1099, 7
        %v1101 = vsub.s32 7, %v1100
        %v1102 = vrot.slane %v1067, %v1101
        %v1103 = vlaneseq
        %v1104 = vshrl.u32 %v1103, 7
        %v1105 = vsub.s32 0, %v1104
        %v1106 = vrot.slane %v1068, %v1105
        %v1107 = vlaneseq
        %v1108 = vshrl.u32 %v1107, 7
        %v1109 = vsub.s32 1, %v1108
        %v1110 = vrot.slane %v1068, %v1109
        %v1111 = vlaneseq
        %v1112 = vshrl.u32 %v1111, 7
        %v1113 = vsub.s32 2, %v1112
        %v1114 = vrot.slane %v1068, %v1113
        %v1115 = vlaneseq
        %v1116 = vshrl.u32 %v1115, 7
        %v1117 = vsub.s32 3, %v1116
        %v1118 = vrot.slane %v1068, %v1117
        %1131 = vmatprep.subr.mxu0 %v480
        %1132 = vmatpush1.msra.mxu0 %v479
        %1133 = vmatprep.subr.mxu0 %v468
        %1134 = vmatpush1.msra.mxu0 %v467
        %1135 = vmatprep.subr.mxu0 %v456
        %1136 = vmatpush1.msra.mxu0 %v455
        %1137 = vmatprep.subr.mxu0 %v444
        %1138 = vmatpush1.msra.mxu0 %v443
        %1139 = vmatprep.subr.mxu0 %v432
        %1140 = vmatpush1.msra.mxu0 %v431
        %1141 = vmatprep.subr.mxu0 %v420
        %1142 = vmatpush1.msra.mxu0 %v419
        %1143 = vmatprep.subr.mxu0 %v408
        %1144 = vmatpush1.msra.mxu0 %v407
        %1145 = vmatprep.subr.mxu0 %v396
        %1146 = vmatpush1.msra.mxu0 %v395
        %1147 = vmatprep.subr.mxu0 %v384
        %1148 = vmatpush1.msra.mxu0 %v383
        %1149 = vmatprep.subr.mxu0 %v372
        %1150 = vmatpush1.msra.mxu0 %v371
        %1151 = vmatprep.subr.mxu0 %v360
        %1152 = vmatpush1.msra.mxu0 %v359
        %1153 = vmatprep.subr.mxu0 %v348
        %1154 = vmatpush1.msra.mxu0 %v347
        %1155 = vmatprep.subr.mxu0 %v336
        %1156 = vmatpush1.msra.mxu0 %v335
        %1157 = vmatprep.subr.mxu0 %v324
        %1158 = vmatpush1.msra.mxu0 %v323
        %1159 = vmatprep.subr.mxu0 %v312
        %1160 = vmatpush1.msra.mxu0 %v311
        %1161 = vmatprep.subr.mxu0 %v300
        %1162 = vmatpush1.msra.mxu0 %v299
        %1163 = vmatprep.subr.mxu0 %v672
        %1164 = vmatpush2.msra.mxu0 %v671
        %1165 = vmatprep.subr.mxu0 %v660
        %1166 = vmatpush2.msra.mxu0 %v659
        %1167 = vmatprep.subr.mxu0 %v648
        %1168 = vmatpush2.msra.mxu0 %v647
        %1169 = vmatprep.subr.mxu0 %v636
        %1170 = vmatpush2.msra.mxu0 %v635
        %1171 = vmatprep.subr.mxu0 %v624
        %1172 = vmatpush2.msra.mxu0 %v623
        %1173 = vmatprep.subr.mxu0 %v612
        %1174 = vmatpush2.msra.mxu0 %v611
        %1175 = vmatprep.subr.mxu0 %v600
        %1176 = vmatpush2.msra.mxu0 %v599
        %1177 = vmatprep.subr.mxu0 %v588
        %1178 = vmatpush2.msra.mxu0 %v587
        %1179 = vmatprep.subr.mxu0 %v576
        %1180 = vmatpush2.msra.mxu0 %v575
        %1181 = vmatprep.subr.mxu0 %v564
        %1182 = vmatpush2.msra.mxu0 %v563
        %1183 = vmatprep.subr.mxu0 %v552
        %1184 = vmatpush2.msra.mxu0 %v551
        %1185 = vmatprep.subr.mxu0 %v540
        %1186 = vmatpush2.msra.mxu0 %v539
        %1187 = vmatprep.subr.mxu0 %v528
        %1188 = vmatpush2.msra.mxu0 %v527
        %1189 = vmatprep.subr.mxu0 %v516
        %1190 = vmatpush2.msra.mxu0 %v515
        %1191 = vmatprep.subr.mxu0 %v504
        %1192 = vmatpush2.msra.mxu0 %v503
        %1193 = vmatprep.subr.mxu0 %v492
        %1194 = vmatpush2.msra.mxu0 %v491
        %1195 = vmatprep.mubr.f32.mxu0 %v296
        %1196 = vmatmul.mubr.f32.gmra.mxu0 %v295
        %v1197 = vpop.f32.mrf.mxu0
        %v1198 = vadd.f32 %v1074, %v1197
        %v1199 = vpop.f32.mrf.mxu0
        %v1200 = vadd.f32 %v1078, %v1199
        %1201 = vdwg.mxu0
        %1202 = vmatprep.subr.mxu0 %v864
        %1203 = vmatpush1.msra.mxu0 %v863
        %1204 = vmatprep.subr.mxu0 %v852
        %1205 = vmatpush1.msra.mxu0 %v851
        %1206 = vmatprep.subr.mxu0 %v840
        %1207 = vmatpush1.msra.mxu0 %v839
        %1208 = vmatprep.subr.mxu0 %v828
        %1209 = vmatpush1.msra.mxu0 %v827
        %1210 = vmatprep.subr.mxu0 %v816
        %1211 = vmatpush1.msra.mxu0 %v815
        %1212 = vmatprep.subr.mxu0 %v804
        %1213 = vmatpush1.msra.mxu0 %v803
        %1214 = vmatprep.subr.mxu0 %v792
        %1215 = vmatpush1.msra.mxu0 %v791
        %1216 = vmatprep.subr.mxu0 %v780
        %1217 = vmatpush1.msra.mxu0 %v779
        %1218 = vmatprep.subr.mxu0 %v768
        %1219 = vmatpush1.msra.mxu0 %v767
        %1220 = vmatprep.subr.mxu0 %v756
        %1221 = vmatpush1.msra.mxu0 %v755
        %1222 = vmatprep.subr.mxu0 %v744
        %1223 = vmatpush1.msra.mxu0 %v743
        %1224 = vmatprep.subr.mxu0 %v732
        %1225 = vmatpush1.msra.mxu0 %v731
        %1226 = vmatprep.subr.mxu0 %v720
        %1227 = vmatpush1.msra.mxu0 %v719
        %1228 = vmatprep.subr.mxu0 %v708
        %1229 = vmatpush1.msra.mxu0 %v707
        %1230 = vmatprep.subr.mxu0 %v696
        %1231 = vmatpush1.msra.mxu0 %v695
        %1232 = vmatprep.subr.mxu0 %v684
        %1233 = vmatpush1.msra.mxu0 %v683
        %1234 = vmatprep.subr.mxu0 %v1056
        %1235 = vmatpush2.msra.mxu0 %v1055
        %1236 = vmatprep.subr.mxu0 %v1044
        %1237 = vmatpush2.msra.mxu0 %v1043
        %1238 = vmatprep.subr.mxu0 %v1032
        %1239 = vmatpush2.msra.mxu0 %v1031
        %1240 = vmatprep.subr.mxu0 %v1020
        %1241 = vmatpush2.msra.mxu0 %v1019
        %1242 = vmatprep.subr.mxu0 %v1008
        %1243 = vmatpush2.msra.mxu0 %v1007
        %1244 = vmatprep.subr.mxu0 %v996
        %1245 = vmatpush2.msra.mxu0 %v995
        %1246 = vmatprep.subr.mxu0 %v984
        %1247 = vmatpush2.msra.mxu0 %v983
        %1248 = vmatprep.subr.mxu0 %v972
        %1249 = vmatpush2.msra.mxu0 %v971
        %1250 = vmatprep.subr.mxu0 %v960
        %1251 = vmatpush2.msra.mxu0 %v959
        %1252 = vmatprep.subr.mxu0 %v948
        %1253 = vmatpush2.msra.mxu0 %v947
        %1254 = vmatprep.subr.mxu0 %v936
        %1255 = vmatpush2.msra.mxu0 %v935
        %1256 = vmatprep.subr.mxu0 %v924
        %1257 = vmatpush2.msra.mxu0 %v923
        %1258 = vmatprep.subr.mxu0 %v912
        %1259 = vmatpush2.msra.mxu0 %v911
        %1260 = vmatprep.subr.mxu0 %v900
        %1261 = vmatpush2.msra.mxu0 %v899
        %1262 = vmatprep.subr.mxu0 %v888
        %1263 = vmatpush2.msra.mxu0 %v887
        %1264 = vmatprep.subr.mxu0 %v876
        %1265 = vmatpush2.msra.mxu0 %v875
        %1266 = vmatprep.mubr.f32.mxu0 %v298
        %1267 = vmatmul.mubr.f32.gmra.mxu0 %v297
        %v1268 = vpop.f32.mrf.mxu0
        %v1269 = vadd.f32 %v1198, %v1268
        %v1270 = vpop.f32.mrf.mxu0
        %v1271 = vadd.f32 %v1200, %v1270
        %1272 = vdwg.mxu0
        %1273 = vmatprep.subr.mxu0 %v482
        %1274 = vmatpush1.msra.mxu0 %v481
        %1275 = vmatprep.subr.mxu0 %v470
        %1276 = vmatpush1.msra.mxu0 %v469
        %1277 = vmatprep.subr.mxu0 %v458
        %1278 = vmatpush1.msra.mxu0 %v457
        %1279 = vmatprep.subr.mxu0 %v446
        %1280 = vmatpush1.msra.mxu0 %v445
        %1281 = vmatprep.subr.mxu0 %v434
        %1282 = vmatpush1.msra.mxu0 %v433
        %1283 = vmatprep.subr.mxu0 %v422
        %1284 = vmatpush1.msra.mxu0 %v421
        %1285 = vmatprep.subr.mxu0 %v410
        %1286 = vmatpush1.msra.mxu0 %v409
        %1287 = vmatprep.subr.mxu0 %v398
        %1288 = vmatpush1.msra.mxu0 %v397
        %1289 = vmatprep.subr.mxu0 %v386
        %1290 = vmatpush1.msra.mxu0 %v385
        %1291 = vmatprep.subr.mxu0 %v374
        %1292 = vmatpush1.msra.mxu0 %v373
        %1293 = vmatprep.subr.mxu0 %v362
        %1294 = vmatpush1.msra.mxu0 %v361
        %1295 = vmatprep.subr.mxu0 %v350
        %1296 = vmatpush1.msra.mxu0 %v349
        %1297 = vmatprep.subr.mxu0 %v338
        %1298 = vmatpush1.msra.mxu0 %v337
        %1299 = vmatprep.subr.mxu0 %v326
        %1300 = vmatpush1.msra.mxu0 %v325
        %1301 = vmatprep.subr.mxu0 %v314
        %1302 = vmatpush1.msra.mxu0 %v313
        %1303 = vmatprep.subr.mxu0 %v302
        %1304 = vmatpush1.msra.mxu0 %v301
        %1305 = vmatprep.subr.mxu0 %v674
        %1306 = vmatpush2.msra.mxu0 %v673
        %1307 = vmatprep.subr.mxu0 %v662
        %1308 = vmatpush2.msra.mxu0 %v661
        %1309 = vmatprep.subr.mxu0 %v650
        %1310 = vmatpush2.msra.mxu0 %v649
        %1311 = vmatprep.subr.mxu0 %v638
        %1312 = vmatpush2.msra.mxu0 %v637
        %1313 = vmatprep.subr.mxu0 %v626
        %1314 = vmatpush2.msra.mxu0 %v625
        %1315 = vmatprep.subr.mxu0 %v614
        %1316 = vmatpush2.msra.mxu0 %v613
        %1317 = vmatprep.subr.mxu0 %v602
        %1318 = vmatpush2.msra.mxu0 %v601
        %1319 = vmatprep.subr.mxu0 %v590
        %1320 = vmatpush2.msra.mxu0 %v589
        %1321 = vmatprep.subr.mxu0 %v578
        %1322 = vmatpush2.msra.mxu0 %v577
        %1323 = vmatprep.subr.mxu0 %v566
        %1324 = vmatpush2.msra.mxu0 %v565
        %1325 = vmatprep.subr.mxu0 %v554
        %1326 = vmatpush2.msra.mxu0 %v553
        %1327 = vmatprep.subr.mxu0 %v542
        %1328 = vmatpush2.msra.mxu0 %v541
        %1329 = vmatprep.subr.mxu0 %v530
        %1330 = vmatpush2.msra.mxu0 %v529
        %1331 = vmatprep.subr.mxu0 %v518
        %1332 = vmatpush2.msra.mxu0 %v517
        %1333 = vmatprep.subr.mxu0 %v506
        %1334 = vmatpush2.msra.mxu0 %v505
        %1335 = vmatprep.subr.mxu0 %v494
        %1336 = vmatpush2.msra.mxu0 %v493
        %1337 = vmatprep.mubr.f32.mxu0 %v296
        %1338 = vmatmul.mubr.f32.gmra.mxu0 %v295
        %v1339 = vpop.f32.mrf.mxu0
        %v1340 = vadd.f32 %v1082, %v1339
        %v1341 = vpop.f32.mrf.mxu0
        %v1342 = vadd.f32 %v1086, %v1341
        %1343 = vdwg.mxu0
        %1344 = vmatprep.subr.mxu0 %v866
        %1345 = vmatpush1.msra.mxu0 %v865
        %1346 = vmatprep.subr.mxu0 %v854
        %1347 = vmatpush1.msra.mxu0 %v853
        %1348 = vmatprep.subr.mxu0 %v842
        %1349 = vmatpush1.msra.mxu0 %v841
        %1350 = vmatprep.subr.mxu0 %v830
        %1351 = vmatpush1.msra.mxu0 %v829
        %1352 = vmatprep.subr.mxu0 %v818
        %1353 = vmatpush1.msra.mxu0 %v817
        %1354 = vmatprep.subr.mxu0 %v806
        %1355 = vmatpush1.msra.mxu0 %v805
        %1356 = vmatprep.subr.mxu0 %v794
        %1357 = vmatpush1.msra.mxu0 %v793
        %1358 = vmatprep.subr.mxu0 %v782
        %1359 = vmatpush1.msra.mxu0 %v781
        %1360 = vmatprep.subr.mxu0 %v770
        %1361 = vmatpush1.msra.mxu0 %v769
        %1362 = vmatprep.subr.mxu0 %v758
        %1363 = vmatpush1.msra.mxu0 %v757
        %1364 = vmatprep.subr.mxu0 %v746
        %1365 = vmatpush1.msra.mxu0 %v745
        %1366 = vmatprep.subr.mxu0 %v734
        %1367 = vmatpush1.msra.mxu0 %v733
        %1368 = vmatprep.subr.mxu0 %v722
        %1369 = vmatpush1.msra.mxu0 %v721
        %1370 = vmatprep.subr.mxu0 %v710
        %1371 = vmatpush1.msra.mxu0 %v709
        %1372 = vmatprep.subr.mxu0 %v698
        %1373 = vmatpush1.msra.mxu0 %v697
        %1374 = vmatprep.subr.mxu0 %v686
        %1375 = vmatpush1.msra.mxu0 %v685
        %1376 = vmatprep.subr.mxu0 %v1058
        %1377 = vmatpush2.msra.mxu0 %v1057
        %1378 = vmatprep.subr.mxu0 %v1046
        %1379 = vmatpush2.msra.mxu0 %v1045
        %1380 = vmatprep.subr.mxu0 %v1034
        %1381 = vmatpush2.msra.mxu0 %v1033
        %1382 = vmatprep.subr.mxu0 %v1022
        %1383 = vmatpush2.msra.mxu0 %v1021
        %1384 = vmatprep.subr.mxu0 %v1010
        %1385 = vmatpush2.msra.mxu0 %v1009
        %1386 = vmatprep.subr.mxu0 %v998
        %1387 = vmatpush2.msra.mxu0 %v997
        %1388 = vmatprep.subr.mxu0 %v986
        %1389 = vmatpush2.msra.mxu0 %v985
        %1390 = vmatprep.subr.mxu0 %v974
        %1391 = vmatpush2.msra.mxu0 %v973
        %1392 = vmatprep.subr.mxu0 %v962
        %1393 = vmatpush2.msra.mxu0 %v961
        %1394 = vmatprep.subr.mxu0 %v950
        %1395 = vmatpush2.msra.mxu0 %v949
        %1396 = vmatprep.subr.mxu0 %v938
        %1397 = vmatpush2.msra.mxu0 %v937
        %1398 = vmatprep.subr.mxu0 %v926
        %1399 = vmatpush2.msra.mxu0 %v925
        %1400 = vmatprep.subr.mxu0 %v914
        %1401 = vmatpush2.msra.mxu0 %v913
        %1402 = vmatprep.subr.mxu0 %v902
        %1403 = vmatpush2.msra.mxu0 %v901
        %1404 = vmatprep.subr.mxu0 %v890
        %1405 = vmatpush2.msra.mxu0 %v889
        %1406 = vmatprep.subr.mxu0 %v878
        %1407 = vmatpush2.msra.mxu0 %v877
        %1408 = vmatprep.mubr.f32.mxu0 %v298
        %1409 = vmatmul.mubr.f32.gmra.mxu0 %v297
        %v1410 = vpop.f32.mrf.mxu0
        %v1411 = vadd.f32 %v1340, %v1410
        %v1412 = vpop.f32.mrf.mxu0
        %v1413 = vadd.f32 %v1342, %v1412
        %1414 = vdwg.mxu0
        %1415 = vmatprep.subr.mxu0 %v484
        %1416 = vmatpush1.msra.mxu0 %v483
        %1417 = vmatprep.subr.mxu0 %v472
        %1418 = vmatpush1.msra.mxu0 %v471
        %1419 = vmatprep.subr.mxu0 %v460
        %1420 = vmatpush1.msra.mxu0 %v459
        %1421 = vmatprep.subr.mxu0 %v448
        %1422 = vmatpush1.msra.mxu0 %v447
        %1423 = vmatprep.subr.mxu0 %v436
        %1424 = vmatpush1.msra.mxu0 %v435
        %1425 = vmatprep.subr.mxu0 %v424
        %1426 = vmatpush1.msra.mxu0 %v423
        %1427 = vmatprep.subr.mxu0 %v412
        %1428 = vmatpush1.msra.mxu0 %v411
        %1429 = vmatprep.subr.mxu0 %v400
        %1430 = vmatpush1.msra.mxu0 %v399
        %1431 = vmatprep.subr.mxu0 %v388
        %1432 = vmatpush1.msra.mxu0 %v387
        %1433 = vmatprep.subr.mxu0 %v376
        %1434 = vmatpush1.msra.mxu0 %v375
        %1435 = vmatprep.subr.mxu0 %v364
        %1436 = vmatpush1.msra.mxu0 %v363
        %1437 = vmatprep.subr.mxu0 %v352
        %1438 = vmatpush1.msra.mxu0 %v351
        %1439 = vmatprep.subr.mxu0 %v340
        %1440 = vmatpush1.msra.mxu0 %v339
        %1441 = vmatprep.subr.mxu0 %v328
        %1442 = vmatpush1.msra.mxu0 %v327
        %1443 = vmatprep.subr.mxu0 %v316
        %1444 = vmatpush1.msra.mxu0 %v315
        %1445 = vmatprep.subr.mxu0 %v304
        %1446 = vmatpush1.msra.mxu0 %v303
        %1447 = vmatprep.subr.mxu0 %v676
        %1448 = vmatpush2.msra.mxu0 %v675
        %1449 = vmatprep.subr.mxu0 %v664
        %1450 = vmatpush2.msra.mxu0 %v663
        %1451 = vmatprep.subr.mxu0 %v652
        %1452 = vmatpush2.msra.mxu0 %v651
        %1453 = vmatprep.subr.mxu0 %v640
        %1454 = vmatpush2.msra.mxu0 %v639
        %1455 = vmatprep.subr.mxu0 %v628
        %1456 = vmatpush2.msra.mxu0 %v627
        %1457 = vmatprep.subr.mxu0 %v616
        %1458 = vmatpush2.msra.mxu0 %v615
        %1459 = vmatprep.subr.mxu0 %v604
        %1460 = vmatpush2.msra.mxu0 %v603
        %1461 = vmatprep.subr.mxu0 %v592
        %1462 = vmatpush2.msra.mxu0 %v591
        %1463 = vmatprep.subr.mxu0 %v580
        %1464 = vmatpush2.msra.mxu0 %v579
        %1465 = vmatprep.subr.mxu0 %v568
        %1466 = vmatpush2.msra.mxu0 %v567
        %1467 = vmatprep.subr.mxu0 %v556
        %1468 = vmatpush2.msra.mxu0 %v555
        %1469 = vmatprep.subr.mxu0 %v544
        %1470 = vmatpush2.msra.mxu0 %v543
        %1471 = vmatprep.subr.mxu0 %v532
        %1472 = vmatpush2.msra.mxu0 %v531
        %1473 = vmatprep.subr.mxu0 %v520
        %1474 = vmatpush2.msra.mxu0 %v519
        %1475 = vmatprep.subr.mxu0 %v508
        %1476 = vmatpush2.msra.mxu0 %v507
        %1477 = vmatprep.subr.mxu0 %v496
        %1478 = vmatpush2.msra.mxu0 %v495
        %1479 = vmatprep.mubr.f32.mxu0 %v296
        %1480 = vmatmul.mubr.f32.gmra.mxu0 %v295
        %v1481 = vpop.f32.mrf.mxu0
        %v1482 = vadd.f32 %v1090, %v1481
        %v1483 = vpop.f32.mrf.mxu0
        %v1484 = vadd.f32 %v1094, %v1483
        %1485 = vdwg.mxu0
        %1486 = vmatprep.subr.mxu0 %v868
        %1487 = vmatpush1.msra.mxu0 %v867
        %1488 = vmatprep.subr.mxu0 %v856
        %1489 = vmatpush1.msra.mxu0 %v855
        %1490 = vmatprep.subr.mxu0 %v844
        %1491 = vmatpush1.msra.mxu0 %v843
        %1492 = vmatprep.subr.mxu0 %v832
        %1493 = vmatpush1.msra.mxu0 %v831
        %1494 = vmatprep.subr.mxu0 %v820
        %1495 = vmatpush1.msra.mxu0 %v819
        %1496 = vmatprep.subr.mxu0 %v808
        %1497 = vmatpush1.msra.mxu0 %v807
        %1498 = vmatprep.subr.mxu0 %v796
        %1499 = vmatpush1.msra.mxu0 %v795
        %1500 = vmatprep.subr.mxu0 %v784
        %1501 = vmatpush1.msra.mxu0 %v783
        %1502 = vmatprep.subr.mxu0 %v772
        %1503 = vmatpush1.msra.mxu0 %v771
        %1504 = vmatprep.subr.mxu0 %v760
        %1505 = vmatpush1.msra.mxu0 %v759
        %1506 = vmatprep.subr.mxu0 %v748
        %1507 = vmatpush1.msra.mxu0 %v747
        %1508 = vmatprep.subr.mxu0 %v736
        %1509 = vmatpush1.msra.mxu0 %v735
        %1510 = vmatprep.subr.mxu0 %v724
        %1511 = vmatpush1.msra.mxu0 %v723
        %1512 = vmatprep.subr.mxu0 %v712
        %1513 = vmatpush1.msra.mxu0 %v711
        %1514 = vmatprep.subr.mxu0 %v700
        %1515 = vmatpush1.msra.mxu0 %v699
        %1516 = vmatprep.subr.mxu0 %v688
        %1517 = vmatpush1.msra.mxu0 %v687
        %1518 = vmatprep.subr.mxu0 %v1060
        %1519 = vmatpush2.msra.mxu0 %v1059
        %1520 = vmatprep.subr.mxu0 %v1048
        %1521 = vmatpush2.msra.mxu0 %v1047
        %1522 = vmatprep.subr.mxu0 %v1036
        %1523 = vmatpush2.msra.mxu0 %v1035
        %1524 = vmatprep.subr.mxu0 %v1024
        %1525 = vmatpush2.msra.mxu0 %v1023
        %1526 = vmatprep.subr.mxu0 %v1012
        %1527 = vmatpush2.msra.mxu0 %v1011
        %1528 = vmatprep.subr.mxu0 %v1000
        %1529 = vmatpush2.msra.mxu0 %v999
        %1530 = vmatprep.subr.mxu0 %v988
        %1531 = vmatpush2.msra.mxu0 %v987
        %1532 = vmatprep.subr.mxu0 %v976
        %1533 = vmatpush2.msra.mxu0 %v975
        %1534 = vmatprep.subr.mxu0 %v964
        %1535 = vmatpush2.msra.mxu0 %v963
        %1536 = vmatprep.subr.mxu0 %v952
        %1537 = vmatpush2.msra.mxu0 %v951
        %1538 = vmatprep.subr.mxu0 %v940
        %1539 = vmatpush2.msra.mxu0 %v939
        %1540 = vmatprep.subr.mxu0 %v928
        %1541 = vmatpush2.msra.mxu0 %v927
        %1542 = vmatprep.subr.mxu0 %v916
        %1543 = vmatpush2.msra.mxu0 %v915
        %1544 = vmatprep.subr.mxu0 %v904
        %1545 = vmatpush2.msra.mxu0 %v903
        %1546 = vmatprep.subr.mxu0 %v892
        %1547 = vmatpush2.msra.mxu0 %v891
        %1548 = vmatprep.subr.mxu0 %v880
        %1549 = vmatpush2.msra.mxu0 %v879
        %1550 = vmatprep.mubr.f32.mxu0 %v298
        %1551 = vmatmul.mubr.f32.gmra.mxu0 %v297
        %v1552 = vpop.f32.mrf.mxu0
        %v1553 = vadd.f32 %v1482, %v1552
        %v1554 = vpop.f32.mrf.mxu0
        %v1555 = vadd.f32 %v1484, %v1554
        %1556 = vdwg.mxu0
        %1557 = vmatprep.subr.mxu0 %v486
        %1558 = vmatpush1.msra.mxu0 %v485
        %1559 = vmatprep.subr.mxu0 %v474
        %1560 = vmatpush1.msra.mxu0 %v473
        %1561 = vmatprep.subr.mxu0 %v462
        %1562 = vmatpush1.msra.mxu0 %v461
        %1563 = vmatprep.subr.mxu0 %v450
        %1564 = vmatpush1.msra.mxu0 %v449
        %1565 = vmatprep.subr.mxu0 %v438
        %1566 = vmatpush1.msra.mxu0 %v437
        %1567 = vmatprep.subr.mxu0 %v426
        %1568 = vmatpush1.msra.mxu0 %v425
        %1569 = vmatprep.subr.mxu0 %v414
        %1570 = vmatpush1.msra.mxu0 %v413
        %1571 = vmatprep.subr.mxu0 %v402
        %1572 = vmatpush1.msra.mxu0 %v401
        %1573 = vmatprep.subr.mxu0 %v390
        %1574 = vmatpush1.msra.mxu0 %v389
        %1575 = vmatprep.subr.mxu0 %v378
        %1576 = vmatpush1.msra.mxu0 %v377
        %1577 = vmatprep.subr.mxu0 %v366
        %1578 = vmatpush1.msra.mxu0 %v365
        %1579 = vmatprep.subr.mxu0 %v354
        %1580 = vmatpush1.msra.mxu0 %v353
        %1581 = vmatprep.subr.mxu0 %v342
        %1582 = vmatpush1.msra.mxu0 %v341
        %1583 = vmatprep.subr.mxu0 %v330
        %1584 = vmatpush1.msra.mxu0 %v329
        %1585 = vmatprep.subr.mxu0 %v318
        %1586 = vmatpush1.msra.mxu0 %v317
        %1587 = vmatprep.subr.mxu0 %v306
        %1588 = vmatpush1.msra.mxu0 %v305
        %1589 = vmatprep.subr.mxu0 %v678
        %1590 = vmatpush2.msra.mxu0 %v677
        %1591 = vmatprep.subr.mxu0 %v666
        %1592 = vmatpush2.msra.mxu0 %v665
        %1593 = vmatprep.subr.mxu0 %v654
        %1594 = vmatpush2.msra.mxu0 %v653
        %1595 = vmatprep.subr.mxu0 %v642
        %1596 = vmatpush2.msra.mxu0 %v641
        %1597 = vmatprep.subr.mxu0 %v630
        %1598 = vmatpush2.msra.mxu0 %v629
        %1599 = vmatprep.subr.mxu0 %v618
        %1600 = vmatpush2.msra.mxu0 %v617
        %1601 = vmatprep.subr.mxu0 %v606
        %1602 = vmatpush2.msra.mxu0 %v605
        %1603 = vmatprep.subr.mxu0 %v594
        %1604 = vmatpush2.msra.mxu0 %v593
        %1605 = vmatprep.subr.mxu0 %v582
        %1606 = vmatpush2.msra.mxu0 %v581
        %1607 = vmatprep.subr.mxu0 %v570
        %1608 = vmatpush2.msra.mxu0 %v569
        %1609 = vmatprep.subr.mxu0 %v558
        %1610 = vmatpush2.msra.mxu0 %v557
        %1611 = vmatprep.subr.mxu0 %v546
        %1612 = vmatpush2.msra.mxu0 %v545
        %1613 = vmatprep.subr.mxu0 %v534
        %1614 = vmatpush2.msra.mxu0 %v533
        %1615 = vmatprep.subr.mxu0 %v522
        %1616 = vmatpush2.msra.mxu0 %v521
        %1617 = vmatprep.subr.mxu0 %v510
        %1618 = vmatpush2.msra.mxu0 %v509
        %1619 = vmatprep.subr.mxu0 %v498
        %1620 = vmatpush2.msra.mxu0 %v497
        %1621 = vmatprep.mubr.f32.mxu0 %v296
        %1622 = vmatmul.mubr.f32.gmra.mxu0 %v295
        %v1623 = vpop.f32.mrf.mxu0
        %v1624 = vadd.f32 %v1098, %v1623
        %v1625 = vpop.f32.mrf.mxu0
        %v1626 = vadd.f32 %v1102, %v1625
        %1627 = vdwg.mxu0
        %1628 = vmatprep.subr.mxu0 %v870
        %1629 = vmatpush1.msra.mxu0 %v869
        %1630 = vmatprep.subr.mxu0 %v858
        %1631 = vmatpush1.msra.mxu0 %v857
        %1632 = vmatprep.subr.mxu0 %v846
        %1633 = vmatpush1.msra.mxu0 %v845
        %1634 = vmatprep.subr.mxu0 %v834
        %1635 = vmatpush1.msra.mxu0 %v833
        %1636 = vmatprep.subr.mxu0 %v822
        %1637 = vmatpush1.msra.mxu0 %v821
        %1638 = vmatprep.subr.mxu0 %v810
        %1639 = vmatpush1.msra.mxu0 %v809
        %1640 = vmatprep.subr.mxu0 %v798
        %1641 = vmatpush1.msra.mxu0 %v797
        %1642 = vmatprep.subr.mxu0 %v786
        %1643 = vmatpush1.msra.mxu0 %v785
        %1644 = vmatprep.subr.mxu0 %v774
        %1645 = vmatpush1.msra.mxu0 %v773
        %1646 = vmatprep.subr.mxu0 %v762
        %1647 = vmatpush1.msra.mxu0 %v761
        %1648 = vmatprep.subr.mxu0 %v750
        %1649 = vmatpush1.msra.mxu0 %v749
        %1650 = vmatprep.subr.mxu0 %v738
        %1651 = vmatpush1.msra.mxu0 %v737
        %1652 = vmatprep.subr.mxu0 %v726
        %1653 = vmatpush1.msra.mxu0 %v725
        %1654 = vmatprep.subr.mxu0 %v714
        %1655 = vmatpush1.msra.mxu0 %v713
        %1656 = vmatprep.subr.mxu0 %v702
        %1657 = vmatpush1.msra.mxu0 %v701
        %1658 = vmatprep.subr.mxu0 %v690
        %1659 = vmatpush1.msra.mxu0 %v689
        %1660 = vmatprep.subr.mxu0 %v1062
        %1661 = vmatpush2.msra.mxu0 %v1061
        %1662 = vmatprep.subr.mxu0 %v1050
        %1663 = vmatpush2.msra.mxu0 %v1049
        %1664 = vmatprep.subr.mxu0 %v1038
        %1665 = vmatpush2.msra.mxu0 %v1037
        %1666 = vmatprep.subr.mxu0 %v1026
        %1667 = vmatpush2.msra.mxu0 %v1025
        %1668 = vmatprep.subr.mxu0 %v1014
        %1669 = vmatpush2.msra.mxu0 %v1013
        %1670 = vmatprep.subr.mxu0 %v1002
        %1671 = vmatpush2.msra.mxu0 %v1001
        %1672 = vmatprep.subr.mxu0 %v990
        %1673 = vmatpush2.msra.mxu0 %v989
        %1674 = vmatprep.subr.mxu0 %v978
        %1675 = vmatpush2.msra.mxu0 %v977
        %1676 = vmatprep.subr.mxu0 %v966
        %1677 = vmatpush2.msra.mxu0 %v965
        %1678 = vmatprep.subr.mxu0 %v954
        %1679 = vmatpush2.msra.mxu0 %v953
        %1680 = vmatprep.subr.mxu0 %v942
        %1681 = vmatpush2.msra.mxu0 %v941
        %1682 = vmatprep.subr.mxu0 %v930
        %1683 = vmatpush2.msra.mxu0 %v929
        %1684 = vmatprep.subr.mxu0 %v918
        %1685 = vmatpush2.msra.mxu0 %v917
        %1686 = vmatprep.subr.mxu0 %v906
        %1687 = vmatpush2.msra.mxu0 %v905
        %1688 = vmatprep.subr.mxu0 %v894
        %1689 = vmatpush2.msra.mxu0 %v893
        %1690 = vmatprep.subr.mxu0 %v882
        %1691 = vmatpush2.msra.mxu0 %v881
        %1692 = vmatprep.mubr.f32.mxu0 %v298
        %1693 = vmatmul.mubr.f32.gmra.mxu0 %v297
        %v1694 = vpop.f32.mrf.mxu0
        %v1695 = vadd.f32 %v1624, %v1694
        %v1696 = vpop.f32.mrf.mxu0
        %v1697 = vadd.f32 %v1626, %v1696
        %1698 = vdwg.mxu0
        %1699 = vmatprep.subr.mxu0 %v488
        %1700 = vmatpush1.msra.mxu0 %v487
        %1701 = vmatprep.subr.mxu0 %v476
        %1702 = vmatpush1.msra.mxu0 %v475
        %1703 = vmatprep.subr.mxu0 %v464
        %1704 = vmatpush1.msra.mxu0 %v463
        %1705 = vmatprep.subr.mxu0 %v452
        %1706 = vmatpush1.msra.mxu0 %v451
        %1707 = vmatprep.subr.mxu0 %v440
        %1708 = vmatpush1.msra.mxu0 %v439
        %1709 = vmatprep.subr.mxu0 %v428
        %1710 = vmatpush1.msra.mxu0 %v427
        %1711 = vmatprep.subr.mxu0 %v416
        %1712 = vmatpush1.msra.mxu0 %v415
        %1713 = vmatprep.subr.mxu0 %v404
        %1714 = vmatpush1.msra.mxu0 %v403
        %1715 = vmatprep.subr.mxu0 %v392
        %1716 = vmatpush1.msra.mxu0 %v391
        %1717 = vmatprep.subr.mxu0 %v380
        %1718 = vmatpush1.msra.mxu0 %v379
        %1719 = vmatprep.subr.mxu0 %v368
        %1720 = vmatpush1.msra.mxu0 %v367
        %1721 = vmatprep.subr.mxu0 %v356
        %1722 = vmatpush1.msra.mxu0 %v355
        %1723 = vmatprep.subr.mxu0 %v344
        %1724 = vmatpush1.msra.mxu0 %v343
        %1725 = vmatprep.subr.mxu0 %v332
        %1726 = vmatpush1.msra.mxu0 %v331
        %1727 = vmatprep.subr.mxu0 %v320
        %1728 = vmatpush1.msra.mxu0 %v319
        %1729 = vmatprep.subr.mxu0 %v308
        %1730 = vmatpush1.msra.mxu0 %v307
        %1731 = vmatprep.subr.mxu0 %v680
        %1732 = vmatpush2.msra.mxu0 %v679
        %1733 = vmatprep.subr.mxu0 %v668
        %1734 = vmatpush2.msra.mxu0 %v667
        %1735 = vmatprep.subr.mxu0 %v656
        %1736 = vmatpush2.msra.mxu0 %v655
        %1737 = vmatprep.subr.mxu0 %v644
        %1738 = vmatpush2.msra.mxu0 %v643
        %1739 = vmatprep.subr.mxu0 %v632
        %1740 = vmatpush2.msra.mxu0 %v631
        %1741 = vmatprep.subr.mxu0 %v620
        %1742 = vmatpush2.msra.mxu0 %v619
        %1743 = vmatprep.subr.mxu0 %v608
        %1744 = vmatpush2.msra.mxu0 %v607
        %1745 = vmatprep.subr.mxu0 %v596
        %1746 = vmatpush2.msra.mxu0 %v595
        %1747 = vmatprep.subr.mxu0 %v584
        %1748 = vmatpush2.msra.mxu0 %v583
        %1749 = vmatprep.subr.mxu0 %v572
        %1750 = vmatpush2.msra.mxu0 %v571
        %1751 = vmatprep.subr.mxu0 %v560
        %1752 = vmatpush2.msra.mxu0 %v559
        %1753 = vmatprep.subr.mxu0 %v548
        %1754 = vmatpush2.msra.mxu0 %v547
        %1755 = vmatprep.subr.mxu0 %v536
        %1756 = vmatpush2.msra.mxu0 %v535
        %1757 = vmatprep.subr.mxu0 %v524
        %1758 = vmatpush2.msra.mxu0 %v523
        %1759 = vmatprep.subr.mxu0 %v512
        %1760 = vmatpush2.msra.mxu0 %v511
        %1761 = vmatprep.subr.mxu0 %v500
        %1762 = vmatpush2.msra.mxu0 %v499
        %1763 = vmatprep.mubr.f32.mxu0 %v296
        %1764 = vmatmul.mubr.f32.gmra.mxu0 %v295
        %v1765 = vpop.f32.mrf.mxu0
        %v1766 = vadd.f32 %v1106, %v1765
        %v1767 = vpop.f32.mrf.mxu0
        %v1768 = vadd.f32 %v1110, %v1767
        %1769 = vdwg.mxu0
        %1770 = vmatprep.subr.mxu0 %v872
        %1771 = vmatpush1.msra.mxu0 %v871
        %1772 = vmatprep.subr.mxu0 %v860
        %1773 = vmatpush1.msra.mxu0 %v859
        %1774 = vmatprep.subr.mxu0 %v848
        %1775 = vmatpush1.msra.mxu0 %v847
        %1776 = vmatprep.subr.mxu0 %v836
        %1777 = vmatpush1.msra.mxu0 %v835
        %1778 = vmatprep.subr.mxu0 %v824
        %1779 = vmatpush1.msra.mxu0 %v823
        %1780 = vmatprep.subr.mxu0 %v812
        %1781 = vmatpush1.msra.mxu0 %v811
        %1782 = vmatprep.subr.mxu0 %v800
        %1783 = vmatpush1.msra.mxu0 %v799
        %1784 = vmatprep.subr.mxu0 %v788
        %1785 = vmatpush1.msra.mxu0 %v787
        %1786 = vmatprep.subr.mxu0 %v776
        %1787 = vmatpush1.msra.mxu0 %v775
        %1788 = vmatprep.subr.mxu0 %v764
        %1789 = vmatpush1.msra.mxu0 %v763
        %1790 = vmatprep.subr.mxu0 %v752
        %1791 = vmatpush1.msra.mxu0 %v751
        %1792 = vmatprep.subr.mxu0 %v740
        %1793 = vmatpush1.msra.mxu0 %v739
        %1794 = vmatprep.subr.mxu0 %v728
        %1795 = vmatpush1.msra.mxu0 %v727
        %1796 = vmatprep.subr.mxu0 %v716
        %1797 = vmatpush1.msra.mxu0 %v715
        %1798 = vmatprep.subr.mxu0 %v704
        %1799 = vmatpush1.msra.mxu0 %v703
        %1800 = vmatprep.subr.mxu0 %v692
        %1801 = vmatpush1.msra.mxu0 %v691
        %1802 = vmatprep.subr.mxu0 %v1064
        %1803 = vmatpush2.msra.mxu0 %v1063
        %1804 = vmatprep.subr.mxu0 %v1052
        %1805 = vmatpush2.msra.mxu0 %v1051
        %1806 = vmatprep.subr.mxu0 %v1040
        %1807 = vmatpush2.msra.mxu0 %v1039
        %1808 = vmatprep.subr.mxu0 %v1028
        %1809 = vmatpush2.msra.mxu0 %v1027
        %1810 = vmatprep.subr.mxu0 %v1016
        %1811 = vmatpush2.msra.mxu0 %v1015
        %1812 = vmatprep.subr.mxu0 %v1004
        %1813 = vmatpush2.msra.mxu0 %v1003
        %1814 = vmatprep.subr.mxu0 %v992
        %1815 = vmatpush2.msra.mxu0 %v991
        %1816 = vmatprep.subr.mxu0 %v980
        %1817 = vmatpush2.msra.mxu0 %v979
        %1818 = vmatprep.subr.mxu0 %v968
        %1819 = vmatpush2.msra.mxu0 %v967
        %1820 = vmatprep.subr.mxu0 %v956
        %1821 = vmatpush2.msra.mxu0 %v955
        %1822 = vmatprep.subr.mxu0 %v944
        %1823 = vmatpush2.msra.mxu0 %v943
        %1824 = vmatprep.subr.mxu0 %v932
        %1825 = vmatpush2.msra.mxu0 %v931
        %1826 = vmatprep.subr.mxu0 %v920
        %1827 = vmatpush2.msra.mxu0 %v919
        %1828 = vmatprep.subr.mxu0 %v908
        %1829 = vmatpush2.msra.mxu0 %v907
        %1830 = vmatprep.subr.mxu0 %v896
        %1831 = vmatpush2.msra.mxu0 %v895
        %1832 = vmatprep.subr.mxu0 %v884
        %1833 = vmatpush2.msra.mxu0 %v883
        %1834 = vmatprep.mubr.f32.mxu0 %v298
        %1835 = vmatmul.mubr.f32.gmra.mxu0 %v297
        %v1836 = vpop.f32.mrf.mxu0
        %v1837 = vadd.f32 %v1766, %v1836
        %v1838 = vpop.f32.mrf.mxu0
        %v1839 = vadd.f32 %v1768, %v1838
        %1840 = vdwg.mxu0
        %1841 = vmatprep.subr.mxu0 %v490
        %1842 = vmatpush1.msra.mxu0 %v489
        %1843 = vmatprep.subr.mxu0 %v478
        %1844 = vmatpush1.msra.mxu0 %v477
        %1845 = vmatprep.subr.mxu0 %v466
        %1846 = vmatpush1.msra.mxu0 %v465
        %1847 = vmatprep.subr.mxu0 %v454
        %1848 = vmatpush1.msra.mxu0 %v453
        %1849 = vmatprep.subr.mxu0 %v442
        %1850 = vmatpush1.msra.mxu0 %v441
        %1851 = vmatprep.subr.mxu0 %v430
        %1852 = vmatpush1.msra.mxu0 %v429
        %1853 = vmatprep.subr.mxu0 %v418
        %1854 = vmatpush1.msra.mxu0 %v417
        %1855 = vmatprep.subr.mxu0 %v406
        %1856 = vmatpush1.msra.mxu0 %v405
        %1857 = vmatprep.subr.mxu0 %v394
        %1858 = vmatpush1.msra.mxu0 %v393
        %1859 = vmatprep.subr.mxu0 %v382
        %1860 = vmatpush1.msra.mxu0 %v381
        %1861 = vmatprep.subr.mxu0 %v370
        %1862 = vmatpush1.msra.mxu0 %v369
        %1863 = vmatprep.subr.mxu0 %v358
        %1864 = vmatpush1.msra.mxu0 %v357
        %1865 = vmatprep.subr.mxu0 %v346
        %1866 = vmatpush1.msra.mxu0 %v345
        %1867 = vmatprep.subr.mxu0 %v334
        %1868 = vmatpush1.msra.mxu0 %v333
        %1869 = vmatprep.subr.mxu0 %v322
        %1870 = vmatpush1.msra.mxu0 %v321
        %1871 = vmatprep.subr.mxu0 %v310
        %1872 = vmatpush1.msra.mxu0 %v309
        %1873 = vmatprep.subr.mxu0 %v682
        %1874 = vmatpush2.msra.mxu0 %v681
        %1875 = vmatprep.subr.mxu0 %v670
        %1876 = vmatpush2.msra.mxu0 %v669
        %1877 = vmatprep.subr.mxu0 %v658
        %1878 = vmatpush2.msra.mxu0 %v657
        %1879 = vmatprep.subr.mxu0 %v646
        %1880 = vmatpush2.msra.mxu0 %v645
        %1881 = vmatprep.subr.mxu0 %v634
        %1882 = vmatpush2.msra.mxu0 %v633
        %1883 = vmatprep.subr.mxu0 %v622
        %1884 = vmatpush2.msra.mxu0 %v621
        %1885 = vmatprep.subr.mxu0 %v610
        %1886 = vmatpush2.msra.mxu0 %v609
        %1887 = vmatprep.subr.mxu0 %v598
        %1888 = vmatpush2.msra.mxu0 %v597
        %1889 = vmatprep.subr.mxu0 %v586
        %1890 = vmatpush2.msra.mxu0 %v585
        %1891 = vmatprep.subr.mxu0 %v574
        %1892 = vmatpush2.msra.mxu0 %v573
        %1893 = vmatprep.subr.mxu0 %v562
        %1894 = vmatpush2.msra.mxu0 %v561
        %1895 = vmatprep.subr.mxu0 %v550
        %1896 = vmatpush2.msra.mxu0 %v549
        %1897 = vmatprep.subr.mxu0 %v538
        %1898 = vmatpush2.msra.mxu0 %v537
        %1899 = vmatprep.subr.mxu0 %v526
        %1900 = vmatpush2.msra.mxu0 %v525
        %1901 = vmatprep.subr.mxu0 %v514
        %1902 = vmatpush2.msra.mxu0 %v513
        %1903 = vmatprep.subr.mxu0 %v502
        %1904 = vmatpush2.msra.mxu0 %v501
        %1905 = vmatprep.mubr.f32.mxu0 %v296
        %1906 = vmatmul.mubr.f32.gmra.mxu0 %v295
        %v1907 = vpop.f32.mrf.mxu0
        %v1908 = vadd.f32 %v1114, %v1907
        %v1909 = vpop.f32.mrf.mxu0
        %v1910 = vadd.f32 %v1118, %v1909
        %1911 = vdwg.mxu0
        %1912 = vmatprep.subr.mxu0 %v874
        %1913 = vmatpush1.msra.mxu0 %v873
        %1914 = vmatprep.subr.mxu0 %v862
        %1915 = vmatpush1.msra.mxu0 %v861
        %1916 = vmatprep.subr.mxu0 %v850
        %1917 = vmatpush1.msra.mxu0 %v849
        %1918 = vmatprep.subr.mxu0 %v838
        %1919 = vmatpush1.msra.mxu0 %v837
        %1920 = vmatprep.subr.mxu0 %v826
        %1921 = vmatpush1.msra.mxu0 %v825
        %1922 = vmatprep.subr.mxu0 %v814
        %1923 = vmatpush1.msra.mxu0 %v813
        %1924 = vmatprep.subr.mxu0 %v802
        %1925 = vmatpush1.msra.mxu0 %v801
        %1926 = vmatprep.subr.mxu0 %v790
        %1927 = vmatpush1.msra.mxu0 %v789
        %1928 = vmatprep.subr.mxu0 %v778
        %1929 = vmatpush1.msra.mxu0 %v777
        %1930 = vmatprep.subr.mxu0 %v766
        %1931 = vmatpush1.msra.mxu0 %v765
        %1932 = vmatprep.subr.mxu0 %v754
        %1933 = vmatpush1.msra.mxu0 %v753
        %1934 = vmatprep.subr.mxu0 %v742
        %1935 = vmatpush1.msra.mxu0 %v741
        %1936 = vmatprep.subr.mxu0 %v730
        %1937 = vmatpush1.msra.mxu0 %v729
        %1938 = vmatprep.subr.mxu0 %v718
        %1939 = vmatpush1.msra.mxu0 %v717
        %1940 = vmatprep.subr.mxu0 %v706
        %1941 = vmatpush1.msra.mxu0 %v705
        %1942 = vmatprep.subr.mxu0 %v694
        %1943 = vmatpush1.msra.mxu0 %v693
        %1944 = vmatprep.subr.mxu0 %v1066
        %1945 = vmatpush2.msra.mxu0 %v1065
        %1946 = vmatprep.subr.mxu0 %v1054
        %1947 = vmatpush2.msra.mxu0 %v1053
        %1948 = vmatprep.subr.mxu0 %v1042
        %1949 = vmatpush2.msra.mxu0 %v1041
        %1950 = vmatprep.subr.mxu0 %v1030
        %1951 = vmatpush2.msra.mxu0 %v1029
        %1952 = vmatprep.subr.mxu0 %v1018
        %1953 = vmatpush2.msra.mxu0 %v1017
        %1954 = vmatprep.subr.mxu0 %v1006
        %1955 = vmatpush2.msra.mxu0 %v1005
        %1956 = vmatprep.subr.mxu0 %v994
        %1957 = vmatpush2.msra.mxu0 %v993
        %1958 = vmatprep.subr.mxu0 %v982
        %1959 = vmatpush2.msra.mxu0 %v981
        %1960 = vmatprep.subr.mxu0 %v970
        %1961 = vmatpush2.msra.mxu0 %v969
        %1962 = vmatprep.subr.mxu0 %v958
        %1963 = vmatpush2.msra.mxu0 %v957
        %1964 = vmatprep.subr.mxu0 %v946
        %1965 = vmatpush2.msra.mxu0 %v945
        %1966 = vmatprep.subr.mxu0 %v934
        %1967 = vmatpush2.msra.mxu0 %v933
        %1968 = vmatprep.subr.mxu0 %v922
        %1969 = vmatpush2.msra.mxu0 %v921
        %1970 = vmatprep.subr.mxu0 %v910
        %1971 = vmatpush2.msra.mxu0 %v909
        %1972 = vmatprep.subr.mxu0 %v898
        %1973 = vmatpush2.msra.mxu0 %v897
        %1974 = vmatprep.subr.mxu0 %v886
        %1975 = vmatpush2.msra.mxu0 %v885
        %1976 = vmatprep.mubr.f32.mxu0 %v298
        %1977 = vmatmul.mubr.f32.gmra.mxu0 %v297
        %v1978 = vpop.f32.mrf.mxu0
        %v1979 = vadd.f32 %v1908, %v1978
        %v1980 = vpop.f32.mrf.mxu0
        %v1981 = vadd.f32 %v1910, %v1980
        %1982 = vdwg.mxu0
        %v1983 = vlaneseq
        %v1984 = vshrl.u32 %v1983, 7
        %v1985 = vlaneseq
        %v1986 = vand.u32 %v1985, 127
        %vm1987 = vcmp.ge.s32.totalorder %v1984, %v1986
        %v1988 = vld [vmem:[#allocation10] sm:$0xf]
        %v1990 = vlaneseq
        %v1991 = vshrl.u32 %v1990, 7
        %v1992 = vsub.s32 0, %v1991
        %v1993 = vrot.slane %v1988, %v1992
        %v1994 = vlaneseq
        %v1995 = vshrl.u32 %v1994, 7
        %v1996 = vsub.s32 1, %v1995
        %v1997 = vrot.slane %v1988, %v1996
        %v1998 = vlaneseq
        %v1999 = vshrl.u32 %v1998, 7
        %v2000 = vsub.s32 2, %v1999
        %v2001 = vrot.slane %v1988, %v2000
        %v2002 = vlaneseq
        %v2003 = vshrl.u32 %v2002, 7
        %v2004 = vsub.s32 3, %v2003
        %v2005 = vrot.slane %v1988, %v2004
        %vm2010 = vcmask 523264
        %v2012 = vsel %vm2010, %v1269, 0
        %v2015 = vsel %vm2010, %v1553, 0
        %2017 = vmatprep.subr.mxu0 0.0
        %2018 = vmatpush1.xpose.msra.mxu0 0.0
        %2019 = vmatprep.subr.mxu0 0.0
        %2020 = vmatpush1.xpose.msra.mxu0 0.0
        %2021 = vmatprep.subr.mxu0 0.0
        %2022 = vmatpush1.xpose.msra.mxu0 0.0
        %2023 = vmatprep.subr.mxu0 0.0
        %2024 = vmatpush1.xpose.msra.mxu0 0.0
        %2025 = vmatprep.subr.mxu0 0.0
        %2026 = vmatpush1.xpose.msra.mxu0 0.0
        %2027 = vmatprep.subr.mxu0 0.0
        %2028 = vmatpush1.xpose.msra.mxu0 0.0
        %2029 = vmatprep.subr.mxu0 0.0
        %2030 = vmatpush1.xpose.msra.mxu0 0.0
        %2031 = vmatprep.subr.mxu0 0.0
        %2032 = vmatpush1.xpose.msra.mxu0 0.0
        %2033 = vmatprep.subr.mxu0 0.0
        %2034 = vmatpush1.xpose.msra.mxu0 0.0
        %2035 = vmatprep.subr.mxu0 0.0
        %2036 = vmatpush1.xpose.msra.mxu0 0.0
        %2037 = vmatprep.subr.mxu0 0.0
        %2038 = vmatpush1.xpose.msra.mxu0 0.0
        %2039 = vmatprep.subr.mxu0 0.0
        %2040 = vmatpush1.xpose.msra.mxu0 0.0
        %2041 = vmatprep.subr.mxu0 0.0
        %2042 = vmatpush1.xpose.msra.mxu0 0.0
        %2043 = vmatprep.subr.mxu0 0.0
        %2044 = vmatpush1.xpose.msra.mxu0 0.0
        %2045 = vmatprep.subr.mxu0 0.0
        %2046 = vmatpush1.xpose.msra.mxu0 0.0
        %2047 = vmatprep.subr.mxu0 0.0
        %2048 = vmatpush1.xpose.msra.mxu0 %v2015
        %2049 = vmatprep.subr.mxu0 0.0
        %2050 = vmatpush2.xpose.msra.mxu0 0.0
        %2051 = vmatprep.subr.mxu0 0.0
        %2052 = vmatpush2.xpose.msra.mxu0 0.0
        %2053 = vmatprep.subr.mxu0 0.0
        %2054 = vmatpush2.xpose.msra.mxu0 0.0
        %2055 = vmatprep.subr.mxu0 0.0
        %2056 = vmatpush2.xpose.msra.mxu0 0.0
        %2057 = vmatprep.subr.mxu0 0.0
        %2058 = vmatpush2.xpose.msra.mxu0 0.0
        %2059 = vmatprep.subr.mxu0 0.0
        %2060 = vmatpush2.xpose.msra.mxu0 0.0
        %2061 = vmatprep.subr.mxu0 0.0
        %2062 = vmatpush2.xpose.msra.mxu0 0.0
        %2063 = vmatprep.subr.mxu0 0.0
        %2064 = vmatpush2.xpose.msra.mxu0 0.0
        %2065 = vmatprep.subr.mxu0 0.0
        %2066 = vmatpush2.xpose.msra.mxu0 0.0
        %2067 = vmatprep.subr.mxu0 0.0
        %2068 = vmatpush2.xpose.msra.mxu0 0.0
        %2069 = vmatprep.subr.mxu0 0.0
        %2070 = vmatpush2.xpose.msra.mxu0 0.0
        %2071 = vmatprep.subr.mxu0 0.0
        %2072 = vmatpush2.xpose.msra.mxu0 0.0
        %2073 = vmatprep.subr.mxu0 0.0
        %2074 = vmatpush2.xpose.msra.mxu0 0.0
        %2075 = vmatprep.subr.mxu0 0.0
        %2076 = vmatpush2.xpose.msra.mxu0 0.0
        %2077 = vmatprep.subr.mxu0 0.0
        %2078 = vmatpush2.xpose.msra.mxu0 0.0
        %2079 = vmatprep.subr.mxu0 0.0
        %2080 = vmatpush2.xpose.msra.mxu0 0.0
        %2081 = vmatprep.mubr.f32.mxu0 0.0
        %2082 = vmatmul.mubr.f32.gmra.mxu0 %v2012
        %v2083 = vpop.f32.mrf.mxu0
        %v2084 = vadd.f32 0.0, %v2083
        %v2085 = vpop.f32.mrf.mxu0
        %2086 = vdwg.mxu0
        %v2087 = vmul.f32 %v2084, 0.125
        %v2088 = vsel %vm1987, %v2087, -1e+30
        %vm2089 = vcmask 64512
        %v2090 = vsel %vm2089, %v2088, -inf
        %2091 = vmax.xlane.f32.xlu0 %v2090
        %v2092 = vpop.xlane.xlu0 %2091
        %v2093 = vsub.f32 %v2088, %v2092
        %v2094 = vmul.f32 %v2093, 1.442695
        %v2095 = vpow.pop %v2094
        %v2096 = vsel %vm2089, %v2095, 0.0
        %2097 = vadd.xlane.f32.xlu0 %v2096
        %v2098 = vpop.xlane.xlu0 %2097
        %v2099 = vrcp.pop %v2098
        %v2100 = vmul.f32 %v2095, %v2099
        %v2102 = vsel %vm2089, %v2100, 0
        %2104 = vmatprep.subr.mxu0 0.0
        %2105 = vmatpush1.msra.mxu0 0.0
        %2106 = vmatprep.subr.mxu0 0.0
        %2107 = vmatpush1.msra.mxu0 0.0
        %2108 = vmatprep.subr.mxu0 0.0
        %2109 = vmatpush1.msra.mxu0 0.0
        %2110 = vmatprep.subr.mxu0 0.0
        %2111 = vmatpush1.msra.mxu0 0.0
        %2112 = vmatprep.subr.mxu0 0.0
        %2113 = vmatpush1.msra.mxu0 0.0
        %2114 = vmatprep.subr.mxu0 0.0
        %2115 = vmatpush1.msra.mxu0 0.0
        %2116 = vmatprep.subr.mxu0 0.0
        %2117 = vmatpush1.msra.mxu0 0.0
        %2118 = vmatprep.subr.mxu0 0.0
        %2119 = vmatpush1.msra.mxu0 0.0
        %2120 = vmatprep.subr.mxu0 0.0
        %2121 = vmatpush1.msra.mxu0 0.0
        %2122 = vmatprep.subr.mxu0 0.0
        %2123 = vmatpush1.msra.mxu0 0.0
        %2124 = vmatprep.subr.mxu0 0.0
        %2125 = vmatpush1.msra.mxu0 0.0
        %2126 = vmatprep.subr.mxu0 0.0
        %2127 = vmatpush1.msra.mxu0 0.0
        %2128 = vmatprep.subr.mxu0 0.0
        %2129 = vmatpush1.msra.mxu0 0.0
        %2130 = vmatprep.subr.mxu0 0.0
        %2131 = vmatpush1.msra.mxu0 0.0
        %2132 = vmatprep.subr.mxu0 0.0
        %2133 = vmatpush1.msra.mxu0 0.0
        %2134 = vmatprep.subr.mxu0 0.0
        %2135 = vmatpush1.msra.mxu0 %v1837
        %2136 = vmatprep.subr.mxu0 0.0
        %2137 = vmatpush2.msra.mxu0 0.0
        %2138 = vmatprep.subr.mxu0 0.0
        %2139 = vmatpush2.msra.mxu0 0.0
        %2140 = vmatprep.subr.mxu0 0.0
        %2141 = vmatpush2.msra.mxu0 0.0
        %2142 = vmatprep.subr.mxu0 0.0
        %2143 = vmatpush2.msra.mxu0 0.0
        %2144 = vmatprep.subr.mxu0 0.0
        %2145 = vmatpush2.msra.mxu0 0.0
        %2146 = vmatprep.subr.mxu0 0.0
        %2147 = vmatpush2.msra.mxu0 0.0
        %2148 = vmatprep.subr.mxu0 0.0
        %2149 = vmatpush2.msra.mxu0 0.0
        %2150 = vmatprep.subr.mxu0 0.0
        %2151 = vmatpush2.msra.mxu0 0.0
        %2152 = vmatprep.subr.mxu0 0.0
        %2153 = vmatpush2.msra.mxu0 0.0
        %2154 = vmatprep.subr.mxu0 0.0
        %2155 = vmatpush2.msra.mxu0 0.0
        %2156 = vmatprep.subr.mxu0 0.0
        %2157 = vmatpush2.msra.mxu0 0.0
        %2158 = vmatprep.subr.mxu0 0.0
        %2159 = vmatpush2.msra.mxu0 0.0
        %2160 = vmatprep.subr.mxu0 0.0
        %2161 = vmatpush2.msra.mxu0 0.0
        %2162 = vmatprep.subr.mxu0 0.0
        %2163 = vmatpush2.msra.mxu0 0.0
        %2164 = vmatprep.subr.mxu0 0.0
        %2165 = vmatpush2.msra.mxu0 0.0
        %2166 = vmatprep.subr.mxu0 0.0
        %2167 = vmatpush2.msra.mxu0 0.0
        %2168 = vmatprep.mubr.f32.mxu0 0.0
        %2169 = vmatmul.mubr.f32.gmra.mxu0 %v2102
        %v2170 = vpop.f32.mrf.mxu0
        %v2171 = vadd.f32 0.0, %v2170
        %v2172 = vpop.f32.mrf.mxu0
        %2173 = vdwg.mxu0
        %v2174 = vld [vmem:[#allocation8] sm:$0xff]
        %v2175 = vld [vmem:[#allocation8 + $0x8] sm:$0xff]
        %v2176 = vld [vmem:[#allocation8 + $0x10] sm:$0xff]
        %v2177 = vld [vmem:[#allocation8 + $0x18] sm:$0xff]
        %v2178 = vld [vmem:[#allocation8 + $0x20] sm:$0xff]
        %v2179 = vld [vmem:[#allocation8 + $0x28] sm:$0xff]
        %v2180 = vld [vmem:[#allocation8 + $0x30] sm:$0xff]
        %v2181 = vld [vmem:[#allocation8 + $0x38] sm:$0xff]
        %v2182 = vld [vmem:[#allocation8 + $0x40] sm:$0xff]
        %v2183 = vld [vmem:[#allocation8 + $0x48] sm:$0xff]
        %v2184 = vld [vmem:[#allocation8 + $0x50] sm:$0xff]
        %v2185 = vld [vmem:[#allocation8 + $0x58] sm:$0xff]
        %v2186 = vld [vmem:[#allocation8 + $0x60] sm:$0xff]
        %v2187 = vld [vmem:[#allocation8 + $0x68] sm:$0xff]
        %v2188 = vld [vmem:[#allocation8 + $0x70] sm:$0xff]
        %v2189 = vld [vmem:[#allocation8 + $0x78] sm:$0xff]
        %v2190 = vld [vmem:[#allocation8 + $0x80] sm:$0xff]
        %v2191 = vld [vmem:[#allocation8 + $0x88] sm:$0xff]
        %v2192 = vld [vmem:[#allocation8 + $0x90] sm:$0xff]
        %v2193 = vld [vmem:[#allocation8 + $0x98] sm:$0xff]
        %v2194 = vld [vmem:[#allocation8 + $0xa0] sm:$0xff]
        %v2195 = vld [vmem:[#allocation8 + $0xa8] sm:$0xff]
        %v2196 = vld [vmem:[#allocation8 + $0xb0] sm:$0xff]
        %v2197 = vld [vmem:[#allocation8 + $0xb8] sm:$0xff]
        %v2198 = vld [vmem:[#allocation8 + $0xc0] sm:$0xff]
        %v2199 = vld [vmem:[#allocation8 + $0xc8] sm:$0xff]
        %v2200 = vld [vmem:[#allocation8 + $0xd0] sm:$0xff]
        %v2201 = vld [vmem:[#allocation8 + $0xd8] sm:$0xff]
        %v2202 = vld [vmem:[#allocation8 + $0xe0] sm:$0xff]
        %v2203 = vld [vmem:[#allocation8 + $0xe8] sm:$0xff]
        %v2204 = vld [vmem:[#allocation8 + $0xf0] sm:$0xff]
        %v2205 = vld [vmem:[#allocation8 + $0xf8] sm:$0xff]
        %v2207 = vsel %vm2010, %v2171, 0
        %2209 = vmatprep.subr.mxu0 0.0
        %2210 = vmatpush1.msra.mxu0 0.0
        %2211 = vmatprep.subr.mxu0 0.0
        %2212 = vmatpush1.msra.mxu0 0.0
        %2213 = vmatprep.subr.mxu0 0.0
        %2214 = vmatpush1.msra.mxu0 0.0
        %2215 = vmatprep.subr.mxu0 0.0
        %2216 = vmatpush1.msra.mxu0 0.0
        %2217 = vmatprep.subr.mxu0 0.0
        %2218 = vmatpush1.msra.mxu0 0.0
        %2219 = vmatprep.subr.mxu0 0.0
        %2220 = vmatpush1.msra.mxu0 0.0
        %2221 = vmatprep.subr.mxu0 0.0
        %2222 = vmatpush1.msra.mxu0 0.0
        %2223 = vmatprep.subr.mxu0 0.0
        %2224 = vmatpush1.msra.mxu0 0.0
        %2225 = vmatprep.subr.mxu0 %v2203
        %2226 = vmatpush1.msra.mxu0 %v2202
        %2227 = vmatprep.subr.mxu0 %v2199
        %2228 = vmatpush1.msra.mxu0 %v2198
        %2229 = vmatprep.subr.mxu0 %v2195
        %2230 = vmatpush1.msra.mxu0 %v2194
        %2231 = vmatprep.subr.mxu0 %v2191
        %2232 = vmatpush1.msra.mxu0 %v2190
        %2233 = vmatprep.subr.mxu0 %v2187
        %2234 = vmatpush1.msra.mxu0 %v2186
        %2235 = vmatprep.subr.mxu0 %v2183
        %2236 = vmatpush1.msra.mxu0 %v2182
        %2237 = vmatprep.subr.mxu0 %v2179
        %2238 = vmatpush1.msra.mxu0 %v2178
        %2239 = vmatprep.subr.mxu0 %v2175
        %2240 = vmatpush1.msra.mxu0 %v2174
        %2241 = vmatprep.subr.mxu0 0.0
        %2242 = vmatpush2.msra.mxu0 0.0
        %2243 = vmatprep.subr.mxu0 0.0
        %2244 = vmatpush2.msra.mxu0 0.0
        %2245 = vmatprep.subr.mxu0 0.0
        %2246 = vmatpush2.msra.mxu0 0.0
        %2247 = vmatprep.subr.mxu0 0.0
        %2248 = vmatpush2.msra.mxu0 0.0
        %2249 = vmatprep.subr.mxu0 0.0
        %2250 = vmatpush2.msra.mxu0 0.0
        %2251 = vmatprep.subr.mxu0 0.0
        %2252 = vmatpush2.msra.mxu0 0.0
        %2253 = vmatprep.subr.mxu0 0.0
        %2254 = vmatpush2.msra.mxu0 0.0
        %2255 = vmatprep.subr.mxu0 0.0
        %2256 = vmatpush2.msra.mxu0 0.0
        %2257 = vmatprep.subr.mxu0 0.0
        %2258 = vmatpush2.msra.mxu0 0.0
        %2259 = vmatprep.subr.mxu0 0.0
        %2260 = vmatpush2.msra.mxu0 0.0
        %2261 = vmatprep.subr.mxu0 0.0
        %2262 = vmatpush2.msra.mxu0 0.0
        %2263 = vmatprep.subr.mxu0 0.0
        %2264 = vmatpush2.msra.mxu0 0.0
        %2265 = vmatprep.subr.mxu0 0.0
        %2266 = vmatpush2.msra.mxu0 0.0
        %2267 = vmatprep.subr.mxu0 0.0
        %2268 = vmatpush2.msra.mxu0 0.0
        %2269 = vmatprep.subr.mxu0 0.0
        %2270 = vmatpush2.msra.mxu0 0.0
        %2271 = vmatprep.subr.mxu0 0.0
        %2272 = vmatpush2.msra.mxu0 0.0
        %2273 = vmatprep.mubr.f32.mxu0 0.0
        %2274 = vmatmul.mubr.f32.gmra.mxu0 %v2207
        %v2275 = vpop.f32.mrf.mxu0
        %v2276 = vadd.f32 0.0, %v2275
        %v2277 = vpop.f32.mrf.mxu0
        %v2278 = vadd.f32 0.0, %v2277
        %2279 = vdwg.mxu0
        %2280 = vmatprep.subr.mxu0 0.0
        %2281 = vmatpush1.msra.mxu0 0.0
        %2282 = vmatprep.subr.mxu0 0.0
        %2283 = vmatpush1.msra.mxu0 0.0
        %2284 = vmatprep.subr.mxu0 0.0
        %2285 = vmatpush1.msra.mxu0 0.0
        %2286 = vmatprep.subr.mxu0 0.0
        %2287 = vmatpush1.msra.mxu0 0.0
        %2288 = vmatprep.subr.mxu0 0.0
        %2289 = vmatpush1.msra.mxu0 0.0
        %2290 = vmatprep.subr.mxu0 0.0
        %2291 = vmatpush1.msra.mxu0 0.0
        %2292 = vmatprep.subr.mxu0 0.0
        %2293 = vmatpush1.msra.mxu0 0.0
        %2294 = vmatprep.subr.mxu0 0.0
        %2295 = vmatpush1.msra.mxu0 0.0
        %2296 = vmatprep.subr.mxu0 %v2205
        %2297 = vmatpush1.msra.mxu0 %v2204
        %2298 = vmatprep.subr.mxu0 %v2201
        %2299 = vmatpush1.msra.mxu0 %v2200
        %2300 = vmatprep.subr.mxu0 %v2197
        %2301 = vmatpush1.msra.mxu0 %v2196
        %2302 = vmatprep.subr.mxu0 %v2193
        %2303 = vmatpush1.msra.mxu0 %v2192
        %2304 = vmatprep.subr.mxu0 %v2189
        %2305 = vmatpush1.msra.mxu0 %v2188
        %2306 = vmatprep.subr.mxu0 %v2185
        %2307 = vmatpush1.msra.mxu0 %v2184
        %2308 = vmatprep.subr.mxu0 %v2181
        %2309 = vmatpush1.msra.mxu0 %v2180
        %2310 = vmatprep.subr.mxu0 %v2177
        %2311 = vmatpush1.msra.mxu0 %v2176
        %2312 = vmatprep.subr.mxu0 0.0
        %2313 = vmatpush2.msra.mxu0 0.0
        %2314 = vmatprep.subr.mxu0 0.0
        %2315 = vmatpush2.msra.mxu0 0.0
        %2316 = vmatprep.subr.mxu0 0.0
        %2317 = vmatpush2.msra.mxu0 0.0
        %2318 = vmatprep.subr.mxu0 0.0
        %2319 = vmatpush2.msra.mxu0 0.0
        %2320 = vmatprep.subr.mxu0 0.0
        %2321 = vmatpush2.msra.mxu0 0.0
        %2322 = vmatprep.subr.mxu0 0.0
        %2323 = vmatpush2.msra.mxu0 0.0
        %2324 = vmatprep.subr.mxu0 0.0
        %2325 = vmatpush2.msra.mxu0 0.0
        %2326 = vmatprep.subr.mxu0 0.0
        %2327 = vmatpush2.msra.mxu0 0.0
        %2328 = vmatprep.subr.mxu0 0.0
        %2329 = vmatpush2.msra.mxu0 0.0
        %2330 = vmatprep.subr.mxu0 0.0
        %2331 = vmatpush2.msra.mxu0 0.0
        %2332 = vmatprep.subr.mxu0 0.0
        %2333 = vmatpush2.msra.mxu0 0.0
        %2334 = vmatprep.subr.mxu0 0.0
        %2335 = vmatpush2.msra.mxu0 0.0
        %2336 = vmatprep.subr.mxu0 0.0
        %2337 = vmatpush2.msra.mxu0 0.0
        %2338 = vmatprep.subr.mxu0 0.0
        %2339 = vmatpush2.msra.mxu0 0.0
        %2340 = vmatprep.subr.mxu0 0.0
        %2341 = vmatpush2.msra.mxu0 0.0
        %2342 = vmatprep.subr.mxu0 0.0
        %2343 = vmatpush2.msra.mxu0 0.0
        %2344 = vmatprep.mubr.f32.mxu0 0.0
        %2345 = vmatmul.mubr.f32.gmra.mxu0 %v2207
        %v2346 = vpop.f32.mrf.mxu0
        %v2347 = vadd.f32 0.0, %v2346
        %v2348 = vpop.f32.mrf.mxu0
        %v2349 = vadd.f32 0.0, %v2348
        %2350 = vdwg.mxu0
        %v2351 = vadd.f32 %v1993, %v2276
        %v2352 = vadd.f32 %v1997, %v2278
        %v2353 = vadd.f32 %v2001, %v2347
        %v2354 = vadd.f32 %v2005, %v2349
        %2355 = vrot.lane.b32.xlu0 %v1269, 64
        %v2356 = vpop.permute.xlu0 %2355
        %2357 = vrot.lane.b32.xlu0 %v1553, 64
        %v2358 = vpop.permute.xlu0 %2357
        %v2359 = vsel %vm2010, %v2356, 0
        %v2361 = vsel %vm2010, %v2358, 0
        %2363 = vmatprep.subr.mxu0 0.0
        %2364 = vmatpush1.xpose.msra.mxu0 0.0
        %2365 = vmatprep.subr.mxu0 0.0
        %2366 = vmatpush1.xpose.msra.mxu0 0.0
        %2367 = vmatprep.subr.mxu0 0.0
        %2368 = vmatpush1.xpose.msra.mxu0 0.0
        %2369 = vmatprep.subr.mxu0 0.0
        %2370 = vmatpush1.xpose.msra.mxu0 0.0
        %2371 = vmatprep.subr.mxu0 0.0
        %2372 = vmatpush1.xpose.msra.mxu0 0.0
        %2373 = vmatprep.subr.mxu0 0.0
        %2374 = vmatpush1.xpose.msra.mxu0 0.0
        %2375 = vmatprep.subr.mxu0 0.0
        %2376 = vmatpush1.xpose.msra.mxu0 0.0
        %2377 = vmatprep.subr.mxu0 0.0
        %2378 = vmatpush1.xpose.msra.mxu0 0.0
        %2379 = vmatprep.subr.mxu0 0.0
        %2380 = vmatpush1.xpose.msra.mxu0 0.0
        %2381 = vmatprep.subr.mxu0 0.0
        %2382 = vmatpush1.xpose.msra.mxu0 0.0
        %2383 = vmatprep.subr.mxu0 0.0
        %2384 = vmatpush1.xpose.msra.mxu0 0.0
        %2385 = vmatprep.subr.mxu0 0.0
        %2386 = vmatpush1.xpose.msra.mxu0 0.0
        %2387 = vmatprep.subr.mxu0 0.0
        %2388 = vmatpush1.xpose.msra.mxu0 0.0
        %2389 = vmatprep.subr.mxu0 0.0
        %2390 = vmatpush1.xpose.msra.mxu0 0.0
        %2391 = vmatprep.subr.mxu0 0.0
        %2392 = vmatpush1.xpose.msra.mxu0 0.0
        %2393 = vmatprep.subr.mxu0 0.0
        %2394 = vmatpush1.xpose.msra.mxu0 %v2361
        %2395 = vmatprep.subr.mxu0 0.0
        %2396 = vmatpush2.xpose.msra.mxu0 0.0
        %2397 = vmatprep.subr.mxu0 0.0
        %2398 = vmatpush2.xpose.msra.mxu0 0.0
        %2399 = vmatprep.subr.mxu0 0.0
        %2400 = vmatpush2.xpose.msra.mxu0 0.0
        %2401 = vmatprep.subr.mxu0 0.0
        %2402 = vmatpush2.xpose.msra.mxu0 0.0
        %2403 = vmatprep.subr.mxu0 0.0
        %2404 = vmatpush2.xpose.msra.mxu0 0.0
        %2405 = vmatprep.subr.mxu0 0.0
        %2406 = vmatpush2.xpose.msra.mxu0 0.0
        %2407 = vmatprep.subr.mxu0 0.0
        %2408 = vmatpush2.xpose.msra.mxu0 0.0
        %2409 = vmatprep.subr.mxu0 0.0
        %2410 = vmatpush2.xpose.msra.mxu0 0.0
        %2411 = vmatprep.subr.mxu0 0.0
        %2412 = vmatpush2.xpose.msra.mxu0 0.0
        %2413 = vmatprep.subr.mxu0 0.0
        %2414 = vmatpush2.xpose.msra.mxu0 0.0
        %2415 = vmatprep.subr.mxu0 0.0
        %2416 = vmatpush2.xpose.msra.mxu0 0.0
        %2417 = vmatprep.subr.mxu0 0.0
        %2418 = vmatpush2.xpose.msra.mxu0 0.0
        %2419 = vmatprep.subr.mxu0 0.0
        %2420 = vmatpush2.xpose.msra.mxu0 0.0
        %2421 = vmatprep.subr.mxu0 0.0
        %2422 = vmatpush2.xpose.msra.mxu0 0.0
        %2423 = vmatprep.subr.mxu0 0.0
        %2424 = vmatpush2.xpose.msra.mxu0 0.0
        %2425 = vmatprep.subr.mxu0 0.0
        %2426 = vmatpush2.xpose.msra.mxu0 0.0
        %2427 = vmatprep.mubr.f32.mxu0 0.0
        %2428 = vmatmul.mubr.f32.gmra.mxu0 %v2359
        %v2429 = vpop.f32.mrf.mxu0
        %v2430 = vadd.f32 0.0, %v2429
        %v2431 = vpop.f32.mrf.mxu0
        %2432 = vdwg.mxu0
        %v2433 = vmul.f32 %v2430, 0.125
        %v2434 = vsel %vm1987, %v2433, -1e+30
        %v2435 = vsel %vm2089, %v2434, -inf
        %2436 = vmax.xlane.f32.xlu0 %v2435
        %v2437 = vpop.xlane.xlu0 %2436
        %v2438 = vsub.f32 %v2434, %v2437
        %v2439 = vmul.f32 %v2438, 1.442695
        %v2440 = vpow.pop %v2439
        %v2441 = vsel %vm2089, %v2440, 0.0
        %2442 = vadd.xlane.f32.xlu0 %v2441
        %v2443 = vpop.xlane.xlu0 %2442
        %v2444 = vrcp.pop %v2443
        %v2445 = vmul.f32 %v2440, %v2444
        %2447 = vrot.lane.b32.xlu0 %v1837, 64
        %v2448 = vpop.permute.xlu0 %2447
        %v2451 = vsel %vm2089, %v2445, 0
        %2453 = vmatprep.subr.mxu0 0.0
        %2454 = vmatpush1.msra.mxu0 0.0
        %2455 = vmatprep.subr.mxu0 0.0
        %2456 = vmatpush1.msra.mxu0 0.0
        %2457 = vmatprep.subr.mxu0 0.0
        %2458 = vmatpush1.msra.mxu0 0.0
        %2459 = vmatprep.subr.mxu0 0.0
        %2460 = vmatpush1.msra.mxu0 0.0
        %2461 = vmatprep.subr.mxu0 0.0
        %2462 = vmatpush1.msra.mxu0 0.0
        %2463 = vmatprep.subr.mxu0 0.0
        %2464 = vmatpush1.msra.mxu0 0.0
        %2465 = vmatprep.subr.mxu0 0.0
        %2466 = vmatpush1.msra.mxu0 0.0
        %2467 = vmatprep.subr.mxu0 0.0
        %2468 = vmatpush1.msra.mxu0 0.0
        %2469 = vmatprep.subr.mxu0 0.0
        %2470 = vmatpush1.msra.mxu0 0.0
        %2471 = vmatprep.subr.mxu0 0.0
        %2472 = vmatpush1.msra.mxu0 0.0
        %2473 = vmatprep.subr.mxu0 0.0
        %2474 = vmatpush1.msra.mxu0 0.0
        %2475 = vmatprep.subr.mxu0 0.0
        %2476 = vmatpush1.msra.mxu0 0.0
        %2477 = vmatprep.subr.mxu0 0.0
        %2478 = vmatpush1.msra.mxu0 0.0
        %2479 = vmatprep.subr.mxu0 0.0
        %2480 = vmatpush1.msra.mxu0 0.0
        %2481 = vmatprep.subr.mxu0 0.0
        %2482 = vmatpush1.msra.mxu0 0.0
        %2483 = vmatprep.subr.mxu0 0.0
        %2484 = vmatpush1.msra.mxu0 %v2448
        %2485 = vmatprep.subr.mxu0 0.0
        %2486 = vmatpush2.msra.mxu0 0.0
        %2487 = vmatprep.subr.mxu0 0.0
        %2488 = vmatpush2.msra.mxu0 0.0
        %2489 = vmatprep.subr.mxu0 0.0
        %2490 = vmatpush2.msra.mxu0 0.0
        %2491 = vmatprep.subr.mxu0 0.0
        %2492 = vmatpush2.msra.mxu0 0.0
        %2493 = vmatprep.subr.mxu0 0.0
        %2494 = vmatpush2.msra.mxu0 0.0
        %2495 = vmatprep.subr.mxu0 0.0
        %2496 = vmatpush2.msra.mxu0 0.0
        %2497 = vmatprep.subr.mxu0 0.0
        %2498 = vmatpush2.msra.mxu0 0.0
        %2499 = vmatprep.subr.mxu0 0.0
        %2500 = vmatpush2.msra.mxu0 0.0
        %2501 = vmatprep.subr.mxu0 0.0
        %2502 = vmatpush2.msra.mxu0 0.0
        %2503 = vmatprep.subr.mxu0 0.0
        %2504 = vmatpush2.msra.mxu0 0.0
        %2505 = vmatprep.subr.mxu0 0.0
        %2506 = vmatpush2.msra.mxu0 0.0
        %2507 = vmatprep.subr.mxu0 0.0
        %2508 = vmatpush2.msra.mxu0 0.0
        %2509 = vmatprep.subr.mxu0 0.0
        %2510 = vmatpush2.msra.mxu0 0.0
        %2511 = vmatprep.subr.mxu0 0.0
        %2512 = vmatpush2.msra.mxu0 0.0
        %2513 = vmatprep.subr.mxu0 0.0
        %2514 = vmatpush2.msra.mxu0 0.0
        %2515 = vmatprep.subr.mxu0 0.0
        %2516 = vmatpush2.msra.mxu0 0.0
        %2517 = vmatprep.mubr.f32.mxu0 0.0
        %2518 = vmatmul.mubr.f32.gmra.mxu0 %v2451
        %v2519 = vpop.f32.mrf.mxu0
        %v2520 = vadd.f32 0.0, %v2519
        %v2521 = vpop.f32.mrf.mxu0
        %2522 = vdwg.mxu0
        %v2523 = vld [vmem:[#allocation8 + $0x100] sm:$0xff]
        %v2524 = vld [vmem:[#allocation8 + $0x108] sm:$0xff]
        %v2525 = vld [vmem:[#allocation8 + $0x110] sm:$0xff]
        %v2526 = vld [vmem:[#allocation8 + $0x118] sm:$0xff]
        %v2527 = vld [vmem:[#allocation8 + $0x120] sm:$0xff]
        %v2528 = vld [vmem:[#allocation8 + $0x128] sm:$0xff]
        %v2529 = vld [vmem:[#allocation8 + $0x130] sm:$0xff]
        %v2530 = vld [vmem:[#allocation8 + $0x138] sm:$0xff]
        %v2531 = vld [vmem:[#allocation8 + $0x140] sm:$0xff]
        %v2532 = vld [vmem:[#allocation8 + $0x148] sm:$0xff]
        %v2533 = vld [vmem:[#allocation8 + $0x150] sm:$0xff]
        %v2534 = vld [vmem:[#allocation8 + $0x158] sm:$0xff]
        %v2535 = vld [vmem:[#allocation8 + $0x160] sm:$0xff]
        %v2536 = vld [vmem:[#allocation8 + $0x168] sm:$0xff]
        %v2537 = vld [vmem:[#allocation8 + $0x170] sm:$0xff]
        %v2538 = vld [vmem:[#allocation8 + $0x178] sm:$0xff]
        %v2539 = vld [vmem:[#allocation8 + $0x180] sm:$0xff]
        %v2540 = vld [vmem:[#allocation8 + $0x188] sm:$0xff]
        %v2541 = vld [vmem:[#allocation8 + $0x190] sm:$0xff]
        %v2542 = vld [vmem:[#allocation8 + $0x198] sm:$0xff]
        %v2543 = vld [vmem:[#allocation8 + $0x1a0] sm:$0xff]
        %v2544 = vld [vmem:[#allocation8 + $0x1a8] sm:$0xff]
        %v2545 = vld [vmem:[#allocation8 + $0x1b0] sm:$0xff]
        %v2546 = vld [vmem:[#allocation8 + $0x1b8] sm:$0xff]
        %v2547 = vld [vmem:[#allocation8 + $0x1c0] sm:$0xff]
        %v2548 = vld [vmem:[#allocation8 + $0x1c8] sm:$0xff]
        %v2549 = vld [vmem:[#allocation8 + $0x1d0] sm:$0xff]
        %v2550 = vld [vmem:[#allocation8 + $0x1d8] sm:$0xff]
        %v2551 = vld [vmem:[#allocation8 + $0x1e0] sm:$0xff]
        %v2552 = vld [vmem:[#allocation8 + $0x1e8] sm:$0xff]
        %v2553 = vld [vmem:[#allocation8 + $0x1f0] sm:$0xff]
        %v2554 = vld [vmem:[#allocation8 + $0x1f8] sm:$0xff]
        %v2556 = vsel %vm2010, %v2520, 0
        %2558 = vmatprep.subr.mxu0 0.0
        %2559 = vmatpush1.msra.mxu0 0.0
        %2560 = vmatprep.subr.mxu0 0.0
        %2561 = vmatpush1.msra.mxu0 0.0
        %2562 = vmatprep.subr.mxu0 0.0
        %2563 = vmatpush1.msra.mxu0 0.0
        %2564 = vmatprep.subr.mxu0 0.0
        %2565 = vmatpush1.msra.mxu0 0.0
        %2566 = vmatprep.subr.mxu0 0.0
        %2567 = vmatpush1.msra.mxu0 0.0
        %2568 = vmatprep.subr.mxu0 0.0
        %2569 = vmatpush1.msra.mxu0 0.0
        %2570 = vmatprep.subr.mxu0 0.0
        %2571 = vmatpush1.msra.mxu0 0.0
        %2572 = vmatprep.subr.mxu0 0.0
        %2573 = vmatpush1.msra.mxu0 0.0
        %2574 = vmatprep.subr.mxu0 %v2552
        %2575 = vmatpush1.msra.mxu0 %v2551
        %2576 = vmatprep.subr.mxu0 %v2548
        %2577 = vmatpush1.msra.mxu0 %v2547
        %2578 = vmatprep.subr.mxu0 %v2544
        %2579 = vmatpush1.msra.mxu0 %v2543
        %2580 = vmatprep.subr.mxu0 %v2540
        %2581 = vmatpush1.msra.mxu0 %v2539
        %2582 = vmatprep.subr.mxu0 %v2536
        %2583 = vmatpush1.msra.mxu0 %v2535
        %2584 = vmatprep.subr.mxu0 %v2532
        %2585 = vmatpush1.msra.mxu0 %v2531
        %2586 = vmatprep.subr.mxu0 %v2528
        %2587 = vmatpush1.msra.mxu0 %v2527
        %2588 = vmatprep.subr.mxu0 %v2524
        %2589 = vmatpush1.msra.mxu0 %v2523
        %2590 = vmatprep.subr.mxu0 0.0
        %2591 = vmatpush2.msra.mxu0 0.0
        %2592 = vmatprep.subr.mxu0 0.0
        %2593 = vmatpush2.msra.mxu0 0.0
        %2594 = vmatprep.subr.mxu0 0.0
        %2595 = vmatpush2.msra.mxu0 0.0
        %2596 = vmatprep.subr.mxu0 0.0
        %2597 = vmatpush2.msra.mxu0 0.0
        %2598 = vmatprep.subr.mxu0 0.0
        %2599 = vmatpush2.msra.mxu0 0.0
        %2600 = vmatprep.subr.mxu0 0.0
        %2601 = vmatpush2.msra.mxu0 0.0
        %2602 = vmatprep.subr.mxu0 0.0
        %2603 = vmatpush2.msra.mxu0 0.0
        %2604 = vmatprep.subr.mxu0 0.0
        %2605 = vmatpush2.msra.mxu0 0.0
        %2606 = vmatprep.subr.mxu0 0.0
        %2607 = vmatpush2.msra.mxu0 0.0
        %2608 = vmatprep.subr.mxu0 0.0
        %2609 = vmatpush2.msra.mxu0 0.0
        %2610 = vmatprep.subr.mxu0 0.0
        %2611 = vmatpush2.msra.mxu0 0.0
        %2612 = vmatprep.subr.mxu0 0.0
        %2613 = vmatpush2.msra.mxu0 0.0
        %2614 = vmatprep.subr.mxu0 0.0
        %2615 = vmatpush2.msra.mxu0 0.0
        %2616 = vmatprep.subr.mxu0 0.0
        %2617 = vmatpush2.msra.mxu0 0.0
        %2618 = vmatprep.subr.mxu0 0.0
        %2619 = vmatpush2.msra.mxu0 0.0
        %2620 = vmatprep.subr.mxu0 0.0
        %2621 = vmatpush2.msra.mxu0 0.0
        %2622 = vmatprep.mubr.f32.mxu0 0.0
        %2623 = vmatmul.mubr.f32.gmra.mxu0 %v2556
        %v2624 = vpop.f32.mrf.mxu0
        %v2625 = vadd.f32 0.0, %v2624
        %v2626 = vpop.f32.mrf.mxu0
        %v2627 = vadd.f32 0.0, %v2626
        %2628 = vdwg.mxu0
        %2629 = vmatprep.subr.mxu0 0.0
        %2630 = vmatpush1.msra.mxu0 0.0
        %2631 = vmatprep.subr.mxu0 0.0
        %2632 = vmatpush1.msra.mxu0 0.0
        %2633 = vmatprep.subr.mxu0 0.0
        %2634 = vmatpush1.msra.mxu0 0.0
        %2635 = vmatprep.subr.mxu0 0.0
        %2636 = vmatpush1.msra.mxu0 0.0
        %2637 = vmatprep.subr.mxu0 0.0
        %2638 = vmatpush1.msra.mxu0 0.0
        %2639 = vmatprep.subr.mxu0 0.0
        %2640 = vmatpush1.msra.mxu0 0.0
        %2641 = vmatprep.subr.mxu0 0.0
        %2642 = vmatpush1.msra.mxu0 0.0
        %2643 = vmatprep.subr.mxu0 0.0
        %2644 = vmatpush1.msra.mxu0 0.0
        %2645 = vmatprep.subr.mxu0 %v2554
        %2646 = vmatpush1.msra.mxu0 %v2553
        %2647 = vmatprep.subr.mxu0 %v2550
        %2648 = vmatpush1.msra.mxu0 %v2549
        %2649 = vmatprep.subr.mxu0 %v2546
        %2650 = vmatpush1.msra.mxu0 %v2545
        %2651 = vmatprep.subr.mxu0 %v2542
        %2652 = vmatpush1.msra.mxu0 %v2541
        %2653 = vmatprep.subr.mxu0 %v2538
        %2654 = vmatpush1.msra.mxu0 %v2537
        %2655 = vmatprep.subr.mxu0 %v2534
        %2656 = vmatpush1.msra.mxu0 %v2533
        %2657 = vmatprep.subr.mxu0 %v2530
        %2658 = vmatpush1.msra.mxu0 %v2529
        %2659 = vmatprep.subr.mxu0 %v2526
        %2660 = vmatpush1.msra.mxu0 %v2525
        %2661 = vmatprep.subr.mxu0 0.0
        %2662 = vmatpush2.msra.mxu0 0.0
        %2663 = vmatprep.subr.mxu0 0.0
        %2664 = vmatpush2.msra.mxu0 0.0
        %2665 = vmatprep.subr.mxu0 0.0
        %2666 = vmatpush2.msra.mxu0 0.0
        %2667 = vmatprep.subr.mxu0 0.0
        %2668 = vmatpush2.msra.mxu0 0.0
        %2669 = vmatprep.subr.mxu0 0.0
        %2670 = vmatpush2.msra.mxu0 0.0
        %2671 = vmatprep.subr.mxu0 0.0
        %2672 = vmatpush2.msra.mxu0 0.0
        %2673 = vmatprep.subr.mxu0 0.0
        %2674 = vmatpush2.msra.mxu0 0.0
        %2675 = vmatprep.subr.mxu0 0.0
        %2676 = vmatpush2.msra.mxu0 0.0
        %2677 = vmatprep.subr.mxu0 0.0
        %2678 = vmatpush2.msra.mxu0 0.0
        %2679 = vmatprep.subr.mxu0 0.0
        %2680 = vmatpush2.msra.mxu0 0.0
        %2681 = vmatprep.subr.mxu0 0.0
        %2682 = vmatpush2.msra.mxu0 0.0
        %2683 = vmatprep.subr.mxu0 0.0
        %2684 = vmatpush2.msra.mxu0 0.0
        %2685 = vmatprep.subr.mxu0 0.0
        %2686 = vmatpush2.msra.mxu0 0.0
        %2687 = vmatprep.subr.mxu0 0.0
        %2688 = vmatpush2.msra.mxu0 0.0
        %2689 = vmatprep.subr.mxu0 0.0
        %2690 = vmatpush2.msra.mxu0 0.0
        %2691 = vmatprep.subr.mxu0 0.0
        %2692 = vmatpush2.msra.mxu0 0.0
        %2693 = vmatprep.mubr.f32.mxu0 0.0
        %2694 = vmatmul.mubr.f32.gmra.mxu0 %v2556
        %v2695 = vpop.f32.mrf.mxu0
        %v2696 = vadd.f32 0.0, %v2695
        %v2697 = vpop.f32.mrf.mxu0
        %v2698 = vadd.f32 0.0, %v2697
        %2699 = vdwg.mxu0
        %v2700 = vadd.f32 %v2351, %v2625
        %v2701 = vadd.f32 %v2352, %v2627
        %v2702 = vadd.f32 %v2353, %v2696
        %v2703 = vadd.f32 %v2354, %v2698
        %v2705 = vsel %vm2010, %v1271, 0
        %v2708 = vsel %vm2010, %v1555, 0
        %2710 = vmatprep.subr.mxu0 0.0
        %2711 = vmatpush1.xpose.msra.mxu0 0.0
        %2712 = vmatprep.subr.mxu0 0.0
        %2713 = vmatpush1.xpose.msra.mxu0 0.0
        %2714 = vmatprep.subr.mxu0 0.0
        %2715 = vmatpush1.xpose.msra.mxu0 0.0
        %2716 = vmatprep.subr.mxu0 0.0
        %2717 = vmatpush1.xpose.msra.mxu0 0.0
        %2718 = vmatprep.subr.mxu0 0.0
        %2719 = vmatpush1.xpose.msra.mxu0 0.0
        %2720 = vmatprep.subr.mxu0 0.0
        %2721 = vmatpush1.xpose.msra.mxu0 0.0
        %2722 = vmatprep.subr.mxu0 0.0
        %2723 = vmatpush1.xpose.msra.mxu0 0.0
        %2724 = vmatprep.subr.mxu0 0.0
        %2725 = vmatpush1.xpose.msra.mxu0 0.0
        %2726 = vmatprep.subr.mxu0 0.0
        %2727 = vmatpush1.xpose.msra.mxu0 0.0
        %2728 = vmatprep.subr.mxu0 0.0
        %2729 = vmatpush1.xpose.msra.mxu0 0.0
        %2730 = vmatprep.subr.mxu0 0.0
        %2731 = vmatpush1.xpose.msra.mxu0 0.0
        %2732 = vmatprep.subr.mxu0 0.0
        %2733 = vmatpush1.xpose.msra.mxu0 0.0
        %2734 = vmatprep.subr.mxu0 0.0
        %2735 = vmatpush1.xpose.msra.mxu0 0.0
        %2736 = vmatprep.subr.mxu0 0.0
        %2737 = vmatpush1.xpose.msra.mxu0 0.0
        %2738 = vmatprep.subr.mxu0 0.0
        %2739 = vmatpush1.xpose.msra.mxu0 0.0
        %2740 = vmatprep.subr.mxu0 0.0
        %2741 = vmatpush1.xpose.msra.mxu0 %v2708
        %2742 = vmatprep.subr.mxu0 0.0
        %2743 = vmatpush2.xpose.msra.mxu0 0.0
        %2744 = vmatprep.subr.mxu0 0.0
        %2745 = vmatpush2.xpose.msra.mxu0 0.0
        %2746 = vmatprep.subr.mxu0 0.0
        %2747 = vmatpush2.xpose.msra.mxu0 0.0
        %2748 = vmatprep.subr.mxu0 0.0
        %2749 = vmatpush2.xpose.msra.mxu0 0.0
        %2750 = vmatprep.subr.mxu0 0.0
        %2751 = vmatpush2.xpose.msra.mxu0 0.0
        %2752 = vmatprep.subr.mxu0 0.0
        %2753 = vmatpush2.xpose.msra.mxu0 0.0
        %2754 = vmatprep.subr.mxu0 0.0
        %2755 = vmatpush2.xpose.msra.mxu0 0.0
        %2756 = vmatprep.subr.mxu0 0.0
        %2757 = vmatpush2.xpose.msra.mxu0 0.0
        %2758 = vmatprep.subr.mxu0 0.0
        %2759 = vmatpush2.xpose.msra.mxu0 0.0
        %2760 = vmatprep.subr.mxu0 0.0
        %2761 = vmatpush2.xpose.msra.mxu0 0.0
        %2762 = vmatprep.subr.mxu0 0.0
        %2763 = vmatpush2.xpose.msra.mxu0 0.0
        %2764 = vmatprep.subr.mxu0 0.0
        %2765 = vmatpush2.xpose.msra.mxu0 0.0
        %2766 = vmatprep.subr.mxu0 0.0
        %2767 = vmatpush2.xpose.msra.mxu0 0.0
        %2768 = vmatprep.subr.mxu0 0.0
        %2769 = vmatpush2.xpose.msra.mxu0 0.0
        %2770 = vmatprep.subr.mxu0 0.0
        %2771 = vmatpush2.xpose.msra.mxu0 0.0
        %2772 = vmatprep.subr.mxu0 0.0
        %2773 = vmatpush2.xpose.msra.mxu0 0.0
        %2774 = vmatprep.mubr.f32.mxu0 0.0
        %2775 = vmatmul.mubr.f32.gmra.mxu0 %v2705
        %v2776 = vpop.f32.mrf.mxu0
        %v2777 = vadd.f32 0.0, %v2776
        %v2778 = vpop.f32.mrf.mxu0
        %2779 = vdwg.mxu0
        %v2780 = vmul.f32 %v2777, 0.125
        %v2781 = vsel %vm1987, %v2780, -1e+30
        %v2782 = vsel %vm2089, %v2781, -inf
        %2783 = vmax.xlane.f32.xlu0 %v2782
        %v2784 = vpop.xlane.xlu0 %2783
        %v2785 = vsub.f32 %v2781, %v2784
        %v2786 = vmul.f32 %v2785, 1.442695
        %v2787 = vpow.pop %v2786
        %v2788 = vsel %vm2089, %v2787, 0.0
        %2789 = vadd.xlane.f32.xlu0 %v2788
        %v2790 = vpop.xlane.xlu0 %2789
        %v2791 = vrcp.pop %v2790
        %v2792 = vmul.f32 %v2787, %v2791
        %v2794 = vsel %vm2089, %v2792, 0
        %2796 = vmatprep.subr.mxu0 0.0
        %2797 = vmatpush1.msra.mxu0 0.0
        %2798 = vmatprep.subr.mxu0 0.0
        %2799 = vmatpush1.msra.mxu0 0.0
        %2800 = vmatprep.subr.mxu0 0.0
        %2801 = vmatpush1.msra.mxu0 0.0
        %2802 = vmatprep.subr.mxu0 0.0
        %2803 = vmatpush1.msra.mxu0 0.0
        %2804 = vmatprep.subr.mxu0 0.0
        %2805 = vmatpush1.msra.mxu0 0.0
        %2806 = vmatprep.subr.mxu0 0.0
        %2807 = vmatpush1.msra.mxu0 0.0
        %2808 = vmatprep.subr.mxu0 0.0
        %2809 = vmatpush1.msra.mxu0 0.0
        %2810 = vmatprep.subr.mxu0 0.0
        %2811 = vmatpush1.msra.mxu0 0.0
        %2812 = vmatprep.subr.mxu0 0.0
        %2813 = vmatpush1.msra.mxu0 0.0
        %2814 = vmatprep.subr.mxu0 0.0
        %2815 = vmatpush1.msra.mxu0 0.0
        %2816 = vmatprep.subr.mxu0 0.0
        %2817 = vmatpush1.msra.mxu0 0.0
        %2818 = vmatprep.subr.mxu0 0.0
        %2819 = vmatpush1.msra.mxu0 0.0
        %2820 = vmatprep.subr.mxu0 0.0
        %2821 = vmatpush1.msra.mxu0 0.0
        %2822 = vmatprep.subr.mxu0 0.0
        %2823 = vmatpush1.msra.mxu0 0.0
        %2824 = vmatprep.subr.mxu0 0.0
        %2825 = vmatpush1.msra.mxu0 0.0
        %2826 = vmatprep.subr.mxu0 0.0
        %2827 = vmatpush1.msra.mxu0 %v1839
        %2828 = vmatprep.subr.mxu0 0.0
        %2829 = vmatpush2.msra.mxu0 0.0
        %2830 = vmatprep.subr.mxu0 0.0
        %2831 = vmatpush2.msra.mxu0 0.0
        %2832 = vmatprep.subr.mxu0 0.0
        %2833 = vmatpush2.msra.mxu0 0.0
        %2834 = vmatprep.subr.mxu0 0.0
        %2835 = vmatpush2.msra.mxu0 0.0
        %2836 = vmatprep.subr.mxu0 0.0
        %2837 = vmatpush2.msra.mxu0 0.0
        %2838 = vmatprep.subr.mxu0 0.0
        %2839 = vmatpush2.msra.mxu0 0.0
        %2840 = vmatprep.subr.mxu0 0.0
        %2841 = vmatpush2.msra.mxu0 0.0
        %2842 = vmatprep.subr.mxu0 0.0
        %2843 = vmatpush2.msra.mxu0 0.0
        %2844 = vmatprep.subr.mxu0 0.0
        %2845 = vmatpush2.msra.mxu0 0.0
        %2846 = vmatprep.subr.mxu0 0.0
        %2847 = vmatpush2.msra.mxu0 0.0
        %2848 = vmatprep.subr.mxu0 0.0
        %2849 = vmatpush2.msra.mxu0 0.0
        %2850 = vmatprep.subr.mxu0 0.0
        %2851 = vmatpush2.msra.mxu0 0.0
        %2852 = vmatprep.subr.mxu0 0.0
        %2853 = vmatpush2.msra.mxu0 0.0
        %2854 = vmatprep.subr.mxu0 0.0
        %2855 = vmatpush2.msra.mxu0 0.0
        %2856 = vmatprep.subr.mxu0 0.0
        %2857 = vmatpush2.msra.mxu0 0.0
        %2858 = vmatprep.subr.mxu0 0.0
        %2859 = vmatpush2.msra.mxu0 0.0
        %2860 = vmatprep.mubr.f32.mxu0 0.0
        %2861 = vmatmul.mubr.f32.gmra.mxu0 %v2794
        %v2862 = vpop.f32.mrf.mxu0
        %v2863 = vadd.f32 0.0, %v2862
        %v2864 = vpop.f32.mrf.mxu0
        %2865 = vdwg.mxu0
        %v2866 = vld [vmem:[#allocation8 + $0x200] sm:$0xff]
        %v2867 = vld [vmem:[#allocation8 + $0x208] sm:$0xff]
        %v2868 = vld [vmem:[#allocation8 + $0x210] sm:$0xff]
        %v2869 = vld [vmem:[#allocation8 + $0x218] sm:$0xff]
        %v2870 = vld [vmem:[#allocation8 + $0x220] sm:$0xff]
        %v2871 = vld [vmem:[#allocation8 + $0x228] sm:$0xff]
        %v2872 = vld [vmem:[#allocation8 + $0x230] sm:$0xff]
        %v2873 = vld [vmem:[#allocation8 + $0x238] sm:$0xff]
        %v2874 = vld [vmem:[#allocation8 + $0x240] sm:$0xff]
        %v2875 = vld [vmem:[#allocation8 + $0x248] sm:$0xff]
        %v2876 = vld [vmem:[#allocation8 + $0x250] sm:$0xff]
        %v2877 = vld [vmem:[#allocation8 + $0x258] sm:$0xff]
        %v2878 = vld [vmem:[#allocation8 + $0x260] sm:$0xff]
        %v2879 = vld [vmem:[#allocation8 + $0x268] sm:$0xff]
        %v2880 = vld [vmem:[#allocation8 + $0x270] sm:$0xff]
        %v2881 = vld [vmem:[#allocation8 + $0x278] sm:$0xff]
        %v2882 = vld [vmem:[#allocation8 + $0x280] sm:$0xff]
        %v2883 = vld [vmem:[#allocation8 + $0x288] sm:$0xff]
        %v2884 = vld [vmem:[#allocation8 + $0x290] sm:$0xff]
        %v2885 = vld [vmem:[#allocation8 + $0x298] sm:$0xff]
        %v2886 = vld [vmem:[#allocation8 + $0x2a0] sm:$0xff]
        %v2887 = vld [vmem:[#allocation8 + $0x2a8] sm:$0xff]
        %v2888 = vld [vmem:[#allocation8 + $0x2b0] sm:$0xff]
        %v2889 = vld [vmem:[#allocation8 + $0x2b8] sm:$0xff]
        %v2890 = vld [vmem:[#allocation8 + $0x2c0] sm:$0xff]
        %v2891 = vld [vmem:[#allocation8 + $0x2c8] sm:$0xff]
        %v2892 = vld [vmem:[#allocation8 + $0x2d0] sm:$0xff]
        %v2893 = vld [vmem:[#allocation8 + $0x2d8] sm:$0xff]
        %v2894 = vld [vmem:[#allocation8 + $0x2e0] sm:$0xff]
        %v2895 = vld [vmem:[#allocation8 + $0x2e8] sm:$0xff]
        %v2896 = vld [vmem:[#allocation8 + $0x2f0] sm:$0xff]
        %v2897 = vld [vmem:[#allocation8 + $0x2f8] sm:$0xff]
        %v2899 = vsel %vm2010, %v2863, 0
        %2901 = vmatprep.subr.mxu0 0.0
        %2902 = vmatpush1.msra.mxu0 0.0
        %2903 = vmatprep.subr.mxu0 0.0
        %2904 = vmatpush1.msra.mxu0 0.0
        %2905 = vmatprep.subr.mxu0 0.0
        %2906 = vmatpush1.msra.mxu0 0.0
        %2907 = vmatprep.subr.mxu0 0.0
        %2908 = vmatpush1.msra.mxu0 0.0
        %2909 = vmatprep.subr.mxu0 0.0
        %2910 = vmatpush1.msra.mxu0 0.0
        %2911 = vmatprep.subr.mxu0 0.0
        %2912 = vmatpush1.msra.mxu0 0.0
        %2913 = vmatprep.subr.mxu0 0.0
        %2914 = vmatpush1.msra.mxu0 0.0
        %2915 = vmatprep.subr.mxu0 0.0
        %2916 = vmatpush1.msra.mxu0 0.0
        %2917 = vmatprep.subr.mxu0 %v2895
        %2918 = vmatpush1.msra.mxu0 %v2894
        %2919 = vmatprep.subr.mxu0 %v2891
        %2920 = vmatpush1.msra.mxu0 %v2890
        %2921 = vmatprep.subr.mxu0 %v2887
        %2922 = vmatpush1.msra.mxu0 %v2886
        %2923 = vmatprep.subr.mxu0 %v2883
        %2924 = vmatpush1.msra.mxu0 %v2882
        %2925 = vmatprep.subr.mxu0 %v2879
        %2926 = vmatpush1.msra.mxu0 %v2878
        %2927 = vmatprep.subr.mxu0 %v2875
        %2928 = vmatpush1.msra.mxu0 %v2874
        %2929 = vmatprep.subr.mxu0 %v2871
        %2930 = vmatpush1.msra.mxu0 %v2870
        %2931 = vmatprep.subr.mxu0 %v2867
        %2932 = vmatpush1.msra.mxu0 %v2866
        %2933 = vmatprep.subr.mxu0 0.0
        %2934 = vmatpush2.msra.mxu0 0.0
        %2935 = vmatprep.subr.mxu0 0.0
        %2936 = vmatpush2.msra.mxu0 0.0
        %2937 = vmatprep.subr.mxu0 0.0
        %2938 = vmatpush2.msra.mxu0 0.0
        %2939 = vmatprep.subr.mxu0 0.0
        %2940 = vmatpush2.msra.mxu0 0.0
        %2941 = vmatprep.subr.mxu0 0.0
        %2942 = vmatpush2.msra.mxu0 0.0
        %2943 = vmatprep.subr.mxu0 0.0
        %2944 = vmatpush2.msra.mxu0 0.0
        %2945 = vmatprep.subr.mxu0 0.0
        %2946 = vmatpush2.msra.mxu0 0.0
        %2947 = vmatprep.subr.mxu0 0.0
        %2948 = vmatpush2.msra.mxu0 0.0
        %2949 = vmatprep.subr.mxu0 0.0
        %2950 = vmatpush2.msra.mxu0 0.0
        %2951 = vmatprep.subr.mxu0 0.0
        %2952 = vmatpush2.msra.mxu0 0.0
        %2953 = vmatprep.subr.mxu0 0.0
        %2954 = vmatpush2.msra.mxu0 0.0
        %2955 = vmatprep.subr.mxu0 0.0
        %2956 = vmatpush2.msra.mxu0 0.0
        %2957 = vmatprep.subr.mxu0 0.0
        %2958 = vmatpush2.msra.mxu0 0.0
        %2959 = vmatprep.subr.mxu0 0.0
        %2960 = vmatpush2.msra.mxu0 0.0
        %2961 = vmatprep.subr.mxu0 0.0
        %2962 = vmatpush2.msra.mxu0 0.0
        %2963 = vmatprep.subr.mxu0 0.0
        %2964 = vmatpush2.msra.mxu0 0.0
        %2965 = vmatprep.mubr.f32.mxu0 0.0
        %2966 = vmatmul.mubr.f32.gmra.mxu0 %v2899
        %v2967 = vpop.f32.mrf.mxu0
        %v2968 = vadd.f32 0.0, %v2967
        %v2969 = vpop.f32.mrf.mxu0
        %v2970 = vadd.f32 0.0, %v2969
        %2971 = vdwg.mxu0
        %2972 = vmatprep.subr.mxu0 0.0
        %2973 = vmatpush1.msra.mxu0 0.0
        %2974 = vmatprep.subr.mxu0 0.0
        %2975 = vmatpush1.msra.mxu0 0.0
        %2976 = vmatprep.subr.mxu0 0.0
        %2977 = vmatpush1.msra.mxu0 0.0
        %2978 = vmatprep.subr.mxu0 0.0
        %2979 = vmatpush1.msra.mxu0 0.0
        %2980 = vmatprep.subr.mxu0 0.0
        %2981 = vmatpush1.msra.mxu0 0.0
        %2982 = vmatprep.subr.mxu0 0.0
        %2983 = vmatpush1.msra.mxu0 0.0
        %2984 = vmatprep.subr.mxu0 0.0
        %2985 = vmatpush1.msra.mxu0 0.0
        %2986 = vmatprep.subr.mxu0 0.0
        %2987 = vmatpush1.msra.mxu0 0.0
        %2988 = vmatprep.subr.mxu0 %v2897
        %2989 = vmatpush1.msra.mxu0 %v2896
        %2990 = vmatprep.subr.mxu0 %v2893
        %2991 = vmatpush1.msra.mxu0 %v2892
        %2992 = vmatprep.subr.mxu0 %v2889
        %2993 = vmatpush1.msra.mxu0 %v2888
        %2994 = vmatprep.subr.mxu0 %v2885
        %2995 = vmatpush1.msra.mxu0 %v2884
        %2996 = vmatprep.subr.mxu0 %v2881
        %2997 = vmatpush1.msra.mxu0 %v2880
        %2998 = vmatprep.subr.mxu0 %v2877
        %2999 = vmatpush1.msra.mxu0 %v2876
        %3000 = vmatprep.subr.mxu0 %v2873
        %3001 = vmatpush1.msra.mxu0 %v2872
        %3002 = vmatprep.subr.mxu0 %v2869
        %3003 = vmatpush1.msra.mxu0 %v2868
        %3004 = vmatprep.subr.mxu0 0.0
        %3005 = vmatpush2.msra.mxu0 0.0
        %3006 = vmatprep.subr.mxu0 0.0
        %3007 = vmatpush2.msra.mxu0 0.0
        %3008 = vmatprep.subr.mxu0 0.0
        %3009 = vmatpush2.msra.mxu0 0.0
        %3010 = vmatprep.subr.mxu0 0.0
        %3011 = vmatpush2.msra.mxu0 0.0
        %3012 = vmatprep.subr.mxu0 0.0
        %3013 = vmatpush2.msra.mxu0 0.0
        %3014 = vmatprep.subr.mxu0 0.0
        %3015 = vmatpush2.msra.mxu0 0.0
        %3016 = vmatprep.subr.mxu0 0.0
        %3017 = vmatpush2.msra.mxu0 0.0
        %3018 = vmatprep.subr.mxu0 0.0
        %3019 = vmatpush2.msra.mxu0 0.0
        %3020 = vmatprep.subr.mxu0 0.0
        %3021 = vmatpush2.msra.mxu0 0.0
        %3022 = vmatprep.subr.mxu0 0.0
        %3023 = vmatpush2.msra.mxu0 0.0
        %3024 = vmatprep.subr.mxu0 0.0
        %3025 = vmatpush2.msra.mxu0 0.0
        %3026 = vmatprep.subr.mxu0 0.0
        %3027 = vmatpush2.msra.mxu0 0.0
        %3028 = vmatprep.subr.mxu0 0.0
        %3029 = vmatpush2.msra.mxu0 0.0
        %3030 = vmatprep.subr.mxu0 0.0
        %3031 = vmatpush2.msra.mxu0 0.0
        %3032 = vmatprep.subr.mxu0 0.0
        %3033 = vmatpush2.msra.mxu0 0.0
        %3034 = vmatprep.subr.mxu0 0.0
        %3035 = vmatpush2.msra.mxu0 0.0
        %3036 = vmatprep.mubr.f32.mxu0 0.0
        %3037 = vmatmul.mubr.f32.gmra.mxu0 %v2899
        %v3038 = vpop.f32.mrf.mxu0
        %v3039 = vadd.f32 0.0, %v3038
        %v3040 = vpop.f32.mrf.mxu0
        %v3041 = vadd.f32 0.0, %v3040
        %3042 = vdwg.mxu0
        %v3043 = vadd.f32 %v2700, %v2968
        %v3044 = vadd.f32 %v2701, %v2970
        %v3045 = vadd.f32 %v2702, %v3039
        %v3046 = vadd.f32 %v2703, %v3041
        %3047 = vrot.lane.b32.xlu0 %v1271, 64
        %v3048 = vpop.permute.xlu0 %3047
        %3049 = vrot.lane.b32.xlu0 %v1555, 64
        %v3050 = vpop.permute.xlu0 %3049
        %v3051 = vsel %vm2010, %v3048, 0
        %v3053 = vsel %vm2010, %v3050, 0
        %3055 = vmatprep.subr.mxu0 0.0
        %3056 = vmatpush1.xpose.msra.mxu0 0.0
        %3057 = vmatprep.subr.mxu0 0.0
        %3058 = vmatpush1.xpose.msra.mxu0 0.0
        %3059 = vmatprep.subr.mxu0 0.0
        %3060 = vmatpush1.xpose.msra.mxu0 0.0
        %3061 = vmatprep.subr.mxu0 0.0
        %3062 = vmatpush1.xpose.msra.mxu0 0.0
        %3063 = vmatprep.subr.mxu0 0.0
        %3064 = vmatpush1.xpose.msra.mxu0 0.0
        %3065 = vmatprep.subr.mxu0 0.0
        %3066 = vmatpush1.xpose.msra.mxu0 0.0
        %3067 = vmatprep.subr.mxu0 0.0
        %3068 = vmatpush1.xpose.msra.mxu0 0.0
        %3069 = vmatprep.subr.mxu0 0.0
        %3070 = vmatpush1.xpose.msra.mxu0 0.0
        %3071 = vmatprep.subr.mxu0 0.0
        %3072 = vmatpush1.xpose.msra.mxu0 0.0
        %3073 = vmatprep.subr.mxu0 0.0
        %3074 = vmatpush1.xpose.msra.mxu0 0.0
        %3075 = vmatprep.subr.mxu0 0.0
        %3076 = vmatpush1.xpose.msra.mxu0 0.0
        %3077 = vmatprep.subr.mxu0 0.0
        %3078 = vmatpush1.xpose.msra.mxu0 0.0
        %3079 = vmatprep.subr.mxu0 0.0
        %3080 = vmatpush1.xpose.msra.mxu0 0.0
        %3081 = vmatprep.subr.mxu0 0.0
        %3082 = vmatpush1.xpose.msra.mxu0 0.0
        %3083 = vmatprep.subr.mxu0 0.0
        %3084 = vmatpush1.xpose.msra.mxu0 0.0
        %3085 = vmatprep.subr.mxu0 0.0
        %3086 = vmatpush1.xpose.msra.mxu0 %v3053
        %3087 = vmatprep.subr.mxu0 0.0
        %3088 = vmatpush2.xpose.msra.mxu0 0.0
        %3089 = vmatprep.subr.mxu0 0.0
        %3090 = vmatpush2.xpose.msra.mxu0 0.0
        %3091 = vmatprep.subr.mxu0 0.0
        %3092 = vmatpush2.xpose.msra.mxu0 0.0
        %3093 = vmatprep.subr.mxu0 0.0
        %3094 = vmatpush2.xpose.msra.mxu0 0.0
        %3095 = vmatprep.subr.mxu0 0.0
        %3096 = vmatpush2.xpose.msra.mxu0 0.0
        %3097 = vmatprep.subr.mxu0 0.0
        %3098 = vmatpush2.xpose.msra.mxu0 0.0
        %3099 = vmatprep.subr.mxu0 0.0
        %3100 = vmatpush2.xpose.msra.mxu0 0.0
        %3101 = vmatprep.subr.mxu0 0.0
        %3102 = vmatpush2.xpose.msra.mxu0 0.0
        %3103 = vmatprep.subr.mxu0 0.0
        %3104 = vmatpush2.xpose.msra.mxu0 0.0
        %3105 = vmatprep.subr.mxu0 0.0
        %3106 = vmatpush2.xpose.msra.mxu0 0.0
        %3107 = vmatprep.subr.mxu0 0.0
        %3108 = vmatpush2.xpose.msra.mxu0 0.0
        %3109 = vmatprep.subr.mxu0 0.0
        %3110 = vmatpush2.xpose.msra.mxu0 0.0
        %3111 = vmatprep.subr.mxu0 0.0
        %3112 = vmatpush2.xpose.msra.mxu0 0.0
        %3113 = vmatprep.subr.mxu0 0.0
        %3114 = vmatpush2.xpose.msra.mxu0 0.0
        %3115 = vmatprep.subr.mxu0 0.0
        %3116 = vmatpush2.xpose.msra.mxu0 0.0
        %3117 = vmatprep.subr.mxu0 0.0
        %3118 = vmatpush2.xpose.msra.mxu0 0.0
        %3119 = vmatprep.mubr.f32.mxu0 0.0
        %3120 = vmatmul.mubr.f32.gmra.mxu0 %v3051
        %v3121 = vpop.f32.mrf.mxu0
        %v3122 = vadd.f32 0.0, %v3121
        %v3123 = vpop.f32.mrf.mxu0
        %3124 = vdwg.mxu0
        %v3125 = vmul.f32 %v3122, 0.125
        %v3126 = vsel %vm1987, %v3125, -1e+30
        %v3127 = vsel %vm2089, %v3126, -inf
        %3128 = vmax.xlane.f32.xlu0 %v3127
        %v3129 = vpop.xlane.xlu0 %3128
        %v3130 = vsub.f32 %v3126, %v3129
        %v3131 = vmul.f32 %v3130, 1.442695
        %v3132 = vpow.pop %v3131
        %v3133 = vsel %vm2089, %v3132, 0.0
        %3134 = vadd.xlane.f32.xlu0 %v3133
        %v3135 = vpop.xlane.xlu0 %3134
        %v3136 = vrcp.pop %v3135
        %v3137 = vmul.f32 %v3132, %v3136
        %3139 = vrot.lane.b32.xlu0 %v1839, 64
        %v3140 = vpop.permute.xlu0 %3139
        %v3143 = vsel %vm2089, %v3137, 0
        %3145 = vmatprep.subr.mxu0 0.0
        %3146 = vmatpush1.msra.mxu0 0.0
        %3147 = vmatprep.subr.mxu0 0.0
        %3148 = vmatpush1.msra.mxu0 0.0
        %3149 = vmatprep.subr.mxu0 0.0
        %3150 = vmatpush1.msra.mxu0 0.0
        %3151 = vmatprep.subr.mxu0 0.0
        %3152 = vmatpush1.msra.mxu0 0.0
        %3153 = vmatprep.subr.mxu0 0.0
        %3154 = vmatpush1.msra.mxu0 0.0
        %3155 = vmatprep.subr.mxu0 0.0
        %3156 = vmatpush1.msra.mxu0 0.0
        %3157 = vmatprep.subr.mxu0 0.0
        %3158 = vmatpush1.msra.mxu0 0.0
        %3159 = vmatprep.subr.mxu0 0.0
        %3160 = vmatpush1.msra.mxu0 0.0
        %3161 = vmatprep.subr.mxu0 0.0
        %3162 = vmatpush1.msra.mxu0 0.0
        %3163 = vmatprep.subr.mxu0 0.0
        %3164 = vmatpush1.msra.mxu0 0.0
        %3165 = vmatprep.subr.mxu0 0.0
        %3166 = vmatpush1.msra.mxu0 0.0
        %3167 = vmatprep.subr.mxu0 0.0
        %3168 = vmatpush1.msra.mxu0 0.0
        %3169 = vmatprep.subr.mxu0 0.0
        %3170 = vmatpush1.msra.mxu0 0.0
        %3171 = vmatprep.subr.mxu0 0.0
        %3172 = vmatpush1.msra.mxu0 0.0
        %3173 = vmatprep.subr.mxu0 0.0
        %3174 = vmatpush1.msra.mxu0 0.0
        %3175 = vmatprep.subr.mxu0 0.0
        %3176 = vmatpush1.msra.mxu0 %v3140
        %3177 = vmatprep.subr.mxu0 0.0
        %3178 = vmatpush2.msra.mxu0 0.0
        %3179 = vmatprep.subr.mxu0 0.0
        %3180 = vmatpush2.msra.mxu0 0.0
        %3181 = vmatprep.subr.mxu0 0.0
        %3182 = vmatpush2.msra.mxu0 0.0
        %3183 = vmatprep.subr.mxu0 0.0
        %3184 = vmatpush2.msra.mxu0 0.0
        %3185 = vmatprep.subr.mxu0 0.0
        %3186 = vmatpush2.msra.mxu0 0.0
        %3187 = vmatprep.subr.mxu0 0.0
        %3188 = vmatpush2.msra.mxu0 0.0
        %3189 = vmatprep.subr.mxu0 0.0
        %3190 = vmatpush2.msra.mxu0 0.0
        %3191 = vmatprep.subr.mxu0 0.0
        %3192 = vmatpush2.msra.mxu0 0.0
        %3193 = vmatprep.subr.mxu0 0.0
        %3194 = vmatpush2.msra.mxu0 0.0
        %3195 = vmatprep.subr.mxu0 0.0
        %3196 = vmatpush2.msra.mxu0 0.0
        %3197 = vmatprep.subr.mxu0 0.0
        %3198 = vmatpush2.msra.mxu0 0.0
        %3199 = vmatprep.subr.mxu0 0.0
        %3200 = vmatpush2.msra.mxu0 0.0
        %3201 = vmatprep.subr.mxu0 0.0
        %3202 = vmatpush2.msra.mxu0 0.0
        %3203 = vmatprep.subr.mxu0 0.0
        %3204 = vmatpush2.msra.mxu0 0.0
        %3205 = vmatprep.subr.mxu0 0.0
        %3206 = vmatpush2.msra.mxu0 0.0
        %3207 = vmatprep.subr.mxu0 0.0
        %3208 = vmatpush2.msra.mxu0 0.0
        %3209 = vmatprep.mubr.f32.mxu0 0.0
        %3210 = vmatmul.mubr.f32.gmra.mxu0 %v3143
        %v3211 = vpop.f32.mrf.mxu0
        %v3212 = vadd.f32 0.0, %v3211
        %v3213 = vpop.f32.mrf.mxu0
        %3214 = vdwg.mxu0
        %v3215 = vld [vmem:[#allocation8 + $0x300] sm:$0xff]
        %v3216 = vld [vmem:[#allocation8 + $0x308] sm:$0xff]
        %v3217 = vld [vmem:[#allocation8 + $0x310] sm:$0xff]
        %v3218 = vld [vmem:[#allocation8 + $0x318] sm:$0xff]
        %v3219 = vld [vmem:[#allocation8 + $0x320] sm:$0xff]
        %v3220 = vld [vmem:[#allocation8 + $0x328] sm:$0xff]
        %v3221 = vld [vmem:[#allocation8 + $0x330] sm:$0xff]
        %v3222 = vld [vmem:[#allocation8 + $0x338] sm:$0xff]
        %v3223 = vld [vmem:[#allocation8 + $0x340] sm:$0xff]
        %v3224 = vld [vmem:[#allocation8 + $0x348] sm:$0xff]
        %v3225 = vld [vmem:[#allocation8 + $0x350] sm:$0xff]
        %v3226 = vld [vmem:[#allocation8 + $0x358] sm:$0xff]
        %v3227 = vld [vmem:[#allocation8 + $0x360] sm:$0xff]
        %v3228 = vld [vmem:[#allocation8 + $0x368] sm:$0xff]
        %v3229 = vld [vmem:[#allocation8 + $0x370] sm:$0xff]
        %v3230 = vld [vmem:[#allocation8 + $0x378] sm:$0xff]
        %v3231 = vld [vmem:[#allocation8 + $0x380] sm:$0xff]
        %v3232 = vld [vmem:[#allocation8 + $0x388] sm:$0xff]
        %v3233 = vld [vmem:[#allocation8 + $0x390] sm:$0xff]
        %v3234 = vld [vmem:[#allocation8 + $0x398] sm:$0xff]
        %v3235 = vld [vmem:[#allocation8 + $0x3a0] sm:$0xff]
        %v3236 = vld [vmem:[#allocation8 + $0x3a8] sm:$0xff]
        %v3237 = vld [vmem:[#allocation8 + $0x3b0] sm:$0xff]
        %v3238 = vld [vmem:[#allocation8 + $0x3b8] sm:$0xff]
        %v3239 = vld [vmem:[#allocation8 + $0x3c0] sm:$0xff]
        %v3240 = vld [vmem:[#allocation8 + $0x3c8] sm:$0xff]
        %v3241 = vld [vmem:[#allocation8 + $0x3d0] sm:$0xff]
        %v3242 = vld [vmem:[#allocation8 + $0x3d8] sm:$0xff]
        %v3243 = vld [vmem:[#allocation8 + $0x3e0] sm:$0xff]
        %v3244 = vld [vmem:[#allocation8 + $0x3e8] sm:$0xff]
        %v3245 = vld [vmem:[#allocation8 + $0x3f0] sm:$0xff]
        %v3246 = vld [vmem:[#allocation8 + $0x3f8] sm:$0xff]
        %v3248 = vsel %vm2010, %v3212, 0
        %3250 = vmatprep.subr.mxu0 0.0
        %3251 = vmatpush1.msra.mxu0 0.0
        %3252 = vmatprep.subr.mxu0 0.0
        %3253 = vmatpush1.msra.mxu0 0.0
        %3254 = vmatprep.subr.mxu0 0.0
        %3255 = vmatpush1.msra.mxu0 0.0
        %3256 = vmatprep.subr.mxu0 0.0
        %3257 = vmatpush1.msra.mxu0 0.0
        %3258 = vmatprep.subr.mxu0 0.0
        %3259 = vmatpush1.msra.mxu0 0.0
        %3260 = vmatprep.subr.mxu0 0.0
        %3261 = vmatpush1.msra.mxu0 0.0
        %3262 = vmatprep.subr.mxu0 0.0
        %3263 = vmatpush1.msra.mxu0 0.0
        %3264 = vmatprep.subr.mxu0 0.0
        %3265 = vmatpush1.msra.mxu0 0.0
        %3266 = vmatprep.subr.mxu0 %v3244
        %3267 = vmatpush1.msra.mxu0 %v3243
        %3268 = vmatprep.subr.mxu0 %v3240
        %3269 = vmatpush1.msra.mxu0 %v3239
        %3270 = vmatprep.subr.mxu0 %v3236
        %3271 = vmatpush1.msra.mxu0 %v3235
        %3272 = vmatprep.subr.mxu0 %v3232
        %3273 = vmatpush1.msra.mxu0 %v3231
        %3274 = vmatprep.subr.mxu0 %v3228
        %3275 = vmatpush1.msra.mxu0 %v3227
        %3276 = vmatprep.subr.mxu0 %v3224
        %3277 = vmatpush1.msra.mxu0 %v3223
        %3278 = vmatprep.subr.mxu0 %v3220
        %3279 = vmatpush1.msra.mxu0 %v3219
        %3280 = vmatprep.subr.mxu0 %v3216
        %3281 = vmatpush1.msra.mxu0 %v3215
        %3282 = vmatprep.subr.mxu0 0.0
        %3283 = vmatpush2.msra.mxu0 0.0
        %3284 = vmatprep.subr.mxu0 0.0
        %3285 = vmatpush2.msra.mxu0 0.0
        %3286 = vmatprep.subr.mxu0 0.0
        %3287 = vmatpush2.msra.mxu0 0.0
        %3288 = vmatprep.subr.mxu0 0.0
        %3289 = vmatpush2.msra.mxu0 0.0
        %3290 = vmatprep.subr.mxu0 0.0
        %3291 = vmatpush2.msra.mxu0 0.0
        %3292 = vmatprep.subr.mxu0 0.0
        %3293 = vmatpush2.msra.mxu0 0.0
        %3294 = vmatprep.subr.mxu0 0.0
        %3295 = vmatpush2.msra.mxu0 0.0
        %3296 = vmatprep.subr.mxu0 0.0
        %3297 = vmatpush2.msra.mxu0 0.0
        %3298 = vmatprep.subr.mxu0 0.0
        %3299 = vmatpush2.msra.mxu0 0.0
        %3300 = vmatprep.subr.mxu0 0.0
        %3301 = vmatpush2.msra.mxu0 0.0
        %3302 = vmatprep.subr.mxu0 0.0
        %3303 = vmatpush2.msra.mxu0 0.0
        %3304 = vmatprep.subr.mxu0 0.0
        %3305 = vmatpush2.msra.mxu0 0.0
        %3306 = vmatprep.subr.mxu0 0.0
        %3307 = vmatpush2.msra.mxu0 0.0
        %3308 = vmatprep.subr.mxu0 0.0
        %3309 = vmatpush2.msra.mxu0 0.0
        %3310 = vmatprep.subr.mxu0 0.0
        %3311 = vmatpush2.msra.mxu0 0.0
        %3312 = vmatprep.subr.mxu0 0.0
        %3313 = vmatpush2.msra.mxu0 0.0
        %3314 = vmatprep.mubr.f32.mxu0 0.0
        %3315 = vmatmul.mubr.f32.gmra.mxu0 %v3248
        %v3316 = vpop.f32.mrf.mxu0
        %v3317 = vadd.f32 0.0, %v3316
        %v3318 = vpop.f32.mrf.mxu0
        %v3319 = vadd.f32 0.0, %v3318
        %3320 = vdwg.mxu0
        %3321 = vmatprep.subr.mxu0 0.0
        %3322 = vmatpush1.msra.mxu0 0.0
        %3323 = vmatprep.subr.mxu0 0.0
        %3324 = vmatpush1.msra.mxu0 0.0
        %3325 = vmatprep.subr.mxu0 0.0
        %3326 = vmatpush1.msra.mxu0 0.0
        %3327 = vmatprep.subr.mxu0 0.0
        %3328 = vmatpush1.msra.mxu0 0.0
        %3329 = vmatprep.subr.mxu0 0.0
        %3330 = vmatpush1.msra.mxu0 0.0
        %3331 = vmatprep.subr.mxu0 0.0
        %3332 = vmatpush1.msra.mxu0 0.0
        %3333 = vmatprep.subr.mxu0 0.0
        %3334 = vmatpush1.msra.mxu0 0.0
        %3335 = vmatprep.subr.mxu0 0.0
        %3336 = vmatpush1.msra.mxu0 0.0
        %3337 = vmatprep.subr.mxu0 %v3246
        %3338 = vmatpush1.msra.mxu0 %v3245
        %3339 = vmatprep.subr.mxu0 %v3242
        %3340 = vmatpush1.msra.mxu0 %v3241
        %3341 = vmatprep.subr.mxu0 %v3238
        %3342 = vmatpush1.msra.mxu0 %v3237
        %3343 = vmatprep.subr.mxu0 %v3234
        %3344 = vmatpush1.msra.mxu0 %v3233
        %3345 = vmatprep.subr.mxu0 %v3230
        %3346 = vmatpush1.msra.mxu0 %v3229
        %3347 = vmatprep.subr.mxu0 %v3226
        %3348 = vmatpush1.msra.mxu0 %v3225
        %3349 = vmatprep.subr.mxu0 %v3222
        %3350 = vmatpush1.msra.mxu0 %v3221
        %3351 = vmatprep.subr.mxu0 %v3218
        %3352 = vmatpush1.msra.mxu0 %v3217
        %3353 = vmatprep.subr.mxu0 0.0
        %3354 = vmatpush2.msra.mxu0 0.0
        %3355 = vmatprep.subr.mxu0 0.0
        %3356 = vmatpush2.msra.mxu0 0.0
        %3357 = vmatprep.subr.mxu0 0.0
        %3358 = vmatpush2.msra.mxu0 0.0
        %3359 = vmatprep.subr.mxu0 0.0
        %3360 = vmatpush2.msra.mxu0 0.0
        %3361 = vmatprep.subr.mxu0 0.0
        %3362 = vmatpush2.msra.mxu0 0.0
        %3363 = vmatprep.subr.mxu0 0.0
        %3364 = vmatpush2.msra.mxu0 0.0
        %3365 = vmatprep.subr.mxu0 0.0
        %3366 = vmatpush2.msra.mxu0 0.0
        %3367 = vmatprep.subr.mxu0 0.0
        %3368 = vmatpush2.msra.mxu0 0.0
        %3369 = vmatprep.subr.mxu0 0.0
        %3370 = vmatpush2.msra.mxu0 0.0
        %3371 = vmatprep.subr.mxu0 0.0
        %3372 = vmatpush2.msra.mxu0 0.0
        %3373 = vmatprep.subr.mxu0 0.0
        %3374 = vmatpush2.msra.mxu0 0.0
        %3375 = vmatprep.subr.mxu0 0.0
        %3376 = vmatpush2.msra.mxu0 0.0
        %3377 = vmatprep.subr.mxu0 0.0
        %3378 = vmatpush2.msra.mxu0 0.0
        %3379 = vmatprep.subr.mxu0 0.0
        %3380 = vmatpush2.msra.mxu0 0.0
        %3381 = vmatprep.subr.mxu0 0.0
        %3382 = vmatpush2.msra.mxu0 0.0
        %3383 = vmatprep.subr.mxu0 0.0
        %3384 = vmatpush2.msra.mxu0 0.0
        %3385 = vmatprep.mubr.f32.mxu0 0.0
        %3386 = vmatmul.mubr.f32.gmra.mxu0 %v3248
        %v3387 = vpop.f32.mrf.mxu0
        %v3388 = vadd.f32 0.0, %v3387
        %v3389 = vpop.f32.mrf.mxu0
        %v3390 = vadd.f32 0.0, %v3389
        %3391 = vdwg.mxu0
        %v3392 = vadd.f32 %v3043, %v3317
        %v3393 = vadd.f32 %v3044, %v3319
        %v3394 = vadd.f32 %v3045, %v3388
        %v3395 = vadd.f32 %v3046, %v3390
        %v3397 = vsel %vm2010, %v1411, 0
        %v3400 = vsel %vm2010, %v1695, 0
        %3402 = vmatprep.subr.mxu0 0.0
        %3403 = vmatpush1.xpose.msra.mxu0 0.0
        %3404 = vmatprep.subr.mxu0 0.0
        %3405 = vmatpush1.xpose.msra.mxu0 0.0
        %3406 = vmatprep.subr.mxu0 0.0
        %3407 = vmatpush1.xpose.msra.mxu0 0.0
        %3408 = vmatprep.subr.mxu0 0.0
        %3409 = vmatpush1.xpose.msra.mxu0 0.0
        %3410 = vmatprep.subr.mxu0 0.0
        %3411 = vmatpush1.xpose.msra.mxu0 0.0
        %3412 = vmatprep.subr.mxu0 0.0
        %3413 = vmatpush1.xpose.msra.mxu0 0.0
        %3414 = vmatprep.subr.mxu0 0.0
        %3415 = vmatpush1.xpose.msra.mxu0 0.0
        %3416 = vmatprep.subr.mxu0 0.0
        %3417 = vmatpush1.xpose.msra.mxu0 0.0
        %3418 = vmatprep.subr.mxu0 0.0
        %3419 = vmatpush1.xpose.msra.mxu0 0.0
        %3420 = vmatprep.subr.mxu0 0.0
        %3421 = vmatpush1.xpose.msra.mxu0 0.0
        %3422 = vmatprep.subr.mxu0 0.0
        %3423 = vmatpush1.xpose.msra.mxu0 0.0
        %3424 = vmatprep.subr.mxu0 0.0
        %3425 = vmatpush1.xpose.msra.mxu0 0.0
        %3426 = vmatprep.subr.mxu0 0.0
        %3427 = vmatpush1.xpose.msra.mxu0 0.0
        %3428 = vmatprep.subr.mxu0 0.0
        %3429 = vmatpush1.xpose.msra.mxu0 0.0
        %3430 = vmatprep.subr.mxu0 0.0
        %3431 = vmatpush1.xpose.msra.mxu0 0.0
        %3432 = vmatprep.subr.mxu0 0.0
        %3433 = vmatpush1.xpose.msra.mxu0 %v3400
        %3434 = vmatprep.subr.mxu0 0.0
        %3435 = vmatpush2.xpose.msra.mxu0 0.0
        %3436 = vmatprep.subr.mxu0 0.0
        %3437 = vmatpush2.xpose.msra.mxu0 0.0
        %3438 = vmatprep.subr.mxu0 0.0
        %3439 = vmatpush2.xpose.msra.mxu0 0.0
        %3440 = vmatprep.subr.mxu0 0.0
        %3441 = vmatpush2.xpose.msra.mxu0 0.0
        %3442 = vmatprep.subr.mxu0 0.0
        %3443 = vmatpush2.xpose.msra.mxu0 0.0
        %3444 = vmatprep.subr.mxu0 0.0
        %3445 = vmatpush2.xpose.msra.mxu0 0.0
        %3446 = vmatprep.subr.mxu0 0.0
        %3447 = vmatpush2.xpose.msra.mxu0 0.0
        %3448 = vmatprep.subr.mxu0 0.0
        %3449 = vmatpush2.xpose.msra.mxu0 0.0
        %3450 = vmatprep.subr.mxu0 0.0
        %3451 = vmatpush2.xpose.msra.mxu0 0.0
        %3452 = vmatprep.subr.mxu0 0.0
        %3453 = vmatpush2.xpose.msra.mxu0 0.0
        %3454 = vmatprep.subr.mxu0 0.0
        %3455 = vmatpush2.xpose.msra.mxu0 0.0
        %3456 = vmatprep.subr.mxu0 0.0
        %3457 = vmatpush2.xpose.msra.mxu0 0.0
        %3458 = vmatprep.subr.mxu0 0.0
        %3459 = vmatpush2.xpose.msra.mxu0 0.0
        %3460 = vmatprep.subr.mxu0 0.0
        %3461 = vmatpush2.xpose.msra.mxu0 0.0
        %3462 = vmatprep.subr.mxu0 0.0
        %3463 = vmatpush2.xpose.msra.mxu0 0.0
        %3464 = vmatprep.subr.mxu0 0.0
        %3465 = vmatpush2.xpose.msra.mxu0 0.0
        %3466 = vmatprep.mubr.f32.mxu0 0.0
        %3467 = vmatmul.mubr.f32.gmra.mxu0 %v3397
        %v3468 = vpop.f32.mrf.mxu0
        %v3469 = vadd.f32 0.0, %v3468
        %v3470 = vpop.f32.mrf.mxu0
        %3471 = vdwg.mxu0
        %v3472 = vmul.f32 %v3469, 0.125
        %v3473 = vsel %vm1987, %v3472, -1e+30
        %v3474 = vsel %vm2089, %v3473, -inf
        %3475 = vmax.xlane.f32.xlu0 %v3474
        %v3476 = vpop.xlane.xlu0 %3475
        %v3477 = vsub.f32 %v3473, %v3476
        %v3478 = vmul.f32 %v3477, 1.442695
        %v3479 = vpow.pop %v3478
        %v3480 = vsel %vm2089, %v3479, 0.0
        %3481 = vadd.xlane.f32.xlu0 %v3480
        %v3482 = vpop.xlane.xlu0 %3481
        %v3483 = vrcp.pop %v3482
        %v3484 = vmul.f32 %v3479, %v3483
        %v3486 = vsel %vm2089, %v3484, 0
        %3488 = vmatprep.subr.mxu0 0.0
        %3489 = vmatpush1.msra.mxu0 0.0
        %3490 = vmatprep.subr.mxu0 0.0
        %3491 = vmatpush1.msra.mxu0 0.0
        %3492 = vmatprep.subr.mxu0 0.0
        %3493 = vmatpush1.msra.mxu0 0.0
        %3494 = vmatprep.subr.mxu0 0.0
        %3495 = vmatpush1.msra.mxu0 0.0
        %3496 = vmatprep.subr.mxu0 0.0
        %3497 = vmatpush1.msra.mxu0 0.0
        %3498 = vmatprep.subr.mxu0 0.0
        %3499 = vmatpush1.msra.mxu0 0.0
        %3500 = vmatprep.subr.mxu0 0.0
        %3501 = vmatpush1.msra.mxu0 0.0
        %3502 = vmatprep.subr.mxu0 0.0
        %3503 = vmatpush1.msra.mxu0 0.0
        %3504 = vmatprep.subr.mxu0 0.0
        %3505 = vmatpush1.msra.mxu0 0.0
        %3506 = vmatprep.subr.mxu0 0.0
        %3507 = vmatpush1.msra.mxu0 0.0
        %3508 = vmatprep.subr.mxu0 0.0
        %3509 = vmatpush1.msra.mxu0 0.0
        %3510 = vmatprep.subr.mxu0 0.0
        %3511 = vmatpush1.msra.mxu0 0.0
        %3512 = vmatprep.subr.mxu0 0.0
        %3513 = vmatpush1.msra.mxu0 0.0
        %3514 = vmatprep.subr.mxu0 0.0
        %3515 = vmatpush1.msra.mxu0 0.0
        %3516 = vmatprep.subr.mxu0 0.0
        %3517 = vmatpush1.msra.mxu0 0.0
        %3518 = vmatprep.subr.mxu0 0.0
        %3519 = vmatpush1.msra.mxu0 %v1979
        %3520 = vmatprep.subr.mxu0 0.0
        %3521 = vmatpush2.msra.mxu0 0.0
        %3522 = vmatprep.subr.mxu0 0.0
        %3523 = vmatpush2.msra.mxu0 0.0
        %3524 = vmatprep.subr.mxu0 0.0
        %3525 = vmatpush2.msra.mxu0 0.0
        %3526 = vmatprep.subr.mxu0 0.0
        %3527 = vmatpush2.msra.mxu0 0.0
        %3528 = vmatprep.subr.mxu0 0.0
        %3529 = vmatpush2.msra.mxu0 0.0
        %3530 = vmatprep.subr.mxu0 0.0
        %3531 = vmatpush2.msra.mxu0 0.0
        %3532 = vmatprep.subr.mxu0 0.0
        %3533 = vmatpush2.msra.mxu0 0.0
        %3534 = vmatprep.subr.mxu0 0.0
        %3535 = vmatpush2.msra.mxu0 0.0
        %3536 = vmatprep.subr.mxu0 0.0
        %3537 = vmatpush2.msra.mxu0 0.0
        %3538 = vmatprep.subr.mxu0 0.0
        %3539 = vmatpush2.msra.mxu0 0.0
        %3540 = vmatprep.subr.mxu0 0.0
        %3541 = vmatpush2.msra.mxu0 0.0
        %3542 = vmatprep.subr.mxu0 0.0
        %3543 = vmatpush2.msra.mxu0 0.0
        %3544 = vmatprep.subr.mxu0 0.0
        %3545 = vmatpush2.msra.mxu0 0.0
        %3546 = vmatprep.subr.mxu0 0.0
        %3547 = vmatpush2.msra.mxu0 0.0
        %3548 = vmatprep.subr.mxu0 0.0
        %3549 = vmatpush2.msra.mxu0 0.0
        %3550 = vmatprep.subr.mxu0 0.0
        %3551 = vmatpush2.msra.mxu0 0.0
        %3552 = vmatprep.mubr.f32.mxu0 0.0
        %3553 = vmatmul.mubr.f32.gmra.mxu0 %v3486
        %v3554 = vpop.f32.mrf.mxu0
        %v3555 = vadd.f32 0.0, %v3554
        %v3556 = vpop.f32.mrf.mxu0
        %3557 = vdwg.mxu0
        %v3558 = vld [vmem:[#allocation8 + $0x400] sm:$0xff]
        %v3559 = vld [vmem:[#allocation8 + $0x408] sm:$0xff]
        %v3560 = vld [vmem:[#allocation8 + $0x410] sm:$0xff]
        %v3561 = vld [vmem:[#allocation8 + $0x418] sm:$0xff]
        %v3562 = vld [vmem:[#allocation8 + $0x420] sm:$0xff]
        %v3563 = vld [vmem:[#allocation8 + $0x428] sm:$0xff]
        %v3564 = vld [vmem:[#allocation8 + $0x430] sm:$0xff]
        %v3565 = vld [vmem:[#allocation8 + $0x438] sm:$0xff]
        %v3566 = vld [vmem:[#allocation8 + $0x440] sm:$0xff]
        %v3567 = vld [vmem:[#allocation8 + $0x448] sm:$0xff]
        %v3568 = vld [vmem:[#allocation8 + $0x450] sm:$0xff]
        %v3569 = vld [vmem:[#allocation8 + $0x458] sm:$0xff]
        %v3570 = vld [vmem:[#allocation8 + $0x460] sm:$0xff]
        %v3571 = vld [vmem:[#allocation8 + $0x468] sm:$0xff]
        %v3572 = vld [vmem:[#allocation8 + $0x470] sm:$0xff]
        %v3573 = vld [vmem:[#allocation8 + $0x478] sm:$0xff]
        %v3574 = vld [vmem:[#allocation8 + $0x480] sm:$0xff]
        %v3575 = vld [vmem:[#allocation8 + $0x488] sm:$0xff]
        %v3576 = vld [vmem:[#allocation8 + $0x490] sm:$0xff]
        %v3577 = vld [vmem:[#allocation8 + $0x498] sm:$0xff]
        %v3578 = vld [vmem:[#allocation8 + $0x4a0] sm:$0xff]
        %v3579 = vld [vmem:[#allocation8 + $0x4a8] sm:$0xff]
        %v3580 = vld [vmem:[#allocation8 + $0x4b0] sm:$0xff]
        %v3581 = vld [vmem:[#allocation8 + $0x4b8] sm:$0xff]
        %v3582 = vld [vmem:[#allocation8 + $0x4c0] sm:$0xff]
        %v3583 = vld [vmem:[#allocation8 + $0x4c8] sm:$0xff]
        %v3584 = vld [vmem:[#allocation8 + $0x4d0] sm:$0xff]
        %v3585 = vld [vmem:[#allocation8 + $0x4d8] sm:$0xff]
        %v3586 = vld [vmem:[#allocation8 + $0x4e0] sm:$0xff]
        %v3587 = vld [vmem:[#allocation8 + $0x4e8] sm:$0xff]
        %v3588 = vld [vmem:[#allocation8 + $0x4f0] sm:$0xff]
        %v3589 = vld [vmem:[#allocation8 + $0x4f8] sm:$0xff]
        %v3591 = vsel %vm2010, %v3555, 0
        %3593 = vmatprep.subr.mxu0 0.0
        %3594 = vmatpush1.msra.mxu0 0.0
        %3595 = vmatprep.subr.mxu0 0.0
        %3596 = vmatpush1.msra.mxu0 0.0
        %3597 = vmatprep.subr.mxu0 0.0
        %3598 = vmatpush1.msra.mxu0 0.0
        %3599 = vmatprep.subr.mxu0 0.0
        %3600 = vmatpush1.msra.mxu0 0.0
        %3601 = vmatprep.subr.mxu0 0.0
        %3602 = vmatpush1.msra.mxu0 0.0
        %3603 = vmatprep.subr.mxu0 0.0
        %3604 = vmatpush1.msra.mxu0 0.0
        %3605 = vmatprep.subr.mxu0 0.0
        %3606 = vmatpush1.msra.mxu0 0.0
        %3607 = vmatprep.subr.mxu0 0.0
        %3608 = vmatpush1.msra.mxu0 0.0
        %3609 = vmatprep.subr.mxu0 %v3587
        %3610 = vmatpush1.msra.mxu0 %v3586
        %3611 = vmatprep.subr.mxu0 %v3583
        %3612 = vmatpush1.msra.mxu0 %v3582
        %3613 = vmatprep.subr.mxu0 %v3579
        %3614 = vmatpush1.msra.mxu0 %v3578
        %3615 = vmatprep.subr.mxu0 %v3575
        %3616 = vmatpush1.msra.mxu0 %v3574
        %3617 = vmatprep.subr.mxu0 %v3571
        %3618 = vmatpush1.msra.mxu0 %v3570
        %3619 = vmatprep.subr.mxu0 %v3567
        %3620 = vmatpush1.msra.mxu0 %v3566
        %3621 = vmatprep.subr.mxu0 %v3563
        %3622 = vmatpush1.msra.mxu0 %v3562
        %3623 = vmatprep.subr.mxu0 %v3559
        %3624 = vmatpush1.msra.mxu0 %v3558
        %3625 = vmatprep.subr.mxu0 0.0
        %3626 = vmatpush2.msra.mxu0 0.0
        %3627 = vmatprep.subr.mxu0 0.0
        %3628 = vmatpush2.msra.mxu0 0.0
        %3629 = vmatprep.subr.mxu0 0.0
        %3630 = vmatpush2.msra.mxu0 0.0
        %3631 = vmatprep.subr.mxu0 0.0
        %3632 = vmatpush2.msra.mxu0 0.0
        %3633 = vmatprep.subr.mxu0 0.0
        %3634 = vmatpush2.msra.mxu0 0.0
        %3635 = vmatprep.subr.mxu0 0.0
        %3636 = vmatpush2.msra.mxu0 0.0
        %3637 = vmatprep.subr.mxu0 0.0
        %3638 = vmatpush2.msra.mxu0 0.0
        %3639 = vmatprep.subr.mxu0 0.0
        %3640 = vmatpush2.msra.mxu0 0.0
        %3641 = vmatprep.subr.mxu0 0.0
        %3642 = vmatpush2.msra.mxu0 0.0
        %3643 = vmatprep.subr.mxu0 0.0
        %3644 = vmatpush2.msra.mxu0 0.0
        %3645 = vmatprep.subr.mxu0 0.0
        %3646 = vmatpush2.msra.mxu0 0.0
        %3647 = vmatprep.subr.mxu0 0.0
        %3648 = vmatpush2.msra.mxu0 0.0
        %3649 = vmatprep.subr.mxu0 0.0
        %3650 = vmatpush2.msra.mxu0 0.0
        %3651 = vmatprep.subr.mxu0 0.0
        %3652 = vmatpush2.msra.mxu0 0.0
        %3653 = vmatprep.subr.mxu0 0.0
        %3654 = vmatpush2.msra.mxu0 0.0
        %3655 = vmatprep.subr.mxu0 0.0
        %3656 = vmatpush2.msra.mxu0 0.0
        %3657 = vmatprep.mubr.f32.mxu0 0.0
        %3658 = vmatmul.mubr.f32.gmra.mxu0 %v3591
        %v3659 = vpop.f32.mrf.mxu0
        %v3660 = vadd.f32 0.0, %v3659
        %v3661 = vpop.f32.mrf.mxu0
        %v3662 = vadd.f32 0.0, %v3661
        %3663 = vdwg.mxu0
        %3664 = vmatprep.subr.mxu0 0.0
        %3665 = vmatpush1.msra.mxu0 0.0
        %3666 = vmatprep.subr.mxu0 0.0
        %3667 = vmatpush1.msra.mxu0 0.0
        %3668 = vmatprep.subr.mxu0 0.0
        %3669 = vmatpush1.msra.mxu0 0.0
        %3670 = vmatprep.subr.mxu0 0.0
        %3671 = vmatpush1.msra.mxu0 0.0
        %3672 = vmatprep.subr.mxu0 0.0
        %3673 = vmatpush1.msra.mxu0 0.0
        %3674 = vmatprep.subr.mxu0 0.0
        %3675 = vmatpush1.msra.mxu0 0.0
        %3676 = vmatprep.subr.mxu0 0.0
        %3677 = vmatpush1.msra.mxu0 0.0
        %3678 = vmatprep.subr.mxu0 0.0
        %3679 = vmatpush1.msra.mxu0 0.0
        %3680 = vmatprep.subr.mxu0 %v3589
        %3681 = vmatpush1.msra.mxu0 %v3588
        %3682 = vmatprep.subr.mxu0 %v3585
        %3683 = vmatpush1.msra.mxu0 %v3584
        %3684 = vmatprep.subr.mxu0 %v3581
        %3685 = vmatpush1.msra.mxu0 %v3580
        %3686 = vmatprep.subr.mxu0 %v3577
        %3687 = vmatpush1.msra.mxu0 %v3576
        %3688 = vmatprep.subr.mxu0 %v3573
        %3689 = vmatpush1.msra.mxu0 %v3572
        %3690 = vmatprep.subr.mxu0 %v3569
        %3691 = vmatpush1.msra.mxu0 %v3568
        %3692 = vmatprep.subr.mxu0 %v3565
        %3693 = vmatpush1.msra.mxu0 %v3564
        %3694 = vmatprep.subr.mxu0 %v3561
        %3695 = vmatpush1.msra.mxu0 %v3560
        %3696 = vmatprep.subr.mxu0 0.0
        %3697 = vmatpush2.msra.mxu0 0.0
        %3698 = vmatprep.subr.mxu0 0.0
        %3699 = vmatpush2.msra.mxu0 0.0
        %3700 = vmatprep.subr.mxu0 0.0
        %3701 = vmatpush2.msra.mxu0 0.0
        %3702 = vmatprep.subr.mxu0 0.0
        %3703 = vmatpush2.msra.mxu0 0.0
        %3704 = vmatprep.subr.mxu0 0.0
        %3705 = vmatpush2.msra.mxu0 0.0
        %3706 = vmatprep.subr.mxu0 0.0
        %3707 = vmatpush2.msra.mxu0 0.0
        %3708 = vmatprep.subr.mxu0 0.0
        %3709 = vmatpush2.msra.mxu0 0.0
        %3710 = vmatprep.subr.mxu0 0.0
        %3711 = vmatpush2.msra.mxu0 0.0
        %3712 = vmatprep.subr.mxu0 0.0
        %3713 = vmatpush2.msra.mxu0 0.0
        %3714 = vmatprep.subr.mxu0 0.0
        %3715 = vmatpush2.msra.mxu0 0.0
        %3716 = vmatprep.subr.mxu0 0.0
        %3717 = vmatpush2.msra.mxu0 0.0
        %3718 = vmatprep.subr.mxu0 0.0
        %3719 = vmatpush2.msra.mxu0 0.0
        %3720 = vmatprep.subr.mxu0 0.0
        %3721 = vmatpush2.msra.mxu0 0.0
        %3722 = vmatprep.subr.mxu0 0.0
        %3723 = vmatpush2.msra.mxu0 0.0
        %3724 = vmatprep.subr.mxu0 0.0
        %3725 = vmatpush2.msra.mxu0 0.0
        %3726 = vmatprep.subr.mxu0 0.0
        %3727 = vmatpush2.msra.mxu0 0.0
        %3728 = vmatprep.mubr.f32.mxu0 0.0
        %3729 = vmatmul.mubr.f32.gmra.mxu0 %v3591
        %v3730 = vpop.f32.mrf.mxu0
        %v3731 = vadd.f32 0.0, %v3730
        %v3732 = vpop.f32.mrf.mxu0
        %v3733 = vadd.f32 0.0, %v3732
        %3734 = vdwg.mxu0
        %v3735 = vadd.f32 %v3392, %v3660
        %v3736 = vadd.f32 %v3393, %v3662
        %v3737 = vadd.f32 %v3394, %v3731
        %v3738 = vadd.f32 %v3395, %v3733
        %3739 = vrot.lane.b32.xlu0 %v1411, 64
        %v3740 = vpop.permute.xlu0 %3739
        %3741 = vrot.lane.b32.xlu0 %v1695, 64
        %v3742 = vpop.permute.xlu0 %3741
        %v3743 = vsel %vm2010, %v3740, 0
        %v3745 = vsel %vm2010, %v3742, 0
        %3747 = vmatprep.subr.mxu0 0.0
        %3748 = vmatpush1.xpose.msra.mxu0 0.0
        %3749 = vmatprep.subr.mxu0 0.0
        %3750 = vmatpush1.xpose.msra.mxu0 0.0
        %3751 = vmatprep.subr.mxu0 0.0
        %3752 = vmatpush1.xpose.msra.mxu0 0.0
        %3753 = vmatprep.subr.mxu0 0.0
        %3754 = vmatpush1.xpose.msra.mxu0 0.0
        %3755 = vmatprep.subr.mxu0 0.0
        %3756 = vmatpush1.xpose.msra.mxu0 0.0
        %3757 = vmatprep.subr.mxu0 0.0
        %3758 = vmatpush1.xpose.msra.mxu0 0.0
        %3759 = vmatprep.subr.mxu0 0.0
        %3760 = vmatpush1.xpose.msra.mxu0 0.0
        %3761 = vmatprep.subr.mxu0 0.0
        %3762 = vmatpush1.xpose.msra.mxu0 0.0
        %3763 = vmatprep.subr.mxu0 0.0
        %3764 = vmatpush1.xpose.msra.mxu0 0.0
        %3765 = vmatprep.subr.mxu0 0.0
        %3766 = vmatpush1.xpose.msra.mxu0 0.0
        %3767 = vmatprep.subr.mxu0 0.0
        %3768 = vmatpush1.xpose.msra.mxu0 0.0
        %3769 = vmatprep.subr.mxu0 0.0
        %3770 = vmatpush1.xpose.msra.mxu0 0.0
        %3771 = vmatprep.subr.mxu0 0.0
        %3772 = vmatpush1.xpose.msra.mxu0 0.0
        %3773 = vmatprep.subr.mxu0 0.0
        %3774 = vmatpush1.xpose.msra.mxu0 0.0
        %3775 = vmatprep.subr.mxu0 0.0
        %3776 = vmatpush1.xpose.msra.mxu0 0.0
        %3777 = vmatprep.subr.mxu0 0.0
        %3778 = vmatpush1.xpose.msra.mxu0 %v3745
        %3779 = vmatprep.subr.mxu0 0.0
        %3780 = vmatpush2.xpose.msra.mxu0 0.0
        %3781 = vmatprep.subr.mxu0 0.0
        %3782 = vmatpush2.xpose.msra.mxu0 0.0
        %3783 = vmatprep.subr.mxu0 0.0
        %3784 = vmatpush2.xpose.msra.mxu0 0.0
        %3785 = vmatprep.subr.mxu0 0.0
        %3786 = vmatpush2.xpose.msra.mxu0 0.0
        %3787 = vmatprep.subr.mxu0 0.0
        %3788 = vmatpush2.xpose.msra.mxu0 0.0
        %3789 = vmatprep.subr.mxu0 0.0
        %3790 = vmatpush2.xpose.msra.mxu0 0.0
        %3791 = vmatprep.subr.mxu0 0.0
        %3792 = vmatpush2.xpose.msra.mxu0 0.0
        %3793 = vmatprep.subr.mxu0 0.0
        %3794 = vmatpush2.xpose.msra.mxu0 0.0
        %3795 = vmatprep.subr.mxu0 0.0
        %3796 = vmatpush2.xpose.msra.mxu0 0.0
        %3797 = vmatprep.subr.mxu0 0.0
        %3798 = vmatpush2.xpose.msra.mxu0 0.0
        %3799 = vmatprep.subr.mxu0 0.0
        %3800 = vmatpush2.xpose.msra.mxu0 0.0
        %3801 = vmatprep.subr.mxu0 0.0
        %3802 = vmatpush2.xpose.msra.mxu0 0.0
        %3803 = vmatprep.subr.mxu0 0.0
        %3804 = vmatpush2.xpose.msra.mxu0 0.0
        %3805 = vmatprep.subr.mxu0 0.0
        %3806 = vmatpush2.xpose.msra.mxu0 0.0
        %3807 = vmatprep.subr.mxu0 0.0
        %3808 = vmatpush2.xpose.msra.mxu0 0.0
        %3809 = vmatprep.subr.mxu0 0.0
        %3810 = vmatpush2.xpose.msra.mxu0 0.0
        %3811 = vmatprep.mubr.f32.mxu0 0.0
        %3812 = vmatmul.mubr.f32.gmra.mxu0 %v3743
        %v3813 = vpop.f32.mrf.mxu0
        %v3814 = vadd.f32 0.0, %v3813
        %v3815 = vpop.f32.mrf.mxu0
        %3816 = vdwg.mxu0
        %v3817 = vmul.f32 %v3814, 0.125
        %v3818 = vsel %vm1987, %v3817, -1e+30
        %v3819 = vsel %vm2089, %v3818, -inf
        %3820 = vmax.xlane.f32.xlu0 %v3819
        %v3821 = vpop.xlane.xlu0 %3820
        %v3822 = vsub.f32 %v3818, %v3821
        %v3823 = vmul.f32 %v3822, 1.442695
        %v3824 = vpow.pop %v3823
        %v3825 = vsel %vm2089, %v3824, 0.0
        %3826 = vadd.xlane.f32.xlu0 %v3825
        %v3827 = vpop.xlane.xlu0 %3826
        %v3828 = vrcp.pop %v3827
        %v3829 = vmul.f32 %v3824, %v3828
        %3831 = vrot.lane.b32.xlu0 %v1979, 64
        %v3832 = vpop.permute.xlu0 %3831
        %v3835 = vsel %vm2089, %v3829, 0
        %3837 = vmatprep.subr.mxu0 0.0
        %3838 = vmatpush1.msra.mxu0 0.0
        %3839 = vmatprep.subr.mxu0 0.0
        %3840 = vmatpush1.msra.mxu0 0.0
        %3841 = vmatprep.subr.mxu0 0.0
        %3842 = vmatpush1.msra.mxu0 0.0
        %3843 = vmatprep.subr.mxu0 0.0
        %3844 = vmatpush1.msra.mxu0 0.0
        %3845 = vmatprep.subr.mxu0 0.0
        %3846 = vmatpush1.msra.mxu0 0.0
        %3847 = vmatprep.subr.mxu0 0.0
        %3848 = vmatpush1.msra.mxu0 0.0
        %3849 = vmatprep.subr.mxu0 0.0
        %3850 = vmatpush1.msra.mxu0 0.0
        %3851 = vmatprep.subr.mxu0 0.0
        %3852 = vmatpush1.msra.mxu0 0.0
        %3853 = vmatprep.subr.mxu0 0.0
        %3854 = vmatpush1.msra.mxu0 0.0
        %3855 = vmatprep.subr.mxu0 0.0
        %3856 = vmatpush1.msra.mxu0 0.0
        %3857 = vmatprep.subr.mxu0 0.0
        %3858 = vmatpush1.msra.mxu0 0.0
        %3859 = vmatprep.subr.mxu0 0.0
        %3860 = vmatpush1.msra.mxu0 0.0
        %3861 = vmatprep.subr.mxu0 0.0
        %3862 = vmatpush1.msra.mxu0 0.0
        %3863 = vmatprep.subr.mxu0 0.0
        %3864 = vmatpush1.msra.mxu0 0.0
        %3865 = vmatprep.subr.mxu0 0.0
        %3866 = vmatpush1.msra.mxu0 0.0
        %3867 = vmatprep.subr.mxu0 0.0
        %3868 = vmatpush1.msra.mxu0 %v3832
        %3869 = vmatprep.subr.mxu0 0.0
        %3870 = vmatpush2.msra.mxu0 0.0
        %3871 = vmatprep.subr.mxu0 0.0
        %3872 = vmatpush2.msra.mxu0 0.0
        %3873 = vmatprep.subr.mxu0 0.0
        %3874 = vmatpush2.msra.mxu0 0.0
        %3875 = vmatprep.subr.mxu0 0.0
        %3876 = vmatpush2.msra.mxu0 0.0
        %3877 = vmatprep.subr.mxu0 0.0
        %3878 = vmatpush2.msra.mxu0 0.0
        %3879 = vmatprep.subr.mxu0 0.0
        %3880 = vmatpush2.msra.mxu0 0.0
        %3881 = vmatprep.subr.mxu0 0.0
        %3882 = vmatpush2.msra.mxu0 0.0
        %3883 = vmatprep.subr.mxu0 0.0
        %3884 = vmatpush2.msra.mxu0 0.0
        %3885 = vmatprep.subr.mxu0 0.0
        %3886 = vmatpush2.msra.mxu0 0.0
        %3887 = vmatprep.subr.mxu0 0.0
        %3888 = vmatpush2.msra.mxu0 0.0
        %3889 = vmatprep.subr.mxu0 0.0
        %3890 = vmatpush2.msra.mxu0 0.0
        %3891 = vmatprep.subr.mxu0 0.0
        %3892 = vmatpush2.msra.mxu0 0.0
        %3893 = vmatprep.subr.mxu0 0.0
        %3894 = vmatpush2.msra.mxu0 0.0
        %3895 = vmatprep.subr.mxu0 0.0
        %3896 = vmatpush2.msra.mxu0 0.0
        %3897 = vmatprep.subr.mxu0 0.0
        %3898 = vmatpush2.msra.mxu0 0.0
        %3899 = vmatprep.subr.mxu0 0.0
        %3900 = vmatpush2.msra.mxu0 0.0
        %3901 = vmatprep.mubr.f32.mxu0 0.0
        %3902 = vmatmul.mubr.f32.gmra.mxu0 %v3835
        %v3903 = vpop.f32.mrf.mxu0
        %v3904 = vadd.f32 0.0, %v3903
        %v3905 = vpop.f32.mrf.mxu0
        %3906 = vdwg.mxu0
        %v3907 = vld [vmem:[#allocation8 + $0x500] sm:$0xff]
        %v3908 = vld [vmem:[#allocation8 + $0x508] sm:$0xff]
        %v3909 = vld [vmem:[#allocation8 + $0x510] sm:$0xff]
        %v3910 = vld [vmem:[#allocation8 + $0x518] sm:$0xff]
        %v3911 = vld [vmem:[#allocation8 + $0x520] sm:$0xff]
        %v3912 = vld [vmem:[#allocation8 + $0x528] sm:$0xff]
        %v3913 = vld [vmem:[#allocation8 + $0x530] sm:$0xff]
        %v3914 = vld [vmem:[#allocation8 + $0x538] sm:$0xff]
        %v3915 = vld [vmem:[#allocation8 + $0x540] sm:$0xff]
        %v3916 = vld [vmem:[#allocation8 + $0x548] sm:$0xff]
        %v3917 = vld [vmem:[#allocation8 + $0x550] sm:$0xff]
        %v3918 = vld [vmem:[#allocation8 + $0x558] sm:$0xff]
        %v3919 = vld [vmem:[#allocation8 + $0x560] sm:$0xff]
        %v3920 = vld [vmem:[#allocation8 + $0x568] sm:$0xff]
        %v3921 = vld [vmem:[#allocation8 + $0x570] sm:$0xff]
        %v3922 = vld [vmem:[#allocation8 + $0x578] sm:$0xff]
        %v3923 = vld [vmem:[#allocation8 + $0x580] sm:$0xff]
        %v3924 = vld [vmem:[#allocation8 + $0x588] sm:$0xff]
        %v3925 = vld [vmem:[#allocation8 + $0x590] sm:$0xff]
        %v3926 = vld [vmem:[#allocation8 + $0x598] sm:$0xff]
        %v3927 = vld [vmem:[#allocation8 + $0x5a0] sm:$0xff]
        %v3928 = vld [vmem:[#allocation8 + $0x5a8] sm:$0xff]
        %v3929 = vld [vmem:[#allocation8 + $0x5b0] sm:$0xff]
        %v3930 = vld [vmem:[#allocation8 + $0x5b8] sm:$0xff]
        %v3931 = vld [vmem:[#allocation8 + $0x5c0] sm:$0xff]
        %v3932 = vld [vmem:[#allocation8 + $0x5c8] sm:$0xff]
        %v3933 = vld [vmem:[#allocation8 + $0x5d0] sm:$0xff]
        %v3934 = vld [vmem:[#allocation8 + $0x5d8] sm:$0xff]
        %v3935 = vld [vmem:[#allocation8 + $0x5e0] sm:$0xff]
        %v3936 = vld [vmem:[#allocation8 + $0x5e8] sm:$0xff]
        %v3937 = vld [vmem:[#allocation8 + $0x5f0] sm:$0xff]
        %v3938 = vld [vmem:[#allocation8 + $0x5f8] sm:$0xff]
        %v3940 = vsel %vm2010, %v3904, 0
        %3942 = vmatprep.subr.mxu0 0.0
        %3943 = vmatpush1.msra.mxu0 0.0
        %3944 = vmatprep.subr.mxu0 0.0
        %3945 = vmatpush1.msra.mxu0 0.0
        %3946 = vmatprep.subr.mxu0 0.0
        %3947 = vmatpush1.msra.mxu0 0.0
        %3948 = vmatprep.subr.mxu0 0.0
        %3949 = vmatpush1.msra.mxu0 0.0
        %3950 = vmatprep.subr.mxu0 0.0
        %3951 = vmatpush1.msra.mxu0 0.0
        %3952 = vmatprep.subr.mxu0 0.0
        %3953 = vmatpush1.msra.mxu0 0.0
        %3954 = vmatprep.subr.mxu0 0.0
        %3955 = vmatpush1.msra.mxu0 0.0
        %3956 = vmatprep.subr.mxu0 0.0
        %3957 = vmatpush1.msra.mxu0 0.0
        %3958 = vmatprep.subr.mxu0 %v3936
        %3959 = vmatpush1.msra.mxu0 %v3935
        %3960 = vmatprep.subr.mxu0 %v3932
        %3961 = vmatpush1.msra.mxu0 %v3931
        %3962 = vmatprep.subr.mxu0 %v3928
        %3963 = vmatpush1.msra.mxu0 %v3927
        %3964 = vmatprep.subr.mxu0 %v3924
        %3965 = vmatpush1.msra.mxu0 %v3923
        %3966 = vmatprep.subr.mxu0 %v3920
        %3967 = vmatpush1.msra.mxu0 %v3919
        %3968 = vmatprep.subr.mxu0 %v3916
        %3969 = vmatpush1.msra.mxu0 %v3915
        %3970 = vmatprep.subr.mxu0 %v3912
        %3971 = vmatpush1.msra.mxu0 %v3911
        %3972 = vmatprep.subr.mxu0 %v3908
        %3973 = vmatpush1.msra.mxu0 %v3907
        %3974 = vmatprep.subr.mxu0 0.0
        %3975 = vmatpush2.msra.mxu0 0.0
        %3976 = vmatprep.subr.mxu0 0.0
        %3977 = vmatpush2.msra.mxu0 0.0
        %3978 = vmatprep.subr.mxu0 0.0
        %3979 = vmatpush2.msra.mxu0 0.0
        %3980 = vmatprep.subr.mxu0 0.0
        %3981 = vmatpush2.msra.mxu0 0.0
        %3982 = vmatprep.subr.mxu0 0.0
        %3983 = vmatpush2.msra.mxu0 0.0
        %3984 = vmatprep.subr.mxu0 0.0
        %3985 = vmatpush2.msra.mxu0 0.0
        %3986 = vmatprep.subr.mxu0 0.0
        %3987 = vmatpush2.msra.mxu0 0.0
        %3988 = vmatprep.subr.mxu0 0.0
        %3989 = vmatpush2.msra.mxu0 0.0
        %3990 = vmatprep.subr.mxu0 0.0
        %3991 = vmatpush2.msra.mxu0 0.0
        %3992 = vmatprep.subr.mxu0 0.0
        %3993 = vmatpush2.msra.mxu0 0.0
        %3994 = vmatprep.subr.mxu0 0.0
        %3995 = vmatpush2.msra.mxu0 0.0
        %3996 = vmatprep.subr.mxu0 0.0
        %3997 = vmatpush2.msra.mxu0 0.0
        %3998 = vmatprep.subr.mxu0 0.0
        %3999 = vmatpush2.msra.mxu0 0.0
        %4000 = vmatprep.subr.mxu0 0.0
        %4001 = vmatpush2.msra.mxu0 0.0
        %4002 = vmatprep.subr.mxu0 0.0
        %4003 = vmatpush2.msra.mxu0 0.0
        %4004 = vmatprep.subr.mxu0 0.0
        %4005 = vmatpush2.msra.mxu0 0.0
        %4006 = vmatprep.mubr.f32.mxu0 0.0
        %4007 = vmatmul.mubr.f32.gmra.mxu0 %v3940
        %v4008 = vpop.f32.mrf.mxu0
        %v4009 = vadd.f32 0.0, %v4008
        %v4010 = vpop.f32.mrf.mxu0
        %v4011 = vadd.f32 0.0, %v4010
        %4012 = vdwg.mxu0
        %4013 = vmatprep.subr.mxu0 0.0
        %4014 = vmatpush1.msra.mxu0 0.0
        %4015 = vmatprep.subr.mxu0 0.0
        %4016 = vmatpush1.msra.mxu0 0.0
        %4017 = vmatprep.subr.mxu0 0.0
        %4018 = vmatpush1.msra.mxu0 0.0
        %4019 = vmatprep.subr.mxu0 0.0
        %4020 = vmatpush1.msra.mxu0 0.0
        %4021 = vmatprep.subr.mxu0 0.0
        %4022 = vmatpush1.msra.mxu0 0.0
        %4023 = vmatprep.subr.mxu0 0.0
        %4024 = vmatpush1.msra.mxu0 0.0
        %4025 = vmatprep.subr.mxu0 0.0
        %4026 = vmatpush1.msra.mxu0 0.0
        %4027 = vmatprep.subr.mxu0 0.0
        %4028 = vmatpush1.msra.mxu0 0.0
        %4029 = vmatprep.subr.mxu0 %v3938
        %4030 = vmatpush1.msra.mxu0 %v3937
        %4031 = vmatprep.subr.mxu0 %v3934
        %4032 = vmatpush1.msra.mxu0 %v3933
        %4033 = vmatprep.subr.mxu0 %v3930
        %4034 = vmatpush1.msra.mxu0 %v3929
        %4035 = vmatprep.subr.mxu0 %v3926
        %4036 = vmatpush1.msra.mxu0 %v3925
        %4037 = vmatprep.subr.mxu0 %v3922
        %4038 = vmatpush1.msra.mxu0 %v3921
        %4039 = vmatprep.subr.mxu0 %v3918
        %4040 = vmatpush1.msra.mxu0 %v3917
        %4041 = vmatprep.subr.mxu0 %v3914
        %4042 = vmatpush1.msra.mxu0 %v3913
        %4043 = vmatprep.subr.mxu0 %v3910
        %4044 = vmatpush1.msra.mxu0 %v3909
        %4045 = vmatprep.subr.mxu0 0.0
        %4046 = vmatpush2.msra.mxu0 0.0
        %4047 = vmatprep.subr.mxu0 0.0
        %4048 = vmatpush2.msra.mxu0 0.0
        %4049 = vmatprep.subr.mxu0 0.0
        %4050 = vmatpush2.msra.mxu0 0.0
        %4051 = vmatprep.subr.mxu0 0.0
        %4052 = vmatpush2.msra.mxu0 0.0
        %4053 = vmatprep.subr.mxu0 0.0
        %4054 = vmatpush2.msra.mxu0 0.0
        %4055 = vmatprep.subr.mxu0 0.0
        %4056 = vmatpush2.msra.mxu0 0.0
        %4057 = vmatprep.subr.mxu0 0.0
        %4058 = vmatpush2.msra.mxu0 0.0
        %4059 = vmatprep.subr.mxu0 0.0
        %4060 = vmatpush2.msra.mxu0 0.0
        %4061 = vmatprep.subr.mxu0 0.0
        %4062 = vmatpush2.msra.mxu0 0.0
        %4063 = vmatprep.subr.mxu0 0.0
        %4064 = vmatpush2.msra.mxu0 0.0
        %4065 = vmatprep.subr.mxu0 0.0
        %4066 = vmatpush2.msra.mxu0 0.0
        %4067 = vmatprep.subr.mxu0 0.0
        %4068 = vmatpush2.msra.mxu0 0.0
        %4069 = vmatprep.subr.mxu0 0.0
        %4070 = vmatpush2.msra.mxu0 0.0
        %4071 = vmatprep.subr.mxu0 0.0
        %4072 = vmatpush2.msra.mxu0 0.0
        %4073 = vmatprep.subr.mxu0 0.0
        %4074 = vmatpush2.msra.mxu0 0.0
        %4075 = vmatprep.subr.mxu0 0.0
        %4076 = vmatpush2.msra.mxu0 0.0
        %4077 = vmatprep.mubr.f32.mxu0 0.0
        %4078 = vmatmul.mubr.f32.gmra.mxu0 %v3940
        %v4079 = vpop.f32.mrf.mxu0
        %v4080 = vadd.f32 0.0, %v4079
        %v4081 = vpop.f32.mrf.mxu0
        %v4082 = vadd.f32 0.0, %v4081
        %4083 = vdwg.mxu0
        %v4084 = vadd.f32 %v3735, %v4009
        %v4085 = vadd.f32 %v3736, %v4011
        %v4086 = vadd.f32 %v3737, %v4080
        %v4087 = vadd.f32 %v3738, %v4082
        %v4089 = vsel %vm2010, %v1413, 0
        %v4092 = vsel %vm2010, %v1697, 0
        %4094 = vmatprep.subr.mxu0 0.0
        %4095 = vmatpush1.xpose.msra.mxu0 0.0
        %4096 = vmatprep.subr.mxu0 0.0
        %4097 = vmatpush1.xpose.msra.mxu0 0.0
        %4098 = vmatprep.subr.mxu0 0.0
        %4099 = vmatpush1.xpose.msra.mxu0 0.0
        %4100 = vmatprep.subr.mxu0 0.0
        %4101 = vmatpush1.xpose.msra.mxu0 0.0
        %4102 = vmatprep.subr.mxu0 0.0
        %4103 = vmatpush1.xpose.msra.mxu0 0.0
        %4104 = vmatprep.subr.mxu0 0.0
        %4105 = vmatpush1.xpose.msra.mxu0 0.0
        %4106 = vmatprep.subr.mxu0 0.0
        %4107 = vmatpush1.xpose.msra.mxu0 0.0
        %4108 = vmatprep.subr.mxu0 0.0
        %4109 = vmatpush1.xpose.msra.mxu0 0.0
        %4110 = vmatprep.subr.mxu0 0.0
        %4111 = vmatpush1.xpose.msra.mxu0 0.0
        %4112 = vmatprep.subr.mxu0 0.0
        %4113 = vmatpush1.xpose.msra.mxu0 0.0
        %4114 = vmatprep.subr.mxu0 0.0
        %4115 = vmatpush1.xpose.msra.mxu0 0.0
        %4116 = vmatprep.subr.mxu0 0.0
        %4117 = vmatpush1.xpose.msra.mxu0 0.0
        %4118 = vmatprep.subr.mxu0 0.0
        %4119 = vmatpush1.xpose.msra.mxu0 0.0
        %4120 = vmatprep.subr.mxu0 0.0
        %4121 = vmatpush1.xpose.msra.mxu0 0.0
        %4122 = vmatprep.subr.mxu0 0.0
        %4123 = vmatpush1.xpose.msra.mxu0 0.0
        %4124 = vmatprep.subr.mxu0 0.0
        %4125 = vmatpush1.xpose.msra.mxu0 %v4092
        %4126 = vmatprep.subr.mxu0 0.0
        %4127 = vmatpush2.xpose.msra.mxu0 0.0
        %4128 = vmatprep.subr.mxu0 0.0
        %4129 = vmatpush2.xpose.msra.mxu0 0.0
        %4130 = vmatprep.subr.mxu0 0.0
        %4131 = vmatpush2.xpose.msra.mxu0 0.0
        %4132 = vmatprep.subr.mxu0 0.0
        %4133 = vmatpush2.xpose.msra.mxu0 0.0
        %4134 = vmatprep.subr.mxu0 0.0
        %4135 = vmatpush2.xpose.msra.mxu0 0.0
        %4136 = vmatprep.subr.mxu0 0.0
        %4137 = vmatpush2.xpose.msra.mxu0 0.0
        %4138 = vmatprep.subr.mxu0 0.0
        %4139 = vmatpush2.xpose.msra.mxu0 0.0
        %4140 = vmatprep.subr.mxu0 0.0
        %4141 = vmatpush2.xpose.msra.mxu0 0.0
        %4142 = vmatprep.subr.mxu0 0.0
        %4143 = vmatpush2.xpose.msra.mxu0 0.0
        %4144 = vmatprep.subr.mxu0 0.0
        %4145 = vmatpush2.xpose.msra.mxu0 0.0
        %4146 = vmatprep.subr.mxu0 0.0
        %4147 = vmatpush2.xpose.msra.mxu0 0.0
        %4148 = vmatprep.subr.mxu0 0.0
        %4149 = vmatpush2.xpose.msra.mxu0 0.0
        %4150 = vmatprep.subr.mxu0 0.0
        %4151 = vmatpush2.xpose.msra.mxu0 0.0
        %4152 = vmatprep.subr.mxu0 0.0
        %4153 = vmatpush2.xpose.msra.mxu0 0.0
        %4154 = vmatprep.subr.mxu0 0.0
        %4155 = vmatpush2.xpose.msra.mxu0 0.0
        %4156 = vmatprep.subr.mxu0 0.0
        %4157 = vmatpush2.xpose.msra.mxu0 0.0
        %4158 = vmatprep.mubr.f32.mxu0 0.0
        %4159 = vmatmul.mubr.f32.gmra.mxu0 %v4089
        %v4160 = vpop.f32.mrf.mxu0
        %v4161 = vadd.f32 0.0, %v4160
        %v4162 = vpop.f32.mrf.mxu0
        %4163 = vdwg.mxu0
        %v4164 = vmul.f32 %v4161, 0.125
        %v4165 = vsel %vm1987, %v4164, -1e+30
        %v4166 = vsel %vm2089, %v4165, -inf
        %4167 = vmax.xlane.f32.xlu0 %v4166
        %v4168 = vpop.xlane.xlu0 %4167
        %v4169 = vsub.f32 %v4165, %v4168
        %v4170 = vmul.f32 %v4169, 1.442695
        %v4171 = vpow.pop %v4170
        %v4172 = vsel %vm2089, %v4171, 0.0
        %4173 = vadd.xlane.f32.xlu0 %v4172
        %v4174 = vpop.xlane.xlu0 %4173
        %v4175 = vrcp.pop %v4174
        %v4176 = vmul.f32 %v4171, %v4175
        %v4178 = vsel %vm2089, %v4176, 0
        %4180 = vmatprep.subr.mxu0 0.0
        %4181 = vmatpush1.msra.mxu0 0.0
        %4182 = vmatprep.subr.mxu0 0.0
        %4183 = vmatpush1.msra.mxu0 0.0
        %4184 = vmatprep.subr.mxu0 0.0
        %4185 = vmatpush1.msra.mxu0 0.0
        %4186 = vmatprep.subr.mxu0 0.0
        %4187 = vmatpush1.msra.mxu0 0.0
        %4188 = vmatprep.subr.mxu0 0.0
        %4189 = vmatpush1.msra.mxu0 0.0
        %4190 = vmatprep.subr.mxu0 0.0
        %4191 = vmatpush1.msra.mxu0 0.0
        %4192 = vmatprep.subr.mxu0 0.0
        %4193 = vmatpush1.msra.mxu0 0.0
        %4194 = vmatprep.subr.mxu0 0.0
        %4195 = vmatpush1.msra.mxu0 0.0
        %4196 = vmatprep.subr.mxu0 0.0
        %4197 = vmatpush1.msra.mxu0 0.0
        %4198 = vmatprep.subr.mxu0 0.0
        %4199 = vmatpush1.msra.mxu0 0.0
        %4200 = vmatprep.subr.mxu0 0.0
        %4201 = vmatpush1.msra.mxu0 0.0
        %4202 = vmatprep.subr.mxu0 0.0
        %4203 = vmatpush1.msra.mxu0 0.0
        %4204 = vmatprep.subr.mxu0 0.0
        %4205 = vmatpush1.msra.mxu0 0.0
        %4206 = vmatprep.subr.mxu0 0.0
        %4207 = vmatpush1.msra.mxu0 0.0
        %4208 = vmatprep.subr.mxu0 0.0
        %4209 = vmatpush1.msra.mxu0 0.0
        %4210 = vmatprep.subr.mxu0 0.0
        %4211 = vmatpush1.msra.mxu0 %v1981
        %4212 = vmatprep.subr.mxu0 0.0
        %4213 = vmatpush2.msra.mxu0 0.0
        %4214 = vmatprep.subr.mxu0 0.0
        %4215 = vmatpush2.msra.mxu0 0.0
        %4216 = vmatprep.subr.mxu0 0.0
        %4217 = vmatpush2.msra.mxu0 0.0
        %4218 = vmatprep.subr.mxu0 0.0
        %4219 = vmatpush2.msra.mxu0 0.0
        %4220 = vmatprep.subr.mxu0 0.0
        %4221 = vmatpush2.msra.mxu0 0.0
        %4222 = vmatprep.subr.mxu0 0.0
        %4223 = vmatpush2.msra.mxu0 0.0
        %4224 = vmatprep.subr.mxu0 0.0
        %4225 = vmatpush2.msra.mxu0 0.0
        %4226 = vmatprep.subr.mxu0 0.0
        %4227 = vmatpush2.msra.mxu0 0.0
        %4228 = vmatprep.subr.mxu0 0.0
        %4229 = vmatpush2.msra.mxu0 0.0
        %4230 = vmatprep.subr.mxu0 0.0
        %4231 = vmatpush2.msra.mxu0 0.0
        %4232 = vmatprep.subr.mxu0 0.0
        %4233 = vmatpush2.msra.mxu0 0.0
        %4234 = vmatprep.subr.mxu0 0.0
        %4235 = vmatpush2.msra.mxu0 0.0
        %4236 = vmatprep.subr.mxu0 0.0
        %4237 = vmatpush2.msra.mxu0 0.0
        %4238 = vmatprep.subr.mxu0 0.0
        %4239 = vmatpush2.msra.mxu0 0.0
        %4240 = vmatprep.subr.mxu0 0.0
        %4241 = vmatpush2.msra.mxu0 0.0
        %4242 = vmatprep.subr.mxu0 0.0
        %4243 = vmatpush2.msra.mxu0 0.0
        %4244 = vmatprep.mubr.f32.mxu0 0.0
        %4245 = vmatmul.mubr.f32.gmra.mxu0 %v4178
        %v4246 = vpop.f32.mrf.mxu0
        %v4247 = vadd.f32 0.0, %v4246
        %v4248 = vpop.f32.mrf.mxu0
        %4249 = vdwg.mxu0
        %v4250 = vld [vmem:[#allocation8 + $0x600] sm:$0xff]
        %v4251 = vld [vmem:[#allocation8 + $0x608] sm:$0xff]
        %v4252 = vld [vmem:[#allocation8 + $0x610] sm:$0xff]
        %v4253 = vld [vmem:[#allocation8 + $0x618] sm:$0xff]
        %v4254 = vld [vmem:[#allocation8 + $0x620] sm:$0xff]
        %v4255 = vld [vmem:[#allocation8 + $0x628] sm:$0xff]
        %v4256 = vld [vmem:[#allocation8 + $0x630] sm:$0xff]
        %v4257 = vld [vmem:[#allocation8 + $0x638] sm:$0xff]
        %v4258 = vld [vmem:[#allocation8 + $0x640] sm:$0xff]
        %v4259 = vld [vmem:[#allocation8 + $0x648] sm:$0xff]
        %v4260 = vld [vmem:[#allocation8 + $0x650] sm:$0xff]
        %v4261 = vld [vmem:[#allocation8 + $0x658] sm:$0xff]
        %v4262 = vld [vmem:[#allocation8 + $0x660] sm:$0xff]
        %v4263 = vld [vmem:[#allocation8 + $0x668] sm:$0xff]
        %v4264 = vld [vmem:[#allocation8 + $0x670] sm:$0xff]
        %v4265 = vld [vmem:[#allocation8 + $0x678] sm:$0xff]
        %v4266 = vld [vmem:[#allocation8 + $0x680] sm:$0xff]
        %v4267 = vld [vmem:[#allocation8 + $0x688] sm:$0xff]
        %v4268 = vld [vmem:[#allocation8 + $0x690] sm:$0xff]
        %v4269 = vld [vmem:[#allocation8 + $0x698] sm:$0xff]
        %v4270 = vld [vmem:[#allocation8 + $0x6a0] sm:$0xff]
        %v4271 = vld [vmem:[#allocation8 + $0x6a8] sm:$0xff]
        %v4272 = vld [vmem:[#allocation8 + $0x6b0] sm:$0xff]
        %v4273 = vld [vmem:[#allocation8 + $0x6b8] sm:$0xff]
        %v4274 = vld [vmem:[#allocation8 + $0x6c0] sm:$0xff]
        %v4275 = vld [vmem:[#allocation8 + $0x6c8] sm:$0xff]
        %v4276 = vld [vmem:[#allocation8 + $0x6d0] sm:$0xff]
        %v4277 = vld [vmem:[#allocation8 + $0x6d8] sm:$0xff]
        %v4278 = vld [vmem:[#allocation8 + $0x6e0] sm:$0xff]
        %v4279 = vld [vmem:[#allocation8 + $0x6e8] sm:$0xff]
        %v4280 = vld [vmem:[#allocation8 + $0x6f0] sm:$0xff]
        %v4281 = vld [vmem:[#allocation8 + $0x6f8] sm:$0xff]
        %v4283 = vsel %vm2010, %v4247, 0
        %4285 = vmatprep.subr.mxu0 0.0
        %4286 = vmatpush1.msra.mxu0 0.0
        %4287 = vmatprep.subr.mxu0 0.0
        %4288 = vmatpush1.msra.mxu0 0.0
        %4289 = vmatprep.subr.mxu0 0.0
        %4290 = vmatpush1.msra.mxu0 0.0
        %4291 = vmatprep.subr.mxu0 0.0
        %4292 = vmatpush1.msra.mxu0 0.0
        %4293 = vmatprep.subr.mxu0 0.0
        %4294 = vmatpush1.msra.mxu0 0.0
        %4295 = vmatprep.subr.mxu0 0.0
        %4296 = vmatpush1.msra.mxu0 0.0
        %4297 = vmatprep.subr.mxu0 0.0
        %4298 = vmatpush1.msra.mxu0 0.0
        %4299 = vmatprep.subr.mxu0 0.0
        %4300 = vmatpush1.msra.mxu0 0.0
        %4301 = vmatprep.subr.mxu0 %v4279
        %4302 = vmatpush1.msra.mxu0 %v4278
        %4303 = vmatprep.subr.mxu0 %v4275
        %4304 = vmatpush1.msra.mxu0 %v4274
        %4305 = vmatprep.subr.mxu0 %v4271
        %4306 = vmatpush1.msra.mxu0 %v4270
        %4307 = vmatprep.subr.mxu0 %v4267
        %4308 = vmatpush1.msra.mxu0 %v4266
        %4309 = vmatprep.subr.mxu0 %v4263
        %4310 = vmatpush1.msra.mxu0 %v4262
        %4311 = vmatprep.subr.mxu0 %v4259
        %4312 = vmatpush1.msra.mxu0 %v4258
        %4313 = vmatprep.subr.mxu0 %v4255
        %4314 = vmatpush1.msra.mxu0 %v4254
        %4315 = vmatprep.subr.mxu0 %v4251
        %4316 = vmatpush1.msra.mxu0 %v4250
        %4317 = vmatprep.subr.mxu0 0.0
        %4318 = vmatpush2.msra.mxu0 0.0
        %4319 = vmatprep.subr.mxu0 0.0
        %4320 = vmatpush2.msra.mxu0 0.0
        %4321 = vmatprep.subr.mxu0 0.0
        %4322 = vmatpush2.msra.mxu0 0.0
        %4323 = vmatprep.subr.mxu0 0.0
        %4324 = vmatpush2.msra.mxu0 0.0
        %4325 = vmatprep.subr.mxu0 0.0
        %4326 = vmatpush2.msra.mxu0 0.0
        %4327 = vmatprep.subr.mxu0 0.0
        %4328 = vmatpush2.msra.mxu0 0.0
        %4329 = vmatprep.subr.mxu0 0.0
        %4330 = vmatpush2.msra.mxu0 0.0
        %4331 = vmatprep.subr.mxu0 0.0
        %4332 = vmatpush2.msra.mxu0 0.0
        %4333 = vmatprep.subr.mxu0 0.0
        %4334 = vmatpush2.msra.mxu0 0.0
        %4335 = vmatprep.subr.mxu0 0.0
        %4336 = vmatpush2.msra.mxu0 0.0
        %4337 = vmatprep.subr.mxu0 0.0
        %4338 = vmatpush2.msra.mxu0 0.0
        %4339 = vmatprep.subr.mxu0 0.0
        %4340 = vmatpush2.msra.mxu0 0.0
        %4341 = vmatprep.subr.mxu0 0.0
        %4342 = vmatpush2.msra.mxu0 0.0
        %4343 = vmatprep.subr.mxu0 0.0
        %4344 = vmatpush2.msra.mxu0 0.0
        %4345 = vmatprep.subr.mxu0 0.0
        %4346 = vmatpush2.msra.mxu0 0.0
        %4347 = vmatprep.subr.mxu0 0.0
        %4348 = vmatpush2.msra.mxu0 0.0
        %4349 = vmatprep.mubr.f32.mxu0 0.0
        %4350 = vmatmul.mubr.f32.gmra.mxu0 %v4283
        %v4351 = vpop.f32.mrf.mxu0
        %v4352 = vadd.f32 0.0, %v4351
        %v4353 = vpop.f32.mrf.mxu0
        %v4354 = vadd.f32 0.0, %v4353
        %4355 = vdwg.mxu0
        %4356 = vmatprep.subr.mxu0 0.0
        %4357 = vmatpush1.msra.mxu0 0.0
        %4358 = vmatprep.subr.mxu0 0.0
        %4359 = vmatpush1.msra.mxu0 0.0
        %4360 = vmatprep.subr.mxu0 0.0
        %4361 = vmatpush1.msra.mxu0 0.0
        %4362 = vmatprep.subr.mxu0 0.0
        %4363 = vmatpush1.msra.mxu0 0.0
        %4364 = vmatprep.subr.mxu0 0.0
        %4365 = vmatpush1.msra.mxu0 0.0
        %4366 = vmatprep.subr.mxu0 0.0
        %4367 = vmatpush1.msra.mxu0 0.0
        %4368 = vmatprep.subr.mxu0 0.0
        %4369 = vmatpush1.msra.mxu0 0.0
        %4370 = vmatprep.subr.mxu0 0.0
        %4371 = vmatpush1.msra.mxu0 0.0
        %4372 = vmatprep.subr.mxu0 %v4281
        %4373 = vmatpush1.msra.mxu0 %v4280
        %4374 = vmatprep.subr.mxu0 %v4277
        %4375 = vmatpush1.msra.mxu0 %v4276
        %4376 = vmatprep.subr.mxu0 %v4273
        %4377 = vmatpush1.msra.mxu0 %v4272
        %4378 = vmatprep.subr.mxu0 %v4269
        %4379 = vmatpush1.msra.mxu0 %v4268
        %4380 = vmatprep.subr.mxu0 %v4265
        %4381 = vmatpush1.msra.mxu0 %v4264
        %4382 = vmatprep.subr.mxu0 %v4261
        %4383 = vmatpush1.msra.mxu0 %v4260
        %4384 = vmatprep.subr.mxu0 %v4257
        %4385 = vmatpush1.msra.mxu0 %v4256
        %4386 = vmatprep.subr.mxu0 %v4253
        %4387 = vmatpush1.msra.mxu0 %v4252
        %4388 = vmatprep.subr.mxu0 0.0
        %4389 = vmatpush2.msra.mxu0 0.0
        %4390 = vmatprep.subr.mxu0 0.0
        %4391 = vmatpush2.msra.mxu0 0.0
        %4392 = vmatprep.subr.mxu0 0.0
        %4393 = vmatpush2.msra.mxu0 0.0
        %4394 = vmatprep.subr.mxu0 0.0
        %4395 = vmatpush2.msra.mxu0 0.0
        %4396 = vmatprep.subr.mxu0 0.0
        %4397 = vmatpush2.msra.mxu0 0.0
        %4398 = vmatprep.subr.mxu0 0.0
        %4399 = vmatpush2.msra.mxu0 0.0
        %4400 = vmatprep.subr.mxu0 0.0
        %4401 = vmatpush2.msra.mxu0 0.0
        %4402 = vmatprep.subr.mxu0 0.0
        %4403 = vmatpush2.msra.mxu0 0.0
        %4404 = vmatprep.subr.mxu0 0.0
        %4405 = vmatpush2.msra.mxu0 0.0
        %4406 = vmatprep.subr.mxu0 0.0
        %4407 = vmatpush2.msra.mxu0 0.0
        %4408 = vmatprep.subr.mxu0 0.0
        %4409 = vmatpush2.msra.mxu0 0.0
        %4410 = vmatprep.subr.mxu0 0.0
        %4411 = vmatpush2.msra.mxu0 0.0
        %4412 = vmatprep.subr.mxu0 0.0
        %4413 = vmatpush2.msra.mxu0 0.0
        %4414 = vmatprep.subr.mxu0 0.0
        %4415 = vmatpush2.msra.mxu0 0.0
        %4416 = vmatprep.subr.mxu0 0.0
        %4417 = vmatpush2.msra.mxu0 0.0
        %4418 = vmatprep.subr.mxu0 0.0
        %4419 = vmatpush2.msra.mxu0 0.0
        %4420 = vmatprep.mubr.f32.mxu0 0.0
        %4421 = vmatmul.mubr.f32.gmra.mxu0 %v4283
        %v4422 = vpop.f32.mrf.mxu0
        %v4423 = vadd.f32 0.0, %v4422
        %v4424 = vpop.f32.mrf.mxu0
        %v4425 = vadd.f32 0.0, %v4424
        %4426 = vdwg.mxu0
        %v4427 = vadd.f32 %v4084, %v4352
        %v4428 = vadd.f32 %v4085, %v4354
        %v4429 = vadd.f32 %v4086, %v4423
        %v4430 = vadd.f32 %v4087, %v4425
        %4431 = vrot.lane.b32.xlu0 %v1413, 64
        %v4432 = vpop.permute.xlu0 %4431
        %4433 = vrot.lane.b32.xlu0 %v1697, 64
        %v4434 = vpop.permute.xlu0 %4433
        %v4435 = vsel %vm2010, %v4432, 0
        %v4437 = vsel %vm2010, %v4434, 0
        %4439 = vmatprep.subr.mxu0 0.0
        %4440 = vmatpush1.xpose.msra.mxu0 0.0
        %4441 = vmatprep.subr.mxu0 0.0
        %4442 = vmatpush1.xpose.msra.mxu0 0.0
        %4443 = vmatprep.subr.mxu0 0.0
        %4444 = vmatpush1.xpose.msra.mxu0 0.0
        %4445 = vmatprep.subr.mxu0 0.0
        %4446 = vmatpush1.xpose.msra.mxu0 0.0
        %4447 = vmatprep.subr.mxu0 0.0
        %4448 = vmatpush1.xpose.msra.mxu0 0.0
        %4449 = vmatprep.subr.mxu0 0.0
        %4450 = vmatpush1.xpose.msra.mxu0 0.0
        %4451 = vmatprep.subr.mxu0 0.0
        %4452 = vmatpush1.xpose.msra.mxu0 0.0
        %4453 = vmatprep.subr.mxu0 0.0
        %4454 = vmatpush1.xpose.msra.mxu0 0.0
        %4455 = vmatprep.subr.mxu0 0.0
        %4456 = vmatpush1.xpose.msra.mxu0 0.0
        %4457 = vmatprep.subr.mxu0 0.0
        %4458 = vmatpush1.xpose.msra.mxu0 0.0
        %4459 = vmatprep.subr.mxu0 0.0
        %4460 = vmatpush1.xpose.msra.mxu0 0.0
        %4461 = vmatprep.subr.mxu0 0.0
        %4462 = vmatpush1.xpose.msra.mxu0 0.0
        %4463 = vmatprep.subr.mxu0 0.0
        %4464 = vmatpush1.xpose.msra.mxu0 0.0
        %4465 = vmatprep.subr.mxu0 0.0
        %4466 = vmatpush1.xpose.msra.mxu0 0.0
        %4467 = vmatprep.subr.mxu0 0.0
        %4468 = vmatpush1.xpose.msra.mxu0 0.0
        %4469 = vmatprep.subr.mxu0 0.0
        %4470 = vmatpush1.xpose.msra.mxu0 %v4437
        %4471 = vmatprep.subr.mxu0 0.0
        %4472 = vmatpush2.xpose.msra.mxu0 0.0
        %4473 = vmatprep.subr.mxu0 0.0
        %4474 = vmatpush2.xpose.msra.mxu0 0.0
        %4475 = vmatprep.subr.mxu0 0.0
        %4476 = vmatpush2.xpose.msra.mxu0 0.0
        %4477 = vmatprep.subr.mxu0 0.0
        %4478 = vmatpush2.xpose.msra.mxu0 0.0
        %4479 = vmatprep.subr.mxu0 0.0
        %4480 = vmatpush2.xpose.msra.mxu0 0.0
        %4481 = vmatprep.subr.mxu0 0.0
        %4482 = vmatpush2.xpose.msra.mxu0 0.0
        %4483 = vmatprep.subr.mxu0 0.0
        %4484 = vmatpush2.xpose.msra.mxu0 0.0
        %4485 = vmatprep.subr.mxu0 0.0
        %4486 = vmatpush2.xpose.msra.mxu0 0.0
        %4487 = vmatprep.subr.mxu0 0.0
        %4488 = vmatpush2.xpose.msra.mxu0 0.0
        %4489 = vmatprep.subr.mxu0 0.0
        %4490 = vmatpush2.xpose.msra.mxu0 0.0
        %4491 = vmatprep.subr.mxu0 0.0
        %4492 = vmatpush2.xpose.msra.mxu0 0.0
        %4493 = vmatprep.subr.mxu0 0.0
        %4494 = vmatpush2.xpose.msra.mxu0 0.0
        %4495 = vmatprep.subr.mxu0 0.0
        %4496 = vmatpush2.xpose.msra.mxu0 0.0
        %4497 = vmatprep.subr.mxu0 0.0
        %4498 = vmatpush2.xpose.msra.mxu0 0.0
        %4499 = vmatprep.subr.mxu0 0.0
        %4500 = vmatpush2.xpose.msra.mxu0 0.0
        %4501 = vmatprep.subr.mxu0 0.0
        %4502 = vmatpush2.xpose.msra.mxu0 0.0
        %4503 = vmatprep.mubr.f32.mxu0 0.0
        %4504 = vmatmul.mubr.f32.gmra.mxu0 %v4435
        %v4505 = vpop.f32.mrf.mxu0
        %v4506 = vadd.f32 0.0, %v4505
        %v4507 = vpop.f32.mrf.mxu0
        %4508 = vdwg.mxu0
        %v4509 = vmul.f32 %v4506, 0.125
        %v4510 = vsel %vm1987, %v4509, -1e+30
        %v4511 = vsel %vm2089, %v4510, -inf
        %4512 = vmax.xlane.f32.xlu0 %v4511
        %v4513 = vpop.xlane.xlu0 %4512
        %v4514 = vsub.f32 %v4510, %v4513
        %v4515 = vmul.f32 %v4514, 1.442695
        %v4516 = vpow.pop %v4515
        %v4517 = vsel %vm2089, %v4516, 0.0
        %4518 = vadd.xlane.f32.xlu0 %v4517
        %v4519 = vpop.xlane.xlu0 %4518
        %v4520 = vrcp.pop %v4519
        %v4521 = vmul.f32 %v4516, %v4520
        %4523 = vrot.lane.b32.xlu0 %v1981, 64
        %v4524 = vpop.permute.xlu0 %4523
        %v4527 = vsel %vm2089, %v4521, 0
        %4529 = vmatprep.subr.mxu0 0.0
        %4530 = vmatpush1.msra.mxu0 0.0
        %4531 = vmatprep.subr.mxu0 0.0
        %4532 = vmatpush1.msra.mxu0 0.0
        %4533 = vmatprep.subr.mxu0 0.0
        %4534 = vmatpush1.msra.mxu0 0.0
        %4535 = vmatprep.subr.mxu0 0.0
        %4536 = vmatpush1.msra.mxu0 0.0
        %4537 = vmatprep.subr.mxu0 0.0
        %4538 = vmatpush1.msra.mxu0 0.0
        %4539 = vmatprep.subr.mxu0 0.0
        %4540 = vmatpush1.msra.mxu0 0.0
        %4541 = vmatprep.subr.mxu0 0.0
        %4542 = vmatpush1.msra.mxu0 0.0
        %4543 = vmatprep.subr.mxu0 0.0
        %4544 = vmatpush1.msra.mxu0 0.0
        %4545 = vmatprep.subr.mxu0 0.0
        %4546 = vmatpush1.msra.mxu0 0.0
        %4547 = vmatprep.subr.mxu0 0.0
        %4548 = vmatpush1.msra.mxu0 0.0
        %4549 = vmatprep.subr.mxu0 0.0
        %4550 = vmatpush1.msra.mxu0 0.0
        %4551 = vmatprep.subr.mxu0 0.0
        %4552 = vmatpush1.msra.mxu0 0.0
        %4553 = vmatprep.subr.mxu0 0.0
        %4554 = vmatpush1.msra.mxu0 0.0
        %4555 = vmatprep.subr.mxu0 0.0
        %4556 = vmatpush1.msra.mxu0 0.0
        %4557 = vmatprep.subr.mxu0 0.0
        %4558 = vmatpush1.msra.mxu0 0.0
        %4559 = vmatprep.subr.mxu0 0.0
        %4560 = vmatpush1.msra.mxu0 %v4524
        %4561 = vmatprep.subr.mxu0 0.0
        %4562 = vmatpush2.msra.mxu0 0.0
        %4563 = vmatprep.subr.mxu0 0.0
        %4564 = vmatpush2.msra.mxu0 0.0
        %4565 = vmatprep.subr.mxu0 0.0
        %4566 = vmatpush2.msra.mxu0 0.0
        %4567 = vmatprep.subr.mxu0 0.0
        %4568 = vmatpush2.msra.mxu0 0.0
        %4569 = vmatprep.subr.mxu0 0.0
        %4570 = vmatpush2.msra.mxu0 0.0
        %4571 = vmatprep.subr.mxu0 0.0
        %4572 = vmatpush2.msra.mxu0 0.0
        %4573 = vmatprep.subr.mxu0 0.0
        %4574 = vmatpush2.msra.mxu0 0.0
        %4575 = vmatprep.subr.mxu0 0.0
        %4576 = vmatpush2.msra.mxu0 0.0
        %4577 = vmatprep.subr.mxu0 0.0
        %4578 = vmatpush2.msra.mxu0 0.0
        %4579 = vmatprep.subr.mxu0 0.0
        %4580 = vmatpush2.msra.mxu0 0.0
        %4581 = vmatprep.subr.mxu0 0.0
        %4582 = vmatpush2.msra.mxu0 0.0
        %4583 = vmatprep.subr.mxu0 0.0
        %4584 = vmatpush2.msra.mxu0 0.0
        %4585 = vmatprep.subr.mxu0 0.0
        %4586 = vmatpush2.msra.mxu0 0.0
        %4587 = vmatprep.subr.mxu0 0.0
        %4588 = vmatpush2.msra.mxu0 0.0
        %4589 = vmatprep.subr.mxu0 0.0
        %4590 = vmatpush2.msra.mxu0 0.0
        %4591 = vmatprep.subr.mxu0 0.0
        %4592 = vmatpush2.msra.mxu0 0.0
        %4593 = vmatprep.mubr.f32.mxu0 0.0
        %4594 = vmatmul.mubr.f32.gmra.mxu0 %v4527
        %v4595 = vpop.f32.mrf.mxu0
        %v4596 = vadd.f32 0.0, %v4595
        %v4597 = vpop.f32.mrf.mxu0
        %4598 = vdwg.mxu0
        %v4599 = vld [vmem:[#allocation8 + $0x700] sm:$0xff]
        %v4600 = vld [vmem:[#allocation8 + $0x708] sm:$0xff]
        %v4601 = vld [vmem:[#allocation8 + $0x710] sm:$0xff]
        %v4602 = vld [vmem:[#allocation8 + $0x718] sm:$0xff]
        %v4603 = vld [vmem:[#allocation8 + $0x720] sm:$0xff]
        %v4604 = vld [vmem:[#allocation8 + $0x728] sm:$0xff]
        %v4605 = vld [vmem:[#allocation8 + $0x730] sm:$0xff]
        %v4606 = vld [vmem:[#allocation8 + $0x738] sm:$0xff]
        %v4607 = vld [vmem:[#allocation8 + $0x740] sm:$0xff]
        %v4608 = vld [vmem:[#allocation8 + $0x748] sm:$0xff]
        %v4609 = vld [vmem:[#allocation8 + $0x750] sm:$0xff]
        %v4610 = vld [vmem:[#allocation8 + $0x758] sm:$0xff]
        %v4611 = vld [vmem:[#allocation8 + $0x760] sm:$0xff]
        %v4612 = vld [vmem:[#allocation8 + $0x768] sm:$0xff]
        %v4613 = vld [vmem:[#allocation8 + $0x770] sm:$0xff]
        %v4614 = vld [vmem:[#allocation8 + $0x778] sm:$0xff]
        %v4615 = vld [vmem:[#allocation8 + $0x780] sm:$0xff]
        %v4616 = vld [vmem:[#allocation8 + $0x788] sm:$0xff]
        %v4617 = vld [vmem:[#allocation8 + $0x790] sm:$0xff]
        %v4618 = vld [vmem:[#allocation8 + $0x798] sm:$0xff]
        %v4619 = vld [vmem:[#allocation8 + $0x7a0] sm:$0xff]
        %v4620 = vld [vmem:[#allocation8 + $0x7a8] sm:$0xff]
        %v4621 = vld [vmem:[#allocation8 + $0x7b0] sm:$0xff]
        %v4622 = vld [vmem:[#allocation8 + $0x7b8] sm:$0xff]
        %v4623 = vld [vmem:[#allocation8 + $0x7c0] sm:$0xff]
        %v4624 = vld [vmem:[#allocation8 + $0x7c8] sm:$0xff]
        %v4625 = vld [vmem:[#allocation8 + $0x7d0] sm:$0xff]
        %v4626 = vld [vmem:[#allocation8 + $0x7d8] sm:$0xff]
        %v4627 = vld [vmem:[#allocation8 + $0x7e0] sm:$0xff]
        %v4628 = vld [vmem:[#allocation8 + $0x7e8] sm:$0xff]
        %v4629 = vld [vmem:[#allocation8 + $0x7f0] sm:$0xff]
        %v4630 = vld [vmem:[#allocation8 + $0x7f8] sm:$0xff]
        %v4632 = vsel %vm2010, %v4596, 0
        %4634 = vmatprep.subr.mxu0 0.0
        %4635 = vmatpush1.msra.mxu0 0.0
        %4636 = vmatprep.subr.mxu0 0.0
        %4637 = vmatpush1.msra.mxu0 0.0
        %4638 = vmatprep.subr.mxu0 0.0
        %4639 = vmatpush1.msra.mxu0 0.0
        %4640 = vmatprep.subr.mxu0 0.0
        %4641 = vmatpush1.msra.mxu0 0.0
        %4642 = vmatprep.subr.mxu0 0.0
        %4643 = vmatpush1.msra.mxu0 0.0
        %4644 = vmatprep.subr.mxu0 0.0
        %4645 = vmatpush1.msra.mxu0 0.0
        %4646 = vmatprep.subr.mxu0 0.0
        %4647 = vmatpush1.msra.mxu0 0.0
        %4648 = vmatprep.subr.mxu0 0.0
        %4649 = vmatpush1.msra.mxu0 0.0
        %4650 = vmatprep.subr.mxu0 %v4628
        %4651 = vmatpush1.msra.mxu0 %v4627
        %4652 = vmatprep.subr.mxu0 %v4624
        %4653 = vmatpush1.msra.mxu0 %v4623
        %4654 = vmatprep.subr.mxu0 %v4620
        %4655 = vmatpush1.msra.mxu0 %v4619
        %4656 = vmatprep.subr.mxu0 %v4616
        %4657 = vmatpush1.msra.mxu0 %v4615
        %4658 = vmatprep.subr.mxu0 %v4612
        %4659 = vmatpush1.msra.mxu0 %v4611
        %4660 = vmatprep.subr.mxu0 %v4608
        %4661 = vmatpush1.msra.mxu0 %v4607
        %4662 = vmatprep.subr.mxu0 %v4604
        %4663 = vmatpush1.msra.mxu0 %v4603
        %4664 = vmatprep.subr.mxu0 %v4600
        %4665 = vmatpush1.msra.mxu0 %v4599
        %4666 = vmatprep.subr.mxu0 0.0
        %4667 = vmatpush2.msra.mxu0 0.0
        %4668 = vmatprep.subr.mxu0 0.0
        %4669 = vmatpush2.msra.mxu0 0.0
        %4670 = vmatprep.subr.mxu0 0.0
        %4671 = vmatpush2.msra.mxu0 0.0
        %4672 = vmatprep.subr.mxu0 0.0
        %4673 = vmatpush2.msra.mxu0 0.0
        %4674 = vmatprep.subr.mxu0 0.0
        %4675 = vmatpush2.msra.mxu0 0.0
        %4676 = vmatprep.subr.mxu0 0.0
        %4677 = vmatpush2.msra.mxu0 0.0
        %4678 = vmatprep.subr.mxu0 0.0
        %4679 = vmatpush2.msra.mxu0 0.0
        %4680 = vmatprep.subr.mxu0 0.0
        %4681 = vmatpush2.msra.mxu0 0.0
        %4682 = vmatprep.subr.mxu0 0.0
        %4683 = vmatpush2.msra.mxu0 0.0
        %4684 = vmatprep.subr.mxu0 0.0
        %4685 = vmatpush2.msra.mxu0 0.0
        %4686 = vmatprep.subr.mxu0 0.0
        %4687 = vmatpush2.msra.mxu0 0.0
        %4688 = vmatprep.subr.mxu0 0.0
        %4689 = vmatpush2.msra.mxu0 0.0
        %4690 = vmatprep.subr.mxu0 0.0
        %4691 = vmatpush2.msra.mxu0 0.0
        %4692 = vmatprep.subr.mxu0 0.0
        %4693 = vmatpush2.msra.mxu0 0.0
        %4694 = vmatprep.subr.mxu0 0.0
        %4695 = vmatpush2.msra.mxu0 0.0
        %4696 = vmatprep.subr.mxu0 0.0
        %4697 = vmatpush2.msra.mxu0 0.0
        %4698 = vmatprep.mubr.f32.mxu0 0.0
        %4699 = vmatmul.mubr.f32.gmra.mxu0 %v4632
        %v4700 = vpop.f32.mrf.mxu0
        %v4701 = vadd.f32 0.0, %v4700
        %v4702 = vpop.f32.mrf.mxu0
        %v4703 = vadd.f32 0.0, %v4702
        %4704 = vdwg.mxu0
        %4705 = vmatprep.subr.mxu0 0.0
        %4706 = vmatpush1.msra.mxu0 0.0
        %4707 = vmatprep.subr.mxu0 0.0
        %4708 = vmatpush1.msra.mxu0 0.0
        %4709 = vmatprep.subr.mxu0 0.0
        %4710 = vmatpush1.msra.mxu0 0.0
        %4711 = vmatprep.subr.mxu0 0.0
        %4712 = vmatpush1.msra.mxu0 0.0
        %4713 = vmatprep.subr.mxu0 0.0
        %4714 = vmatpush1.msra.mxu0 0.0
        %4715 = vmatprep.subr.mxu0 0.0
        %4716 = vmatpush1.msra.mxu0 0.0
        %4717 = vmatprep.subr.mxu0 0.0
        %4718 = vmatpush1.msra.mxu0 0.0
        %4719 = vmatprep.subr.mxu0 0.0
        %4720 = vmatpush1.msra.mxu0 0.0
        %4721 = vmatprep.subr.mxu0 %v4630
        %4722 = vmatpush1.msra.mxu0 %v4629
        %4723 = vmatprep.subr.mxu0 %v4626
        %4724 = vmatpush1.msra.mxu0 %v4625
        %4725 = vmatprep.subr.mxu0 %v4622
        %4726 = vmatpush1.msra.mxu0 %v4621
        %4727 = vmatprep.subr.mxu0 %v4618
        %4728 = vmatpush1.msra.mxu0 %v4617
        %4729 = vmatprep.subr.mxu0 %v4614
        %4730 = vmatpush1.msra.mxu0 %v4613
        %4731 = vmatprep.subr.mxu0 %v4610
        %4732 = vmatpush1.msra.mxu0 %v4609
        %4733 = vmatprep.subr.mxu0 %v4606
        %4734 = vmatpush1.msra.mxu0 %v4605
        %4735 = vmatprep.subr.mxu0 %v4602
        %4736 = vmatpush1.msra.mxu0 %v4601
        %4737 = vmatprep.subr.mxu0 0.0
        %4738 = vmatpush2.msra.mxu0 0.0
        %4739 = vmatprep.subr.mxu0 0.0
        %4740 = vmatpush2.msra.mxu0 0.0
        %4741 = vmatprep.subr.mxu0 0.0
        %4742 = vmatpush2.msra.mxu0 0.0
        %4743 = vmatprep.subr.mxu0 0.0
        %4744 = vmatpush2.msra.mxu0 0.0
        %4745 = vmatprep.subr.mxu0 0.0
        %4746 = vmatpush2.msra.mxu0 0.0
        %4747 = vmatprep.subr.mxu0 0.0
        %4748 = vmatpush2.msra.mxu0 0.0
        %4749 = vmatprep.subr.mxu0 0.0
        %4750 = vmatpush2.msra.mxu0 0.0
        %4751 = vmatprep.subr.mxu0 0.0
        %4752 = vmatpush2.msra.mxu0 0.0
        %4753 = vmatprep.subr.mxu0 0.0
        %4754 = vmatpush2.msra.mxu0 0.0
        %4755 = vmatprep.subr.mxu0 0.0
        %4756 = vmatpush2.msra.mxu0 0.0
        %4757 = vmatprep.subr.mxu0 0.0
        %4758 = vmatpush2.msra.mxu0 0.0
        %4759 = vmatprep.subr.mxu0 0.0
        %4760 = vmatpush2.msra.mxu0 0.0
        %4761 = vmatprep.subr.mxu0 0.0
        %4762 = vmatpush2.msra.mxu0 0.0
        %4763 = vmatprep.subr.mxu0 0.0
        %4764 = vmatpush2.msra.mxu0 0.0
        %4765 = vmatprep.subr.mxu0 0.0
        %4766 = vmatpush2.msra.mxu0 0.0
        %4767 = vmatprep.subr.mxu0 0.0
        %4768 = vmatpush2.msra.mxu0 0.0
        %4769 = vmatprep.mubr.f32.mxu0 0.0
        %4770 = vmatmul.mubr.f32.gmra.mxu0 %v4632
        %v4771 = vpop.f32.mrf.mxu0
        %v4772 = vadd.f32 0.0, %v4771
        %v4773 = vpop.f32.mrf.mxu0
        %v4774 = vadd.f32 0.0, %v4773
        %4775 = vdwg.mxu0
        %v4776 = vadd.f32 %v4427, %v4701
        %v4777 = vadd.f32 %v4428, %v4703
        %v4778 = vadd.f32 %v4429, %v4772
        %v4779 = vadd.f32 %v4430, %v4774
        %4780 = vst [vmem:[%s294] sm:$0xff] %v4776
        %4781 = vst [vmem:[%s294 + $0x8] sm:$0xff] %v4777
        %4782 = vst [vmem:[%s294 + $0x10] sm:$0xff] %v4778
        %4783 = vst [vmem:[%s294 + $0x18] sm:$0xff] %v4779
        %s4784 = sand.u32 %s142, 1
        %s4785 = scalar_lea.sflag [#allocation4], %s4784
        %s4786 = sand.u32 %s142, 1
        %s4787 = smul.addr %s4786, 32
        %s4788 = scalar_lea.vmem [#allocation11], %s4787
        // Predicated region
        $region61: #{tpu_custom_call.1} parent=39 // pred_check
          %p4789 = pneg %p152
        $region62: #{tpu_custom_call.1} parent=39 // pred_check_branch
          %4791 = sbr.rel (%p4789) target = $region64
        $region63: #{tpu_custom_call.1} parent=39 // pred_region
          %s4793 = ssub.s32 512, 512
          %4794 = vsyncadd %s4785, %s4793
          %s4795 = smul.addr %s24, 4
          %s4796 = smul.addr %s4795, 128
          %s4797 = scalar_lea.hbm %s5, %s4796
          %s4799 = sshll.u32 %s4788, 4
          %s4800 = int_to_ptr.vmem [resolvable:$true] %s4799
          %4802 = dma.vmem_to_hbm [thread:$0]  %s4800, 512, %s4797, %s4785
        $region64: #{tpu_custom_call.1} parent=39 // pred_fallthru
          _
      $region40: #{tpu_custom_call.1} parent=5 // pred_fallthru
        _
      %p4803 = scmp.le.s32.totalorder 2, %s19
      // Predicated region
      $region65: #{tpu_custom_call.1} parent=5 // pred_check
        %p4804 = pneg %p4803
      $region66: #{tpu_custom_call.1} parent=5 // pred_check_branch
        %4806 = sbr.rel (%p4804) target = $region68
      $region67: #{tpu_custom_call.1} parent=5 // pred_region
        %s4807 = ssub.s32 %s19, 2
        // Predicated region
        $region69: #{tpu_custom_call.1} parent=67 // pred_check
          %p4808 = pneg %p158
        $region70: #{tpu_custom_call.1} parent=67 // pred_check_branch
          %4810 = sbr.rel (%p4808) target = $region72
        $region71: #{tpu_custom_call.1} parent=67 // pred_region
          %s4811 = sand.u32 %s143, 1
          %s4812 = scalar_lea.sflag [#allocation4], %s4811
          %s4813 = sand.u32 %s143, 1
          %s4814 = smul.addr %s4813, 32
          %s4815 = scalar_lea.vmem [#allocation11], %s4814
          %4816 = dma.done %s4812, 512
        $region72: #{tpu_custom_call.1} parent=67 // pred_fallthru
          _
      $region68: #{tpu_custom_call.1} parent=5 // pred_fallthru
        _
    $region6: #{tpu_custom_call.1} parent=1 // loop_footer
      %s23 = sadd.s32 1, %s19
    $region7: #{tpu_custom_call.1} parent=1 // loop_footer_branch
      %18 = sbr.rel target = $region3
    $region8: #{tpu_custom_call.1} parent=1 // loop_exit
      _
    %4817 = vsyncpa [#allocation3], 1
    %s4818 = scalar_lea.sflag [#allocation3], 1
    %4819 = vsyncpa %s4818, 1
    %4820 = vsyncpa [#allocation6], 1
    %4821 = vsyncpa [#allocation9], 1
    %4822 = vsyncpa [#allocation4], 1
    %s4823 = scalar_lea.sflag [#allocation4], 1
    %4824 = vsyncpa %s4823, 1

</llo_original>
